<compile_context>
chip_gen: v6e
topology: v6e:2x2x1
jax: 0.10.0
libtpu: 0.0.40
codegen_flags: <defaults>
</compile_context>

<pallas_src>
import math
import functools

import jax
import jax.numpy as jnp
from jax import lax
from jax.experimental import pallas as pl
from jax.experimental.pallas import tpu as pltpu

WEIGHT_DTYPE = jnp.bfloat16      # MXU input dtype (weights + MXU-only activations)
ACT_DTYPE = jnp.bfloat16         # dtype for activations that only feed the MXU
ROW_TILE_CAP = 512               # rows per grid step (multiple of 8)
COL_TILE_CAP = 512               # output columns per grid step (multiple of 128)
FF_TILE = 512                    # FFN hidden-axis (P) reduction tile (multiple of 128)
VMEM_LIMIT_BYTES = 48 * 1024 * 1024


def _round_up(x, m):
    return (x + m - 1) // m * m


def _cp(sem):
    return pltpu.CompilerParams(dimension_semantics=sem,
                                vmem_limit_bytes=VMEM_LIMIT_BYTES)


# ------------------------------ Pallas kernels ------------------------------

def _linear_kernel(x_ref, w_ref, b_ref, o_ref):
    # x [tm, K], w [K, tn] bf16 (pre-transposed), b [1, tn] f32 -> o [tm, tn] (dtype of o_ref)
    x = x_ref[...].astype(w_ref.dtype)
    y = jnp.dot(x, w_ref[...], preferred_element_type=jnp.float32) + b_ref[...]
    o_ref[...] = y.astype(o_ref.dtype)


def _linear_add_ln_kernel(x_ref, w_ref, b_ref, r_ref, g_ref, be_ref, o_ref):
    # Fused: LayerNorm(x @ W + b + residual); LN eps = 1e-5 (PyTorch default), f32 math.
    x = x_ref[...].astype(w_ref.dtype)
    y = (jnp.dot(x, w_ref[...], preferred_element_type=jnp.float32)
         + b_ref[...] + r_ref[...])
    mu = jnp.mean(y, axis=-1, keepdims=True)
    var = jnp.mean(jnp.square(y - mu), axis=-1, keepdims=True)
    o_ref[...] = (y - mu) * lax.rsqrt(var + 1e-5) * g_ref[...] + be_ref[...]


def _ffn_add_ln_kernel(x_ref, w1_ref, b1_ref, w2_ref, b2_ref, g_ref, be_ref,
                       o_ref, acc_ref):
    # Fused positionwise FFN + residual + LayerNorm, with the hidden axis P tiled on the
    # second (reduction) grid axis.  x is both the FFN input and the residual.
    p = pl.program_id(1)

    @pl.when(p == 0)
    def _():
        acc_ref[...] = jnp.zeros_like(acc_ref)

    xb = x_ref[...].astype(w1_ref.dtype)
    h = jnp.dot(xb, w1_ref[...], preferred_element_type=jnp.float32) + b1_ref[...]
    h = jnp.maximum(h, 0.0)
    acc_ref[...] += jnp.dot(h.astype(w2_ref.dtype), w2_ref[...],
                            preferred_element_type=jnp.float32)

    @pl.when(p == pl.num_programs(1) - 1)
    def _():
        y = acc_ref[...] + b2_ref[...] + x_ref[...]
        mu = jnp.mean(y, axis=-1, keepdims=True)
        var = jnp.mean(jnp.square(y - mu), axis=-1, keepdims=True)
        o_ref[...] = (y - mu) * lax.rsqrt(var + 1e-5) * g_ref[...] + be_ref[...]


def _attn_core(q2d, k_src, v_src, keep, o_ref, a_ref, *, n_heads, head_dim,
               q_off, k_off, v_off, scale):
    # q2d [Lq, *] bf16, k_src/v_src [Lk, *] bf16 (packed along lanes), keep broadcastable
    # to [Lq, Lk].  Unrolled per-head loop; per-head slices are static lane slices (no
    # transposes).  Output concatenated lane-dense to [Lq, E].
    outs = []
    for h in range(n_heads):
        qs = q_off + h * head_dim
        ks = k_off + h * head_dim
        vs = v_off + h * head_dim
        qh = q2d[:, qs:qs + head_dim]
        kh = k_src[:, ks:ks + head_dim]
        vh = v_src[:, vs:vs + head_dim]
        s = jnp.einsum("qd,kd->qk", qh, kh,
                       preferred_element_type=jnp.float32) * scale
        s = jnp.where(keep, s, -1e10)                      # masked_fill(mask==0, -1e10)
        s = s - jnp.max(s, axis=-1, keepdims=True)         # stable softmax (f32)
        e = jnp.exp(s)
        p = e * pl.reciprocal(jnp.sum(e, axis=-1, keepdims=True), approx=True)
        if a_ref is not None:
            a_ref[0, h] = p
        outs.append(jnp.dot(p.astype(vh.dtype), vh,
                            preferred_element_type=jnp.float32))
    o_ref[0] = jnp.concatenate(outs, axis=-1).astype(o_ref.dtype)


def _self_attn_kernel(qkv_ref, kp_ref, o_ref, *, n_heads, head_dim, scale, causal):
    # TODO(synk): flash-style Lk tiling (online softmax) for long sequences on v7x.
    E = n_heads * head_dim
    qkv = qkv_ref[0]                                       # [L, 3E] bf16
    L = qkv.shape[0]
    keep = kp_ref[0] > 0.0                                 # [1, Lk] key padding
    if causal:
        ri = lax.broadcasted_iota(jnp.int32, (L, L), 0)
        ci = lax.broadcasted_iota(jnp.int32, (L, L), 1)
        keep = jnp.logical_and(keep, ri >= ci)             # [L, L]
    _attn_core(qkv, qkv, qkv, keep, o_ref, None,
               n_heads=n_heads, head_dim=head_dim,
               q_off=0, k_off=E, v_off=2 * E, scale=scale)


def _cross_attn_kernel(q_ref, kv_ref, kp_ref, o_ref, *, n_heads, head_dim, scale):
    E = n_heads * head_dim
    q = q_ref[0]                                           # [Lq, E] bf16
    kv = kv_ref[0]                                         # [Lk, 2E] bf16
    keep = kp_ref[0] > 0.0
    _attn_core(q, kv, kv, keep, o_ref, None,
               n_heads=n_heads, head_dim=head_dim,
               q_off=0, k_off=0, v_off=E, scale=scale)


def _cross_attn_probs_kernel(q_ref, kv_ref, kp_ref, o_ref, a_ref, *,
                             n_heads, head_dim, scale):
    E = n_heads * head_dim
    q = q_ref[0]
    kv = kv_ref[0]
    keep = kp_ref[0] > 0.0
    _attn_core(q, kv, kv, keep, o_ref, a_ref,
               n_heads=n_heads, head_dim=head_dim,
               q_off=0, k_off=0, v_off=E, scale=scale)


# ------------------------------ kernel wrappers ------------------------------

def linear(x2d, w_t, b_row, out_dtype=ACT_DTYPE):
    """x2d [M, K], w_t [K, N] bf16 (pre-transposed), b_row [1, N] f32 -> [M, N] out_dtype."""
    M, K = x2d.shape
    N = w_t.shape[1]
    tm = M if M <= ROW_TILE_CAP else ROW_TILE_CAP
    tn = N if N <= COL_TILE_CAP else COL_TILE_CAP
    return pl.pallas_call(
        _linear_kernel,
        out_shape=jax.ShapeDtypeStruct((M, N), out_dtype),
        grid=(pl.cdiv(M, tm), pl.cdiv(N, tn)),
        in_specs=[pl.BlockSpec((tm, K), lambda i, j: (i, 0)),
                  pl.BlockSpec((K, tn), lambda i, j: (0, j)),
                  pl.BlockSpec((1, tn), lambda i, j: (0, j))],
        out_specs=pl.BlockSpec((tm, tn), lambda i, j: (i, j)),
        compiler_params=_cp(("parallel", "parallel")),
    )(x2d, w_t, b_row)


def linear_add_ln(x2d, w_t, b_row, res2d, g_row, be_row):
    """LayerNorm(x @ W + b + residual). x2d [M, K] (bf16 ok), res2d [M, E] f32 -> [M, E] f32."""
    M, K = x2d.shape
    E = w_t.shape[1]
    tm = M if M <= ROW_TILE_CAP else ROW_TILE_CAP
    return pl.pallas_call(
        _linear_add_ln_kernel,
        out_shape=jax.ShapeDtypeStruct((M, E), jnp.float32),
        grid=(pl.cdiv(M, tm),),
        in_specs=[pl.BlockSpec((tm, K), lambda i: (i, 0)),
                  pl.BlockSpec((K, E), lambda i: (0, 0)),
                  pl.BlockSpec((1, E), lambda i: (0, 0)),
                  pl.BlockSpec((tm, E), lambda i: (i, 0)),
                  pl.BlockSpec((1, E), lambda i: (0, 0)),
                  pl.BlockSpec((1, E), lambda i: (0, 0))],
        out_specs=pl.BlockSpec((tm, E), lambda i: (i, 0)),
        compiler_params=_cp(("parallel",)),
    )(x2d, w_t, b_row, res2d, g_row, be_row)


def ffn_add_ln(x, w1_t, b1_row, w2_t, b2_row, g_row, be_row):
    """LayerNorm(x + fc2(relu(fc1(x)))); P (hidden) axis is a reduction grid axis."""
    B, S, E = x.shape
    M = B * S
    P = w1_t.shape[1]                                   # already padded to multiple of tile
    tm = M if M <= ROW_TILE_CAP else ROW_TILE_CAP
    tp = P if P <= FF_TILE else FF_TILE
    x2 = x.reshape(M, E)
    out = pl.pallas_call(
        _ffn_add_ln_kernel,
        out_shape=jax.ShapeDtypeStruct((M, E), jnp.float32),
        grid=(pl.cdiv(M, tm), P // tp),
        in_specs=[pl.BlockSpec((tm, E), lambda i, p: (i, 0)),
                  pl.BlockSpec((E, tp), lambda i, p: (0, p)),
                  pl.BlockSpec((1, tp), lambda i, p: (0, p)),
                  pl.BlockSpec((tp, E), lambda i, p: (p, 0)),
                  pl.BlockSpec((1, E), lambda i, p: (0, 0)),
                  pl.BlockSpec((1, E), lambda i, p: (0, 0)),
                  pl.BlockSpec((1, E), lambda i, p: (0, 0))],
        out_specs=pl.BlockSpec((tm, E), lambda i, p: (i, 0)),
        scratch_shapes=[pltpu.VMEM((tm, E), jnp.float32)],
        compiler_params=_cp(("parallel", "arbitrary")),
    )(x2, w1_t, b1_row, w2_t, b2_row, g_row, be_row)
    return out.reshape(B, S, E)


def self_attention(qkv, keypad, n_heads, head_dim, *, causal):
    """qkv [B, L, 3E] bf16, keypad [B, 1, L] f32 -> [B, L, E] bf16 (lane-dense)."""
    B, L, threeE = qkv.shape
    E = n_heads * head_dim
    kern = functools.partial(_self_attn_kernel, n_heads=n_heads, head_dim=head_dim,
                             scale=1.0 / math.sqrt(head_dim), causal=causal)
    return pl.pallas_call(
        kern,
        out_shape=jax.ShapeDtypeStruct((B, L, E), ACT_DTYPE),
        grid=(B,),
        in_specs=[pl.BlockSpec((1, L, threeE), lambda b: (b, 0, 0)),
                  pl.BlockSpec((1, 1, L), lambda b: (b, 0, 0))],
        out_specs=pl.BlockSpec((1, L, E), lambda b: (b, 0, 0)),
        compiler_params=_cp(("parallel",)),
    )(qkv, keypad)


def cross_attention(q, kv, keypad, n_heads, head_dim, *, need_probs):
    """q [B, Lq, E] bf16, kv [B, Lk, 2E] bf16, keypad [B, 1, Lk] f32."""
    B, Lq, E = q.shape
    Lk = kv.shape[1]
    q_spec = pl.BlockSpec((1, Lq, E), lambda b: (b, 0, 0))
    kv_spec = pl.BlockSpec((1, Lk, 2 * E), lambda b: (b, 0, 0))
    kp_spec = pl.BlockSpec((1, 1, Lk), lambda b: (b, 0, 0))
    o_shape = jax.ShapeDtypeStruct((B, Lq, E), ACT_DTYPE)
    o_spec = pl.BlockSpec((1, Lq, E), lambda b: (b, 0, 0))
    scale = 1.0 / math.sqrt(head_dim)
    if need_probs:
        kern = functools.partial(_cross_attn_probs_kernel, n_heads=n_heads,
                                 head_dim=head_dim, scale=scale)
        a_shape = jax.ShapeDtypeStruct((B, n_heads, Lq, Lk), jnp.float32)
        a_spec = pl.BlockSpec((1, n_heads, Lq, Lk), lambda b: (b, 0, 0, 0))
        o, attn = pl.pallas_call(
            kern, out_shape=(o_shape, a_shape), grid=(B,),
            in_specs=[q_spec, kv_spec, kp_spec],
            out_specs=(o_spec, a_spec),
            compiler_params=_cp(("parallel",)),
        )(q, kv, keypad)
        return o, attn
    kern = functools.partial(_cross_attn_kernel, n_heads=n_heads,
                             head_dim=head_dim, scale=scale)
    o = pl.pallas_call(
        kern, out_shape=o_shape, grid=(B,),
        in_specs=[q_spec, kv_spec, kp_spec],
        out_specs=o_spec,
        compiler_params=_cp(("parallel",)),
    )(q, kv, keypad)
    return o, None


# ------------------------------ model modules ------------------------------

def encoder_layer(src, src_keypad, p, n_heads):
    B, L, E = src.shape
    D = E // n_heads
    a = p["self_attn"]
    qkv = linear(src.reshape(B * L, E), a["wqkv_t"], a["bqkv"]).reshape(B, L, 3 * E)
    ao = self_attention(qkv, src_keypad, n_heads, D, causal=False)
    src = linear_add_ln(ao.reshape(B * L, E), a["wo_t"], a["bo"],
                        src.reshape(B * L, E), p["ln1_g"], p["ln1_b"]).reshape(B, L, E)
    src = ffn_add_ln(src, p["ff_w1_t"], p["ff_b1"], p["ff_w2_t"], p["ff_b2"],
                     p["ln2_g"], p["ln2_b"])
    return src


def decoder_layer(tgt, enc_src, tgt_keypad, src_keypad, p, n_heads, *, need_probs):
    B, Lt, E = tgt.shape
    Ls = enc_src.shape[1]
    D = E // n_heads
    # masked self-attention + residual/LN
    a = p["self_attn"]
    qkv = linear(tgt.reshape(B * Lt, E), a["wqkv_t"], a["bqkv"]).reshape(B, Lt, 3 * E)
    ao = self_attention(qkv, tgt_keypad, n_heads, D, causal=True)
    tgt = linear_add_ln(ao.reshape(B * Lt, E), a["wo_t"], a["bo"],
                        tgt.reshape(B * Lt, E), p["ln1_g"], p["ln1_b"]).reshape(B, Lt, E)
    # cross-attention + residual/LN
    c = p["cross_attn"]
    q = linear(tgt.reshape(B * Lt, E), c["wq_t"], c["bq"]).reshape(B, Lt, E)
    kv = linear(enc_src.reshape(B * Ls, E), c["wkv_t"], c["bkv"]).reshape(B, Ls, 2 * E)
    ao, attention = cross_attention(q, kv, src_keypad, n_heads, D, need_probs=need_probs)
    tgt = linear_add_ln(ao.reshape(B * Lt, E), c["wo_t"], c["bo"],
                        tgt.reshape(B * Lt, E), p["ln2_g"], p["ln2_b"]).reshape(B, Lt, E)
    # FFN + residual/LN
    tgt = ffn_add_ln(tgt, p["ff_w1_t"], p["ff_b1"], p["ff_w2_t"], p["ff_b2"],
                     p["ln3_g"], p["ln3_b"])
    return tgt, attention


def seq2seq_forward(params, src_tokens, tgt_tokens, n_heads,
                    src_pad_idx=1, tgt_pad_idx=1):
    B, Ls = src_tokens.shape
    _, Lt = tgt_tokens.shape
    E = params["src_emb"].shape[1]

    # O(B*L) key-padding vectors only; causal part is built in-kernel.
    src_keypad = (src_tokens != src_pad_idx).astype(jnp.float32).reshape(B, 1, Ls)
    tgt_keypad = (tgt_tokens != tgt_pad_idx).astype(jnp.float32).reshape(B, 1, Lt)

    pe = params["pos_enc"]
    emb_scale = math.sqrt(E)

    # TokenEmbedding (* sqrt(E)) + sinusoidal positional encoding: tiny gather+elementwise,
    # left to XLA per perf review (dropout == identity in eval mode).
    src_x = jnp.take(params["src_emb"], src_tokens, axis=0) * emb_scale + pe[None, :Ls, :]
    tgt_x = jnp.take(params["tgt_emb"], tgt_tokens, axis=0) * emb_scale + pe[None, :Lt, :]

    for lp in params["enc_layers"]:
        src_x = encoder_layer(src_x, src_keypad, lp, n_heads)

    attention = None
    n_dec = len(params["dec_layers"])
    for li, lp in enumerate(params["dec_layers"]):
        tgt_x, attn = decoder_layer(tgt_x, src_x, tgt_keypad, src_keypad, lp,
                                    n_heads, need_probs=(li == n_dec - 1))
        if attn is not None:
            attention = attn

    B_, Lt_, _ = tgt_x.shape
    logits = linear(tgt_x.reshape(B_ * Lt_, E), params["gen_w_t"], params["gen_b"],
                    out_dtype=jnp.float32)
    return logits.reshape(B, Lt, -1), attention


# ------------------------------ parameter init & prep ------------------------------

def make_pos_encoding(maxlen, E):
    den = jnp.exp(-jnp.arange(0, E, 2, dtype=jnp.float32) * (math.log(10000.0) / E))
    pos = jnp.arange(maxlen, dtype=jnp.float32)[:, None]
    pe = jnp.zeros((maxlen, E), jnp.float32)
    pe = pe.at[:, 0::2].set(jnp.sin(pos * den))
    pe = pe.at[:, 1::2].set(jnp.cos(pos * den))
    return pe


def init_params(key, *, num_encoder_layers, num_decoder_layers, emb_size, nhead,
                src_vocab_size, tgt_vocab_size, dim_feedforward, max_len=64):
    """PyTorch-convention parameters ([out, in] Linear weights, f32)."""
    keys = iter(jax.random.split(key, 1024))

    def nrm(shape, s=0.02):
        return jax.random.normal(next(keys), shape, jnp.float32) * s

    def attn_params():
        return {
            "wq": nrm((emb_size, emb_size)), "bq": jnp.zeros((emb_size,), jnp.float32),
            "wk": nrm((emb_size, emb_size)), "bk": jnp.zeros((emb_size,), jnp.float32),
            "wv": nrm((emb_size, emb_size)), "bv": jnp.zeros((emb_size,), jnp.float32),
            "wo": nrm((emb_size, emb_size)), "bo": jnp.zeros((emb_size,), jnp.float32),
        }

    def enc_layer():
        return {
            "self_attn": attn_params(),
            "ln1_g": jnp.ones((emb_size,), jnp.float32),
            "ln1_b": jnp.zeros((emb_size,), jnp.float32),
            "ln2_g": jnp.ones((emb_size,), jnp.float32),
            "ln2_b": jnp.zeros((emb_size,), jnp.float32),
            "ff_w1": nrm((dim_feedforward, emb_size)),
            "ff_b1": jnp.zeros((dim_feedforward,), jnp.float32),
            "ff_w2": nrm((emb_size, dim_feedforward)),
            "ff_b2": jnp.zeros((emb_size,), jnp.float32),
        }

    def dec_layer():
        d = enc_layer()
        d["cross_attn"] = attn_params()
        d["ln3_g"] = jnp.ones((emb_size,), jnp.float32)
        d["ln3_b"] = jnp.zeros((emb_size,), jnp.float32)
        return d

    return {
        "src_emb": nrm((src_vocab_size, emb_size), 1.0),
        "tgt_emb": nrm((tgt_vocab_size, emb_size), 1.0),
        "pos_enc": make_pos_encoding(max_len, emb_size),
        "enc_layers": [enc_layer() for _ in range(num_encoder_layers)],
        "dec_layers": [dec_layer() for _ in range(num_decoder_layers)],
        "gen_w": nrm((tgt_vocab_size, emb_size)),
        "gen_b": jnp.zeros((tgt_vocab_size,), jnp.float32),
    }


def prepare_params(p):
    """One-time offline prep: transpose Linear weights to [in, out], fuse QKV / KV, cast
    MXU-bound weights to bf16, reshape every bias/LN vector to [1, N], and pad the FFN
    hidden axis to a multiple of FF_TILE (zero columns/rows -> zero contribution)."""
    def row(v):
        return v.reshape(1, -1)

    def prep_self_attn(a):
        wqkv = jnp.concatenate([a["wq"], a["wk"], a["wv"]], axis=0)     # [3E, E]
        return {
            "wqkv_t": wqkv.T.astype(WEIGHT_DTYPE),                      # [E, 3E]
            "bqkv": row(jnp.concatenate([a["bq"], a["bk"], a["bv"]])),
            "wo_t": a["wo"].T.astype(WEIGHT_DTYPE),
            "bo": row(a["bo"]),
        }

    def prep_cross_attn(a):
        wkv = jnp.concatenate([a["wk"], a["wv"]], axis=0)               # [2E, E]
        return {
            "wq_t": a["wq"].T.astype(WEIGHT_DTYPE),
            "bq": row(a["bq"]),
            "wkv_t": wkv.T.astype(WEIGHT_DTYPE),                        # [E, 2E]
            "bkv": row(jnp.concatenate([a["bk"], a["bv"]])),
            "wo_t": a["wo"].T.astype(WEIGHT_DTYPE),
            "bo": row(a["bo"]),
        }

    def prep_ffn(w1, b1, w2):
        P = w1.shape[0]
        w1_t, w2_t = w1.T, w2.T                                         # [E,P], [P,E]
        if P > FF_TILE:
            pad = _round_up(P, FF_TILE) - P
            if pad:
                w1_t = jnp.pad(w1_t, ((0, 0), (0, pad)))
                b1 = jnp.pad(b1, ((0, pad),))
                w2_t = jnp.pad(w2_t, ((0, pad), (0, 0)))
        return (w1_t.astype(WEIGHT_DTYPE), row(b1), w2_t.astype(WEIGHT_DTYPE))

    def prep_layer(l, is_dec):
        w1_t, b1, w2_t = prep_ffn(l["ff_w1"], l["ff_b1"], l["ff_w2"])
        out = {
            "self_attn": prep_self_attn(l["self_attn"]),
            "ln1_g": row(l["ln1_g"]), "ln1_b": row(l["ln1_b"]),
            "ln2_g": row(l["ln2_g"]), "ln2_b": row(l["ln2_b"]),
            "ff_w1_t": w1_t, "ff_b1": b1, "ff_w2_t": w2_t, "ff_b2": row(l["ff_b2"]),
        }
        if is_dec:
            out["cross_attn"] = prep_cross_attn(l["cross_attn"])
            out["ln3_g"] = row(l["ln3_g"])
            out["ln3_b"] = row(l["ln3_b"])
        return out

    return {
        "src_emb": p["src_emb"],
        "tgt_emb": p["tgt_emb"],
        "pos_enc": p["pos_enc"],
        "enc_layers": [prep_layer(l, False) for l in p["enc_layers"]],
        "dec_layers": [prep_layer(l, True) for l in p["dec_layers"]],
        "gen_w_t": p["gen_w"].T.astype(WEIGHT_DTYPE),
        "gen_b": row(p["gen_b"]),
    }


# ------------------------------ main ------------------------------

if __name__ == "__main__":
    B = 2
    SRC_LEN = 8
    TGT_LEN = 8
    EMB = 32
    NHEAD = 4
    SRC_VOCAB = 16
    TGT_VOCAB = 16
    FF = 64
    N_ENC = 2
    N_DEC = 2

    key = jax.random.PRNGKey(0)
    kp, ks, kt = jax.random.split(key, 3)
    torch_params = init_params(kp, num_encoder_layers=N_ENC, num_decoder_layers=N_DEC,
                               emb_size=EMB, nhead=NHEAD, src_vocab_size=SRC_VOCAB,
                               tgt_vocab_size=TGT_VOCAB, dim_feedforward=FF)
    params = prepare_params(torch_params)

    src = jax.random.randint(ks, (B, SRC_LEN), 0, SRC_VOCAB, dtype=jnp.int32)
    tgt = jax.random.randint(kt, (B, TGT_LEN), 0, TGT_VOCAB, dtype=jnp.int32)
    # inject some pad tokens (pad_idx = 1) to exercise the padding masks
    src = src.at[0, -2:].set(1)
    tgt = tgt.at[1, -3:].set(1)

    fwd = jax.jit(functools.partial(seq2seq_forward, n_heads=NHEAD))
    logits, attn = fwd(params, src, tgt)
    jax.block_until_ready(logits)

    assert logits.shape == (B, TGT_LEN, TGT_VOCAB), logits.shape
    assert attn.shape == (B, NHEAD, TGT_LEN, SRC_LEN), attn.shape
    assert bool(jnp.all(jnp.isfinite(logits)))
    print("KERNEL_OK")
</pallas_src>

<mosaic_0001>
module attributes {stable_mosaic.version = 11 : i64} {
  func.func @_linear_kernel(%arg0: i32, %arg1: i32, %arg2: memref<16x32xf32, #tpu.memory_space<vmem>>, %arg3: memref<32x96xbf16, #tpu.memory_space<vmem>>, %arg4: memref<1x96xf32, #tpu.memory_space<vmem>>, %arg5: memref<16x96xbf16, #tpu.memory_space<vmem>>) attributes {dimension_semantics = [#tpu.dimension_semantics<parallel>, #tpu.dimension_semantics<parallel>], iteration_bounds = array<i64: 1, 1>, scalar_prefetch = 0 : i64, scratch_operands = 0 : i64, tpu.core_type = #tpu.core_type<tc>, window_params = [{transform_indices = @transform_0, window_bounds = array<i64: 16, 32>}, {transform_indices = @transform_1, window_bounds = array<i64: 32, 96>}, {transform_indices = @transform_2, window_bounds = array<i64: 1, 96>}, {transform_indices = @transform_3, window_bounds = array<i64: 16, 96>}]} {
    %c0 = arith.constant 0 : index
    %c0_0 = arith.constant 0 : index
    %0 = vector.load %arg2[%c0, %c0_0] : memref<16x32xf32, #tpu.memory_space<vmem>>, vector<16x32xf32>
    %1 = arith.truncf %0 : vector<16x32xf32> to vector<16x32xbf16>
    %c0_1 = arith.constant 0 : index
    %c0_2 = arith.constant 0 : index
    %2 = vector.load %arg3[%c0_1, %c0_2] : memref<32x96xbf16, #tpu.memory_space<vmem>>, vector<32x96xbf16>
    %cst = arith.constant dense<0.000000e+00> : vector<16x96xf32>
    %3 = tpu.matmul %1, %2, %cst {dimension_numbers = #tpu.dot_dimension_numbers<[1], [0], [0], [1], [0, 0, 1, 1], [], []>} : vector<16x32xbf16>, vector<32x96xbf16>, vector<16x96xf32> -> vector<16x96xf32>
    %c0_3 = arith.constant 0 : index
    %c0_4 = arith.constant 0 : index
    %4 = vector.load %arg4[%c0_3, %c0_4] : memref<1x96xf32, #tpu.memory_space<vmem>>, vector<1x96xf32>
    %5 = vector.broadcast %4 : vector<1x96xf32> to vector<16x96xf32>
    %6 = arith.addf %3, %5 : vector<16x96xf32>
    %7 = arith.truncf %6 : vector<16x96xf32> to vector<16x96xbf16>
    %c0_5 = arith.constant 0 : index
    %c0_6 = arith.constant 0 : index
    %8 = vector.load %arg5[%c0_5, %c0_6] : memref<16x96xbf16, #tpu.memory_space<vmem>>, vector<16x96xbf16>
    tpu.vector_store %arg5[%c0_5, %c0_6], %7 {strides = array<i32>} : memref<16x96xbf16, #tpu.memory_space<vmem>>, vector<16x96xbf16>,
    return
  }
  func.func @transform_0(%arg0: i32, %arg1: i32) -> (i32, i32) {
    %c0_i32 = arith.constant 0 : i32
    %c0_i32_0 = arith.constant 0 : i32
    return %arg0, %c0_i32 : i32, i32
  }
  func.func @transform_1(%arg0: i32, %arg1: i32) -> (i32, i32) {
    %c0_i32 = arith.constant 0 : i32
    %c0_i32_0 = arith.constant 0 : i32
    return %c0_i32, %arg1 : i32, i32
  }
  func.func @transform_2(%arg0: i32, %arg1: i32) -> (i32, i32) {
    %c0_i32 = arith.constant 0 : i32
    %c0_i32_0 = arith.constant 0 : i32
    return %c0_i32, %arg1 : i32, i32
  }
  func.func @transform_3(%arg0: i32, %arg1: i32) -> (i32, i32) {
    %c0_i32 = arith.constant 0 : i32
    return %arg0, %arg1 : i32, i32
  }
}

module attributes {stable_mosaic.version = 11 : i64} {
  func.func @_linear_add_ln_kernel(%arg0: i32, %arg1: memref<16x32xbf16, #tpu.memory_space<vmem>>, %arg2: memref<32x32xbf16, #tpu.memory_space<vmem>>, %arg3: memref<1x32xf32, #tpu.memory_space<vmem>>, %arg4: memref<16x32xf32, #tpu.memory_space<vmem>>, %arg5: memref<1x32xf32, #tpu.memory_space<vmem>>, %arg6: memref<1x32xf32, #tpu.memory_space<vmem>>, %arg7: memref<16x32xf32, #tpu.memory_space<vmem>>) attributes {dimension_semantics = [#tpu.dimension_semantics<parallel>], iteration_bounds = array<i64: 1>, scalar_prefetch = 0 : i64, scratch_operands = 0 : i64, tpu.core_type = #tpu.core_type<tc>, window_params = [{transform_indices = @transform_0, window_bounds = array<i64: 16, 32>}, {pipeline_mode = #tpu.pipeline_mode<synchronous>, transform_indices = @transform_1, window_bounds = array<i64: 32, 32>}, {pipeline_mode = #tpu.pipeline_mode<synchronous>, transform_indices = @transform_2, window_bounds = array<i64: 1, 32>}, {transform_indices = @transform_3, window_bounds = array<i64: 16, 32>}, {pipeline_mode = #tpu.pipeline_mode<synchronous>, transform_indices = @transform_4, window_bounds = array<i64: 1, 32>}, {pipeline_mode = #tpu.pipeline_mode<synchronous>, transform_indices = @transform_5, window_bounds = array<i64: 1, 32>}, {transform_indices = @transform_6, window_bounds = array<i64: 16, 32>}]} {
    %c0 = arith.constant 0 : index
    %c0_0 = arith.constant 0 : index
    %0 = vector.load %arg1[%c0, %c0_0] : memref<16x32xbf16, #tpu.memory_space<vmem>>, vector<16x32xbf16>
    %c0_1 = arith.constant 0 : index
    %c0_2 = arith.constant 0 : index
    %1 = vector.load %arg2[%c0_1, %c0_2] : memref<32x32xbf16, #tpu.memory_space<vmem>>, vector<32x32xbf16>
    %cst = arith.constant dense<0.000000e+00> : vector<16x32xf32>
    %2 = tpu.matmul %0, %1, %cst {dimension_numbers = #tpu.dot_dimension_numbers<[1], [0], [0], [1], [0, 0, 1, 1], [], []>} : vector<16x32xbf16>, vector<32x32xbf16>, vector<16x32xf32> -> vector<16x32xf32>
    %c0_3 = arith.constant 0 : index
    %c0_4 = arith.constant 0 : index
    %3 = vector.load %arg3[%c0_3, %c0_4] : memref<1x32xf32, #tpu.memory_space<vmem>>, vector<1x32xf32>
    %4 = vector.broadcast %3 : vector<1x32xf32> to vector<16x32xf32>
    %5 = arith.addf %2, %4 : vector<16x32xf32>
    %c0_5 = arith.constant 0 : index
    %c0_6 = arith.constant 0 : index
    %6 = vector.load %arg4[%c0_5, %c0_6] : memref<16x32xf32, #tpu.memory_space<vmem>>, vector<16x32xf32>
    %7 = arith.addf %5, %6 : vector<16x32xf32>
    %cst_7 = arith.constant dense<0.000000e+00> : vector<16xf32>
    %8 = vector.multi_reduction <add>, %7, %cst_7 [1] : vector<16x32xf32> to vector<16xf32>
    %9 = vector.shape_cast %8 : vector<16xf32> to vector<16x1xf32>
    %cst_8 = arith.constant 3.200000e+01 : f32
    %10 = vector.broadcast %cst_8 : f32 to vector<16x1xf32>
    %11 = arith.divf %9, %10 : vector<16x1xf32>
    %12 = vector.broadcast %11 : vector<16x1xf32> to vector<16x32xf32>
    %13 = arith.subf %7, %12 : vector<16x32xf32>
    %14 = arith.mulf %13, %13 : vector<16x32xf32>
    %cst_9 = arith.constant dense<0.000000e+00> : vector<16xf32>
    %15 = vector.multi_reduction <add>, %14, %cst_9 [1] : vector<16x32xf32> to vector<16xf32>
    %16 = vector.shape_cast %15 : vector<16xf32> to vector<16x1xf32>
    %cst_10 = arith.constant 3.200000e+01 : f32
    %17 = vector.broadcast %cst_10 : f32 to vector<16x1xf32>
    %18 = arith.divf %16, %17 : vector<16x1xf32>
    %19 = vector.broadcast %11 : vector<16x1xf32> to vector<16x32xf32>
    %20 = arith.subf %7, %19 : vector<16x32xf32>
    %cst_11 = arith.constant 9.99999974E-6 : f32
    %21 = vector.broadcast %cst_11 : f32 to vector<16x1xf32>
    %22 = arith.addf %18, %21 : vector<16x1xf32>
    %23 = math.rsqrt %22 : vector<16x1xf32>
    %24 = vector.broadcast %23 : vector<16x1xf32> to vector<16x32xf32>
    %25 = arith.mulf %20, %24 : vector<16x32xf32>
    %c0_12 = arith.constant 0 : index
    %c0_13 = arith.constant 0 : index
    %26 = vector.load %arg5[%c0_12, %c0_13] : memref<1x32xf32, #tpu.memory_space<vmem>>, vector<1x32xf32>
    %27 = vector.broadcast %26 : vector<1x32xf32> to vector<16x32xf32>
    %28 = arith.mulf %25, %27 : vector<16x32xf32>
    %c0_14 = arith.constant 0 : index
    %c0_15 = arith.constant 0 : index
    %29 = vector.load %arg6[%c0_14, %c0_15] : memref<1x32xf32, #tpu.memory_space<vmem>>, vector<1x32xf32>
    %30 = vector.broadcast %29 : vector<1x32xf32> to vector<16x32xf32>
    %31 = arith.addf %28, %30 : vector<16x32xf32>
    %c0_16 = arith.constant 0 : index
    %c0_17 = arith.constant 0 : index
    %32 = vector.load %arg7[%c0_16, %c0_17] : memref<16x32xf32, #tpu.memory_space<vmem>>, vector<16x32xf32>
    tpu.vector_store %arg7[%c0_16, %c0_17], %31 {strides = array<i32>} : memref<16x32xf32, #tpu.memory_space<vmem>>, vector<16x32xf32>,
    return
  }
  func.func @transform_0(%arg0: i32) -> (i32, i32) {
    %c0_i32 = arith.constant 0 : i32
    %c0_i32_0 = arith.constant 0 : i32
    return %arg0, %c0_i32 : i32, i32
  }
  func.func @transform_1(%arg0: i32) -> (i32, i32) {
    %c0_i32 = arith.constant 0 : i32
    %c0_i32_0 = arith.constant 0 : i32
    %c0_i32_1 = arith.constant 0 : i32
    return %c0_i32, %c0_i32_0 : i32, i32
  }
  func.func @transform_2(%arg0: i32) -> (i32, i32) {
    %c0_i32 = arith.constant 0 : i32
    %c0_i32_0 = arith.constant 0 : i32
    %c0_i32_1 = arith.constant 0 : i32
    return %c0_i32, %c0_i32_0 : i32, i32
  }
  func.func @transform_3(%arg0: i32) -> (i32, i32) {
    %c0_i32 = arith.constant 0 : i32
    %c0_i32_0 = arith.constant 0 : i32
    return %arg0, %c0_i32 : i32, i32
  }
  func.func @transform_4(%arg0: i32) -> (i32, i32) {
    %c0_i32 = arith.constant 0 : i32
    %c0_i32_0 = arith.constant 0 : i32
    %c0_i32_1 = arith.constant 0 : i32
    return %c0_i32, %c0_i32_0 : i32, i32
  }
  func.func @transform_5(%arg0: i32) -> (i32, i32) {
    %c0_i32 = arith.constant 0 : i32
    %c0_i32_0 = arith.constant 0 : i32
    %c0_i32_1 = arith.constant 0 : i32
    return %c0_i32, %c0_i32_0 : i32, i32
  }
  func.func @transform_6(%arg0: i32) -> (i32, i32) {
    %c0_i32 = arith.constant 0 : i32
    %c0_i32_0 = arith.constant 0 : i32
    return %arg0, %c0_i32 : i32, i32
  }
}

module attributes {stable_mosaic.version = 11 : i64} {
  func.func @_self_attn_kernel(%arg0: i32, %arg1: memref<1x8x96xbf16, #tpu.memory_space<vmem>>, %arg2: memref<1x1x8xf32, #tpu.memory_space<vmem>>, %arg3: memref<1x8x32xbf16, #tpu.memory_space<vmem>>) attributes {dimension_semantics = [#tpu.dimension_semantics<parallel>], iteration_bounds = array<i64: 2>, scalar_prefetch = 0 : i64, scratch_operands = 0 : i64, tpu.core_type = #tpu.core_type<tc>, window_params = [{transform_indices = @transform_0, window_bounds = array<i64: 1, 8, 96>}, {transform_indices = @transform_1, window_bounds = array<i64: 1, 1, 8>}, {transform_indices = @transform_2, window_bounds = array<i64: 1, 8, 32>}]} {
    %c0 = arith.constant 0 : index
    %c0_0 = arith.constant 0 : index
    %c0_1 = arith.constant 0 : index
    %0 = vector.load %arg1[%c0, %c0_0, %c0_1] : memref<1x8x96xbf16, #tpu.memory_space<vmem>>, vector<1x8x96xbf16>
    %1 = vector.shape_cast %0 : vector<1x8x96xbf16> to vector<8x96xbf16>
    %c0_2 = arith.constant 0 : index
    %c0_3 = arith.constant 0 : index
    %c0_4 = arith.constant 0 : index
    %2 = vector.load %arg2[%c0_2, %c0_3, %c0_4] : memref<1x1x8xf32, #tpu.memory_space<vmem>>, vector<1x1x8xf32>
    %3 = vector.shape_cast %2 : vector<1x1x8xf32> to vector<1x8xf32>
    %cst = arith.constant 0.000000e+00 : f32
    %4 = vector.broadcast %cst : f32 to vector<1x8xf32>
    %5 = arith.cmpf ogt, %3, %4 : vector<1x8xf32>
    %6 = vector.extract_strided_slice %1 {offsets = [0, 0], sizes = [8, 8], strides = [1, 1]} : vector<8x96xbf16> to vector<8x8xbf16>
    %7 = vector.extract_strided_slice %1 {offsets = [0, 32], sizes = [8, 8], strides = [1, 1]} : vector<8x96xbf16> to vector<8x8xbf16>
    %8 = vector.extract_strided_slice %1 {offsets = [0, 64], sizes = [8, 8], strides = [1, 1]} : vector<8x96xbf16> to vector<8x8xbf16>
    "tpu.trace_start"() <{level = 10 : i32, message = "qd,kd->qk"}> : () -> ()
    %cst_5 = arith.constant dense<0.000000e+00> : vector<8x8xf32>
    %9 = tpu.matmul %6, %7, %cst_5 {dimension_numbers = #tpu.dot_dimension_numbers<[1], [1], [0], [0], [0, 0, 1, 0], [], []>} : vector<8x8xbf16>, vector<8x8xbf16>, vector<8x8xf32> -> vector<8x8xf32>
    "tpu.trace_stop"() : () -> ()
    %cst_6 = arith.constant 0.353553385 : f32
    %10 = vector.broadcast %cst_6 : f32 to vector<8x8xf32>
    %11 = arith.mulf %9, %10 : vector<8x8xf32>
    %cst_7 = arith.constant -1.000000e+10 : f32
    %12 = vector.shape_cast %5 : vector<1x8xi1> to vector<1x8xi1>
    %13 = vector.broadcast %12 : vector<1x8xi1> to vector<8x8xi1>
    %14 = vector.broadcast %cst_7 : f32 to vector<8x8xf32>
    %15 = arith.select %13, %11, %14 : vector<8x8xi1>, vector<8x8xf32>
    %cst_8 = arith.constant dense<0xFF800000> : vector<8xf32>
    %16 = vector.multi_reduction <maximumf>, %15, %cst_8 [1] : vector<8x8xf32> to vector<8xf32>
    %17 = vector.shape_cast %16 : vector<8xf32> to vector<8x1xf32>
    %18 = vector.broadcast %17 : vector<8x1xf32> to vector<8x8xf32>
    %19 = arith.subf %15, %18 : vector<8x8xf32>
    %20 = math.exp %19 : vector<8x8xf32>
    %cst_9 = arith.constant dense<0.000000e+00> : vector<8xf32>
    %21 = vector.multi_reduction <add>, %20, %cst_9 [1] : vector<8x8xf32> to vector<8xf32>
    %22 = vector.shape_cast %21 : vector<8xf32> to vector<8x1xf32>
    %23 = tpu.reciprocal %22 {approx = true} : vector<8x1xf32> -> vector<8x1xf32>
    %24 = vector.broadcast %23 : vector<8x1xf32> to vector<8x8xf32>
    %25 = arith.mulf %20, %24 : vector<8x8xf32>
    %26 = arith.truncf %25 : vector<8x8xf32> to vector<8x8xbf16>
    %cst_10 = arith.constant dense<0.000000e+00> : vector<8x8xf32>
    %27 = tpu.matmul %26, %8, %cst_10 {dimension_numbers = #tpu.dot_dimension_numbers<[1], [0], [0], [1], [0, 0, 1, 1], [], []>} : vector<8x8xbf16>, vector<8x8xbf16>, vector<8x8xf32> -> vector<8x8xf32>
    %28 = vector.extract_strided_slice %1 {offsets = [0, 8], sizes = [8, 8], strides = [1, 1]} : vector<8x96xbf16> to vector<8x8xbf16>
    %29 = vector.extract_strided_slice %1 {offsets = [0, 40], sizes = [8, 8], strides = [1, 1]} : vector<8x96xbf16> to vector<8x8xbf16>
    %30 = vector.extract_strided_slice %1 {offsets = [0, 72], sizes = [8, 8], strides = [1, 1]} : vector<8x96xbf16> to vector<8x8xbf16>
    "tpu.trace_start"() <{level = 10 : i32, message = "qd,kd->qk"}> : () -> ()
    %cst_11 = arith.constant dense<0.000000e+00> : vector<8x8xf32>
    %31 = tpu.matmul %28, %29, %cst_11 {dimension_numbers = #tpu.dot_dimension_numbers<[1], [1], [0], [0], [0, 0, 1, 0], [], []>} : vector<8x8xbf16>, vector<8x8xbf16>, vector<8x8xf32> -> vector<8x8xf32>
    "tpu.trace_stop"() : () -> ()
    %cst_12 = arith.constant 0.353553385 : f32
    %32 = vector.broadcast %cst_12 : f32 to vector<8x8xf32>
    %33 = arith.mulf %31, %32 : vector<8x8xf32>
    %cst_13 = arith.constant -1.000000e+10 : f32
    %34 = vector.shape_cast %5 : vector<1x8xi1> to vector<1x8xi1>
    %35 = vector.broadcast %34 : vector<1x8xi1> to vector<8x8xi1>
    %36 = vector.broadcast %cst_13 : f32 to vector<8x8xf32>
    %37 = arith.select %35, %33, %36 : vector<8x8xi1>, vector<8x8xf32>
    %cst_14 = arith.constant dense<0xFF800000> : vector<8xf32>
    %38 = vector.multi_reduction <maximumf>, %37, %cst_14 [1] : vector<8x8xf32> to vector<8xf32>
    %39 = vector.shape_cast %38 : vector<8xf32> to vector<8x1xf32>
    %40 = vector.broadcast %39 : vector<8x1xf32> to vector<8x8xf32>
    %41 = arith.subf %37, %40 : vector<8x8xf32>
    %42 = math.exp %41 : vector<8x8xf32>
    %cst_15 = arith.constant dense<0.000000e+00> : vector<8xf32>
    %43 = vector.multi_reduction <add>, %42, %cst_15 [1] : vector<8x8xf32> to vector<8xf32>
    %44 = vector.shape_cast %43 : vector<8xf32> to vector<8x1xf32>
    %45 = tpu.reciprocal %44 {approx = true} : vector<8x1xf32> -> vector<8x1xf32>
    %46 = vector.broadcast %45 : vector<8x1xf32> to vector<8x8xf32>
    %47 = arith.mulf %42, %46 : vector<8x8xf32>
    %48 = arith.truncf %47 : vector<8x8xf32> to vector<8x8xbf16>
    %cst_16 = arith.constant dense<0.000000e+00> : vector<8x8xf32>
    %49 = tpu.matmul %48, %30, %cst_16 {dimension_numbers = #tpu.dot_dimension_numbers<[1], [0], [0], [1], [0, 0, 1, 1], [], []>} : vector<8x8xbf16>, vector<8x8xbf16>, vector<8x8xf32> -> vector<8x8xf32>
    %50 = vector.extract_strided_slice %1 {offsets = [0, 16], sizes = [8, 8], strides = [1, 1]} : vector<8x96xbf16> to vector<8x8xbf16>
    %51 = vector.extract_strided_slice %1 {offsets = [0, 48], sizes = [8, 8], strides = [1, 1]} : vector<8x96xbf16> to vector<8x8xbf16>
    %52 = vector.extract_strided_slice %1 {offsets = [0, 80], sizes = [8, 8], strides = [1, 1]} : vector<8x96xbf16> to vector<8x8xbf16>
    "tpu.trace_start"() <{level = 10 : i32, message = "qd,kd->qk"}> : () -> ()
    %cst_17 = arith.constant dense<0.000000e+00> : vector<8x8xf32>
    %53 = tpu.matmul %50, %51, %cst_17 {dimension_numbers = #tpu.dot_dimension_numbers<[1], [1], [0], [0], [0, 0, 1, 0], [], []>} : vector<8x8xbf16>, vector<8x8xbf16>, vector<8x8xf32> -> vector<8x8xf32>
    "tpu.trace_stop"() : () -> ()
    %cst_18 = arith.constant 0.353553385 : f32
    %54 = vector.broadcast %cst_18 : f32 to vector<8x8xf32>
    %55 = arith.mulf %53, %54 : vector<8x8xf32>
    %cst_19 = arith.constant -1.000000e+10 : f32
    %56 = vector.shape_cast %5 : vector<1x8xi1> to vector<1x8xi1>
    %57 = vector.broadcast %56 : vector<1x8xi1> to vector<8x8xi1>
    %58 = vector.broadcast %cst_19 : f32 to vector<8x8xf32>
    %59 = arith.select %57, %55, %58 : vector<8x8xi1>, vector<8x8xf32>
    %cst_20 = arith.constant dense<0xFF800000> : vector<8xf32>
    %60 = vector.multi_reduction <maximumf>, %59, %cst_20 [1] : vector<8x8xf32> to vector<8xf32>
    %61 = vector.shape_cast %60 : vector<8xf32> to vector<8x1xf32>
    %62 = vector.broadcast %61 : vector<8x1xf32> to vector<8x8xf32>
    %63 = arith.subf %59, %62 : vector<8x8xf32>
    %64 = math.exp %63 : vector<8x8xf32>
    %cst_21 = arith.constant dense<0.000000e+00> : vector<8xf32>
    %65 = vector.multi_reduction <add>, %64, %cst_21 [1] : vector<8x8xf32> to vector<8xf32>
    %66 = vector.shape_cast %65 : vector<8xf32> to vector<8x1xf32>
    %67 = tpu.reciprocal %66 {approx = true} : vector<8x1xf32> -> vector<8x1xf32>
    %68 = vector.broadcast %67 : vector<8x1xf32> to vector<8x8xf32>
    %69 = arith.mulf %64, %68 : vector<8x8xf32>
    %70 = arith.truncf %69 : vector<8x8xf32> to vector<8x8xbf16>
    %cst_22 = arith.constant dense<0.000000e+00> : vector<8x8xf32>
    %71 = tpu.matmul %70, %52, %cst_22 {dimension_numbers = #tpu.dot_dimension_numbers<[1], [0], [0], [1], [0, 0, 1, 1], [], []>} : vector<8x8xbf16>, vector<8x8xbf16>, vector<8x8xf32> -> vector<8x8xf32>
    %72 = vector.extract_strided_slice %1 {offsets = [0, 24], sizes = [8, 8], strides = [1, 1]} : vector<8x96xbf16> to vector<8x8xbf16>
    %73 = vector.extract_strided_slice %1 {offsets = [0, 56], sizes = [8, 8], strides = [1, 1]} : vector<8x96xbf16> to vector<8x8xbf16>
    %74 = vector.extract_strided_slice %1 {offsets = [0, 88], sizes = [8, 8], strides = [1, 1]} : vector<8x96xbf16> to vector<8x8xbf16>
    "tpu.trace_start"() <{level = 10 : i32, message = "qd,kd->qk"}> : () -> ()
    %cst_23 = arith.constant dense<0.000000e+00> : vector<8x8xf32>
    %75 = tpu.matmul %72, %73, %cst_23 {dimension_numbers = #tpu.dot_dimension_numbers<[1], [1], [0], [0], [0, 0, 1, 0], [], []>} : vector<8x8xbf16>, vector<8x8xbf16>, vector<8x8xf32> -> vector<8x8xf32>
    "tpu.trace_stop"() : () -> ()
    %cst_24 = arith.constant 0.353553385 : f32
    %76 = vector.broadcast %cst_24 : f32 to vector<8x8xf32>
    %77 = arith.mulf %75, %76 : vector<8x8xf32>
    %cst_25 = arith.constant -1.000000e+10 : f32
    %78 = vector.shape_cast %5 : vector<1x8xi1> to vector<1x8xi1>
    %79 = vector.broadcast %78 : vector<1x8xi1> to vector<8x8xi1>
    %80 = vector.broadcast %cst_25 : f32 to vector<8x8xf32>
    %81 = arith.select %79, %77, %80 : vector<8x8xi1>, vector<8x8xf32>
    %cst_26 = arith.constant dense<0xFF800000> : vector<8xf32>
    %82 = vector.multi_reduction <maximumf>, %81, %cst_26 [1] : vector<8x8xf32> to vector<8xf32>
    %83 = vector.shape_cast %82 : vector<8xf32> to vector<8x1xf32>
    %84 = vector.broadcast %83 : vector<8x1xf32> to vector<8x8xf32>
    %85 = arith.subf %81, %84 : vector<8x8xf32>
    %86 = math.exp %85 : vector<8x8xf32>
    %cst_27 = arith.constant dense<0.000000e+00> : vector<8xf32>
    %87 = vector.multi_reduction <add>, %86, %cst_27 [1] : vector<8x8xf32> to vector<8xf32>
    %88 = vector.shape_cast %87 : vector<8xf32> to vector<8x1xf32>
    %89 = tpu.reciprocal %88 {approx = true} : vector<8x1xf32> -> vector<8x1xf32>
    %90 = vector.broadcast %89 : vector<8x1xf32> to vector<8x8xf32>
    %91 = arith.mulf %86, %90 : vector<8x8xf32>
    %92 = arith.truncf %91 : vector<8x8xf32> to vector<8x8xbf16>
    %cst_28 = arith.constant dense<0.000000e+00> : vector<8x8xf32>
    %93 = tpu.matmul %92, %74, %cst_28 {dimension_numbers = #tpu.dot_dimension_numbers<[1], [0], [0], [1], [0, 0, 1, 1], [], []>} : vector<8x8xbf16>, vector<8x8xbf16>, vector<8x8xf32> -> vector<8x8xf32>
    %94 = tpu.concatenate %27, %49, %71, %93 in 1 : vector<8x8xf32>, vector<8x8xf32>, vector<8x8xf32>, vector<8x8xf32> -> vector<8x32xf32>
    %95 = arith.truncf %94 : vector<8x32xf32> to vector<8x32xbf16>
    %c0_29 = arith.constant 0 : index
    %c0_30 = arith.constant 0 : index
    %c0_31 = arith.constant 0 : index
    %96 = vector.load %arg3[%c0_29, %c0_30, %c0_31] : memref<1x8x32xbf16, #tpu.memory_space<vmem>>, vector<1x8x32xbf16>
    %97 = vector.shape_cast %96 : vector<1x8x32xbf16> to vector<8x32xbf16>
    %98 = vector.shape_cast %95 : vector<8x32xbf16> to vector<1x8x32xbf16>
    tpu.vector_store %arg3[%c0_29, %c0_30, %c0_31], %98 {strides = array<i32>} : memref<1x8x32xbf16, #tpu.memory_space<vmem>>, vector<1x8x32xbf16>,
    return
  }
  func.func @transform_0(%arg0: i32) -> (i32, i32, i32) {
    %c0_i32 = arith.constant 0 : i32
    %c0_i32_0 = arith.constant 0 : i32
    %c0_i32_1 = arith.constant 0 : i32
    return %arg0, %c0_i32, %c0_i32_0 : i32, i32, i32
  }
  func.func @transform_1(%arg0: i32) -> (i32, i32, i32) {
    %c0_i32 = arith.constant 0 : i32
    %c0_i32_0 = arith.constant 0 : i32
    %c0_i32_1 = arith.constant 0 : i32
    return %arg0, %c0_i32, %c0_i32_0 : i32, i32, i32
  }
  func.func @transform_2(%arg0: i32) -> (i32, i32, i32) {
    %c0_i32 = arith.constant 0 : i32
    %c0_i32_0 = arith.constant 0 : i32
    %c0_i32_1 = arith.constant 0 : i32
    return %arg0, %c0_i32, %c0_i32_0 : i32, i32, i32
  }
}

module attributes {stable_mosaic.version = 11 : i64} {
  func.func @_ffn_add_ln_kernel(%arg0: i32, %arg1: i32, %arg2: memref<16x32xf32, #tpu.memory_space<vmem>>, %arg3: memref<32x64xbf16, #tpu.memory_space<vmem>>, %arg4: memref<1x64xf32, #tpu.memory_space<vmem>>, %arg5: memref<64x32xbf16, #tpu.memory_space<vmem>>, %arg6: memref<1x32xf32, #tpu.memory_space<vmem>>, %arg7: memref<1x32xf32, #tpu.memory_space<vmem>>, %arg8: memref<1x32xf32, #tpu.memory_space<vmem>>, %arg9: memref<16x32xf32, #tpu.memory_space<vmem>>, %arg10: memref<16x32xf32, #tpu.memory_space<vmem>>) attributes {dimension_semantics = [#tpu.dimension_semantics<parallel>, #tpu.dimension_semantics<arbitrary>], iteration_bounds = array<i64: 1, 1>, scalar_prefetch = 0 : i64, scratch_operands = 1 : i64, tpu.core_type = #tpu.core_type<tc>, window_params = [{transform_indices = @transform_0, window_bounds = array<i64: 16, 32>}, {transform_indices = @transform_1, window_bounds = array<i64: 32, 64>}, {transform_indices = @transform_2, window_bounds = array<i64: 1, 64>}, {transform_indices = @transform_3, window_bounds = array<i64: 64, 32>}, {pipeline_mode = #tpu.pipeline_mode<synchronous>, transform_indices = @transform_4, window_bounds = array<i64: 1, 32>}, {pipeline_mode = #tpu.pipeline_mode<synchronous>, transform_indices = @transform_5, window_bounds = array<i64: 1, 32>}, {pipeline_mode = #tpu.pipeline_mode<synchronous>, transform_indices = @transform_6, window_bounds = array<i64: 1, 32>}, {transform_indices = @transform_7, window_bounds = array<i64: 16, 32>}]} {
    %c0_i32 = arith.constant 0 : i32
    %0 = arith.cmpi eq, %arg1, %c0_i32 : i32
    %1 = arith.extui %0 : i1 to i32
    %c0_i32_0 = arith.constant 0 : i32
    %2 = arith.cmpi ne, %1, %c0_i32_0 : i32
    scf.if %2 {
      %cst_16 = arith.constant 0.000000e+00 : f32
      %21 = vector.broadcast %cst_16 : f32 to vector<16x32xf32>
      %c0_17 = arith.constant 0 : index
      %c0_18 = arith.constant 0 : index
      %22 = vector.load %arg10[%c0_17, %c0_18] : memref<16x32xf32, #tpu.memory_space<vmem>>, vector<16x32xf32>
      tpu.vector_store %arg10[%c0_17, %c0_18], %21 {strides = array<i32>} : memref<16x32xf32, #tpu.memory_space<vmem>>, vector<16x32xf32>,
    } else {
    }
    %c0 = arith.constant 0 : index
    %c0_1 = arith.constant 0 : index
    %3 = vector.load %arg2[%c0, %c0_1] : memref<16x32xf32, #tpu.memory_space<vmem>>, vector<16x32xf32>
    %4 = arith.truncf %3 : vector<16x32xf32> to vector<16x32xbf16>
    %c0_2 = arith.constant 0 : index
    %c0_3 = arith.constant 0 : index
    %5 = vector.load %arg3[%c0_2, %c0_3] : memref<32x64xbf16, #tpu.memory_space<vmem>>, vector<32x64xbf16>
    %cst = arith.constant dense<0.000000e+00> : vector<16x64xf32>
    %6 = tpu.matmul %4, %5, %cst {dimension_numbers = #tpu.dot_dimension_numbers<[1], [0], [0], [1], [0, 0, 1, 1], [], []>} : vector<16x32xbf16>, vector<32x64xbf16>, vector<16x64xf32> -> vector<16x64xf32>
    %c0_4 = arith.constant 0 : index
    %c0_5 = arith.constant 0 : index
    %7 = vector.load %arg4[%c0_4, %c0_5] : memref<1x64xf32, #tpu.memory_space<vmem>>, vector<1x64xf32>
    %8 = vector.broadcast %7 : vector<1x64xf32> to vector<16x64xf32>
    %9 = arith.addf %6, %8 : vector<16x64xf32>
    %cst_6 = arith.constant 0.000000e+00 : f32
    %10 = vector.broadcast %cst_6 : f32 to vector<16x64xf32>
    %11 = arith.maximumf %9, %10 : vector<16x64xf32>
    %c0_7 = arith.constant 0 : index
    %c0_8 = arith.constant 0 : index
    %12 = vector.load %arg10[%c0_7, %c0_8] : memref<16x32xf32, #tpu.memory_space<vmem>>, vector<16x32xf32>
    %13 = arith.truncf %11 : vector<16x64xf32> to vector<16x64xbf16>
    %c0_9 = arith.constant 0 : index
    %c0_10 = arith.constant 0 : index
    %14 = vector.load %arg5[%c0_9, %c0_10] : memref<64x32xbf16, #tpu.memory_space<vmem>>, vector<64x32xbf16>
    %cst_11 = arith.constant dense<0.000000e+00> : vector<16x32xf32>
    %15 = tpu.matmul %13, %14, %cst_11 {dimension_numbers = #tpu.dot_dimension_numbers<[1], [0], [0], [1], [0, 0, 1, 1], [], []>} : vector<16x64xbf16>, vector<64x32xbf16>, vector<16x32xf32> -> vector<16x32xf32>
    %16 = arith.addf %12, %15 : vector<16x32xf32>
    %c0_12 = arith.constant 0 : index
    %c0_13 = arith.constant 0 : index
    %17 = vector.load %arg10[%c0_12, %c0_13] : memref<16x32xf32, #tpu.memory_space<vmem>>, vector<16x32xf32>
    tpu.vector_store %arg10[%c0_12, %c0_13], %16 {strides = array<i32>} : memref<16x32xf32, #tpu.memory_space<vmem>>, vector<16x32xf32>,
    %c0_i32_14 = arith.constant 0 : i32
    %18 = arith.cmpi eq, %arg1, %c0_i32_14 : i32
    %19 = arith.extui %18 : i1 to i32
    %c0_i32_15 = arith.constant 0 : i32
    %20 = arith.cmpi ne, %19, %c0_i32_15 : i32
    scf.if %20 {
      %c0_16 = arith.constant 0 : index
      %c0_17 = arith.constant 0 : index
      %21 = vector.load %arg10[%c0_16, %c0_17] : memref<16x32xf32, #tpu.memory_space<vmem>>, vector<16x32xf32>
      %c0_18 = arith.constant 0 : index
      %c0_19 = arith.constant 0 : index
      %22 = vector.load %arg6[%c0_18, %c0_19] : memref<1x32xf32, #tpu.memory_space<vmem>>, vector<1x32xf32>
      %23 = vector.broadcast %22 : vector<1x32xf32> to vector<16x32xf32>
      %24 = arith.addf %21, %23 : vector<16x32xf32>
      %c0_20 = arith.constant 0 : index
      %c0_21 = arith.constant 0 : index
      %25 = vector.load %arg2[%c0_20, %c0_21] : memref<16x32xf32, #tpu.memory_space<vmem>>, vector<16x32xf32>
      %26 = arith.addf %24, %25 : vector<16x32xf32>
      %cst_22 = arith.constant dense<0.000000e+00> : vector<16xf32>
      %27 = vector.multi_reduction <add>, %26, %cst_22 [1] : vector<16x32xf32> to vector<16xf32>
      %28 = vector.shape_cast %27 : vector<16xf32> to vector<16x1xf32>
      %cst_23 = arith.constant 3.200000e+01 : f32
      %29 = vector.broadcast %cst_23 : f32 to vector<16x1xf32>
      %30 = arith.divf %28, %29 : vector<16x1xf32>
      %31 = vector.broadcast %30 : vector<16x1xf32> to vector<16x32xf32>
      %32 = arith.subf %26, %31 : vector<16x32xf32>
      %33 = arith.mulf %32, %32 : vector<16x32xf32>
      %cst_24 = arith.constant dense<0.000000e+00> : vector<16xf32>
      %34 = vector.multi_reduction <add>, %33, %cst_24 [1] : vector<16x32xf32> to vector<16xf32>
      %35 = vector.shape_cast %34 : vector<16xf32> to vector<16x1xf32>
      %cst_25 = arith.constant 3.200000e+01 : f32
      %36 = vector.broadcast %cst_25 : f32 to vector<16x1xf32>
      %37 = arith.divf %35, %36 : vector<16x1xf32>
      %38 = vector.broadcast %30 : vector<16x1xf32> to vector<16x32xf32>
      %39 = arith.subf %26, %38 : vector<16x32xf32>
      %cst_26 = arith.constant 9.99999974E-6 : f32
      %40 = vector.broadcast %cst_26 : f32 to vector<16x1xf32>
      %41 = arith.addf %37, %40 : vector<16x1xf32>
      %42 = math.rsqrt %41 : vector<16x1xf32>
      %43 = vector.broadcast %42 : vector<16x1xf32> to vector<16x32xf32>
      %44 = arith.mulf %39, %43 : vector<16x32xf32>
      %c0_27 = arith.constant 0 : index
      %c0_28 = arith.constant 0 : index
      %45 = vector.load %arg7[%c0_27, %c0_28] : memref<1x32xf32, #tpu.memory_space<vmem>>, vector<1x32xf32>
      %46 = vector.broadcast %45 : vector<1x32xf32> to vector<16x32xf32>
      %47 = arith.mulf %44, %46 : vector<16x32xf32>
      %c0_29 = arith.constant 0 : index
      %c0_30 = arith.constant 0 : index
      %48 = vector.load %arg8[%c0_29, %c0_30] : memref<1x32xf32, #tpu.memory_space<vmem>>, vector<1x32xf32>
      %49 = vector.broadcast %48 : vector<1x32xf32> to vector<16x32xf32>
      %50 = arith.addf %47, %49 : vector<16x32xf32>
      %c0_31 = arith.constant 0 : index
      %c0_32 = arith.constant 0 : index
      %51 = vector.load %arg9[%c0_31, %c0_32] : memref<16x32xf32, #tpu.memory_space<vmem>>, vector<16x32xf32>
      tpu.vector_store %arg9[%c0_31, %c0_32], %50 {strides = array<i32>} : memref<16x32xf32, #tpu.memory_space<vmem>>, vector<16x32xf32>,
    } else {
    }
    return
  }
  func.func @transform_0(%arg0: i32, %arg1: i32) -> (i32, i32) {
    %c0_i32 = arith.constant 0 : i32
    %c0_i32_0 = arith.constant 0 : i32
    return %arg0, %c0_i32 : i32, i32
  }
  func.func @transform_1(%arg0: i32, %arg1: i32) -> (i32, i32) {
    %c0_i32 = arith.constant 0 : i32
    %c0_i32_0 = arith.constant 0 : i32
    return %c0_i32, %arg1 : i32, i32
  }
  func.func @transform_2(%arg0: i32, %arg1: i32) -> (i32, i32) {
    %c0_i32 = arith.constant 0 : i32
    %c0_i32_0 = arith.constant 0 : i32
    return %c0_i32, %arg1 : i32, i32
  }
  func.func @transform_3(%arg0: i32, %arg1: i32) -> (i32, i32) {
    %c0_i32 = arith.constant 0 : i32
    %c0_i32_0 = arith.constant 0 : i32
    return %arg1, %c0_i32 : i32, i32
  }
  func.func @transform_4(%arg0: i32, %arg1: i32) -> (i32, i32) {
    %c0_i32 = arith.constant 0 : i32
    %c0_i32_0 = arith.constant 0 : i32
    %c0_i32_1 = arith.constant 0 : i32
    return %c0_i32, %c0_i32_0 : i32, i32
  }
  func.func @transform_5(%arg0: i32, %arg1: i32) -> (i32, i32) {
    %c0_i32 = arith.constant 0 : i32
    %c0_i32_0 = arith.constant 0 : i32
    %c0_i32_1 = arith.constant 0 : i32
    return %c0_i32, %c0_i32_0 : i32, i32
  }
  func.func @transform_6(%arg0: i32, %arg1: i32) -> (i32, i32) {
    %c0_i32 = arith.constant 0 : i32
    %c0_i32_0 = arith.constant 0 : i32
    %c0_i32_1 = arith.constant 0 : i32
    return %c0_i32, %c0_i32_0 : i32, i32
  }
  func.func @transform_7(%arg0: i32, %arg1: i32) -> (i32, i32) {
    %c0_i32 = arith.constant 0 : i32
    %c0_i32_0 = arith.constant 0 : i32
    return %arg0, %c0_i32 : i32, i32
  }
}

module attributes {stable_mosaic.version = 11 : i64} {
  func.func @_linear_kernel(%arg0: i32, %arg1: i32, %arg2: memref<16x32xf32, #tpu.memory_space<vmem>>, %arg3: memref<32x64xbf16, #tpu.memory_space<vmem>>, %arg4: memref<1x64xf32, #tpu.memory_space<vmem>>, %arg5: memref<16x64xbf16, #tpu.memory_space<vmem>>) attributes {dimension_semantics = [#tpu.dimension_semantics<parallel>, #tpu.dimension_semantics<parallel>], iteration_bounds = array<i64: 1, 1>, scalar_prefetch = 0 : i64, scratch_operands = 0 : i64, tpu.core_type = #tpu.core_type<tc>, window_params = [{transform_indices = @transform_0, window_bounds = array<i64: 16, 32>}, {transform_indices = @transform_1, window_bounds = array<i64: 32, 64>}, {transform_indices = @transform_2, window_bounds = array<i64: 1, 64>}, {transform_indices = @transform_3, window_bounds = array<i64: 16, 64>}]} {
    %c0 = arith.constant 0 : index
    %c0_0 = arith.constant 0 : index
    %0 = vector.load %arg2[%c0, %c0_0] : memref<16x32xf32, #tpu.memory_space<vmem>>, vector<16x32xf32>
    %1 = arith.truncf %0 : vector<16x32xf32> to vector<16x32xbf16>
    %c0_1 = arith.constant 0 : index
    %c0_2 = arith.constant 0 : index
    %2 = vector.load %arg3[%c0_1, %c0_2] : memref<32x64xbf16, #tpu.memory_space<vmem>>, vector<32x64xbf16>
    %cst = arith.constant dense<0.000000e+00> : vector<16x64xf32>
    %3 = tpu.matmul %1, %2, %cst {dimension_numbers = #tpu.dot_dimension_numbers<[1], [0], [0], [1], [0, 0, 1, 1], [], []>} : vector<16x32xbf16>, vector<32x64xbf16>, vector<16x64xf32> -> vector<16x64xf32>
    %c0_3 = arith.constant 0 : index
    %c0_4 = arith.constant 0 : index
    %4 = vector.load %arg4[%c0_3, %c0_4] : memref<1x64xf32, #tpu.memory_space<vmem>>, vector<1x64xf32>
    %5 = vector.broadcast %4 : vector<1x64xf32> to vector<16x64xf32>
    %6 = arith.addf %3, %5 : vector<16x64xf32>
    %7 = arith.truncf %6 : vector<16x64xf32> to vector<16x64xbf16>
    %c0_5 = arith.constant 0 : index
    %c0_6 = arith.constant 0 : index
    %8 = vector.load %arg5[%c0_5, %c0_6] : memref<16x64xbf16, #tpu.memory_space<vmem>>, vector<16x64xbf16>
    tpu.vector_store %arg5[%c0_5, %c0_6], %7 {strides = array<i32>} : memref<16x64xbf16, #tpu.memory_space<vmem>>, vector<16x64xbf16>,
    return
  }
  func.func @transform_0(%arg0: i32, %arg1: i32) -> (i32, i32) {
    %c0_i32 = arith.constant 0 : i32
    %c0_i32_0 = arith.constant 0 : i32
    return %arg0, %c0_i32 : i32, i32
  }
  func.func @transform_1(%arg0: i32, %arg1: i32) -> (i32, i32) {
    %c0_i32 = arith.constant 0 : i32
    %c0_i32_0 = arith.constant 0 : i32
    return %c0_i32, %arg1 : i32, i32
  }
  func.func @transform_2(%arg0: i32, %arg1: i32) -> (i32, i32) {
    %c0_i32 = arith.constant 0 : i32
    %c0_i32_0 = arith.constant 0 : i32
    return %c0_i32, %arg1 : i32, i32
  }
  func.func @transform_3(%arg0: i32, %arg1: i32) -> (i32, i32) {
    %c0_i32 = arith.constant 0 : i32
    return %arg0, %arg1 : i32, i32
  }
}

module attributes {stable_mosaic.version = 11 : i64} {
  func.func @_self_attn_kernel(%arg0: i32, %arg1: memref<1x8x96xbf16, #tpu.memory_space<vmem>>, %arg2: memref<1x1x8xf32, #tpu.memory_space<vmem>>, %arg3: memref<1x8x32xbf16, #tpu.memory_space<vmem>>) attributes {dimension_semantics = [#tpu.dimension_semantics<parallel>], iteration_bounds = array<i64: 2>, scalar_prefetch = 0 : i64, scratch_operands = 0 : i64, tpu.core_type = #tpu.core_type<tc>, window_params = [{transform_indices = @transform_0, window_bounds = array<i64: 1, 8, 96>}, {transform_indices = @transform_1, window_bounds = array<i64: 1, 1, 8>}, {transform_indices = @transform_2, window_bounds = array<i64: 1, 8, 32>}]} {
    %c0 = arith.constant 0 : index
    %c0_0 = arith.constant 0 : index
    %c0_1 = arith.constant 0 : index
    %0 = vector.load %arg1[%c0, %c0_0, %c0_1] : memref<1x8x96xbf16, #tpu.memory_space<vmem>>, vector<1x8x96xbf16>
    %1 = vector.shape_cast %0 : vector<1x8x96xbf16> to vector<8x96xbf16>
    %c0_2 = arith.constant 0 : index
    %c0_3 = arith.constant 0 : index
    %c0_4 = arith.constant 0 : index
    %2 = vector.load %arg2[%c0_2, %c0_3, %c0_4] : memref<1x1x8xf32, #tpu.memory_space<vmem>>, vector<1x1x8xf32>
    %3 = vector.shape_cast %2 : vector<1x1x8xf32> to vector<1x8xf32>
    %cst = arith.constant 0.000000e+00 : f32
    %4 = vector.broadcast %cst : f32 to vector<1x8xf32>
    %5 = arith.cmpf ogt, %3, %4 : vector<1x8xf32>
    %6 = tpu.iota {dimensions = array<i32: 0>} : vector<8x8xi32>
    %7 = tpu.iota {dimensions = array<i32: 1>} : vector<8x8xi32>
    %8 = arith.cmpi sge, %6, %7 : vector<8x8xi32>
    %9 = vector.broadcast %5 : vector<1x8xi1> to vector<8x8xi1>
    %10 = arith.andi %9, %8 : vector<8x8xi1>
    %11 = vector.extract_strided_slice %1 {offsets = [0, 0], sizes = [8, 8], strides = [1, 1]} : vector<8x96xbf16> to vector<8x8xbf16>
    %12 = vector.extract_strided_slice %1 {offsets = [0, 32], sizes = [8, 8], strides = [1, 1]} : vector<8x96xbf16> to vector<8x8xbf16>
    %13 = vector.extract_strided_slice %1 {offsets = [0, 64], sizes = [8, 8], strides = [1, 1]} : vector<8x96xbf16> to vector<8x8xbf16>
    "tpu.trace_start"() <{level = 10 : i32, message = "qd,kd->qk"}> : () -> ()
    %cst_5 = arith.constant dense<0.000000e+00> : vector<8x8xf32>
    %14 = tpu.matmul %11, %12, %cst_5 {dimension_numbers = #tpu.dot_dimension_numbers<[1], [1], [0], [0], [0, 0, 1, 0], [], []>} : vector<8x8xbf16>, vector<8x8xbf16>, vector<8x8xf32> -> vector<8x8xf32>
    "tpu.trace_stop"() : () -> ()
    %cst_6 = arith.constant 0.353553385 : f32
    %15 = vector.broadcast %cst_6 : f32 to vector<8x8xf32>
    %16 = arith.mulf %14, %15 : vector<8x8xf32>
    %cst_7 = arith.constant -1.000000e+10 : f32
    %17 = vector.broadcast %cst_7 : f32 to vector<8x8xf32>
    %18 = arith.select %10, %16, %17 : vector<8x8xi1>, vector<8x8xf32>
    %cst_8 = arith.constant dense<0xFF800000> : vector<8xf32>
    %19 = vector.multi_reduction <maximumf>, %18, %cst_8 [1] : vector<8x8xf32> to vector<8xf32>
    %20 = vector.shape_cast %19 : vector<8xf32> to vector<8x1xf32>
    %21 = vector.broadcast %20 : vector<8x1xf32> to vector<8x8xf32>
    %22 = arith.subf %18, %21 : vector<8x8xf32>
    %23 = math.exp %22 : vector<8x8xf32>
    %cst_9 = arith.constant dense<0.000000e+00> : vector<8xf32>
    %24 = vector.multi_reduction <add>, %23, %cst_9 [1] : vector<8x8xf32> to vector<8xf32>
    %25 = vector.shape_cast %24 : vector<8xf32> to vector<8x1xf32>
    %26 = tpu.reciprocal %25 {approx = true} : vector<8x1xf32> -> vector<8x1xf32>
    %27 = vector.broadcast %26 : vector<8x1xf32> to vector<8x8xf32>
    %28 = arith.mulf %23, %27 : vector<8x8xf32>
    %29 = arith.truncf %28 : vector<8x8xf32> to vector<8x8xbf16>
    %cst_10 = arith.constant dense<0.000000e+00> : vector<8x8xf32>
    %30 = tpu.matmul %29, %13, %cst_10 {dimension_numbers = #tpu.dot_dimension_numbers<[1], [0], [0], [1], [0, 0, 1, 1], [], []>} : vector<8x8xbf16>, vector<8x8xbf16>, vector<8x8xf32> -> vector<8x8xf32>
    %31 = vector.extract_strided_slice %1 {offsets = [0, 8], sizes = [8, 8], strides = [1, 1]} : vector<8x96xbf16> to vector<8x8xbf16>
    %32 = vector.extract_strided_slice %1 {offsets = [0, 40], sizes = [8, 8], strides = [1, 1]} : vector<8x96xbf16> to vector<8x8xbf16>
    %33 = vector.extract_strided_slice %1 {offsets = [0, 72], sizes = [8, 8], strides = [1, 1]} : vector<8x96xbf16> to vector<8x8xbf16>
    "tpu.trace_start"() <{level = 10 : i32, message = "qd,kd->qk"}> : () -> ()
    %cst_11 = arith.constant dense<0.000000e+00> : vector<8x8xf32>
    %34 = tpu.matmul %31, %32, %cst_11 {dimension_numbers = #tpu.dot_dimension_numbers<[1], [1], [0], [0], [0, 0, 1, 0], [], []>} : vector<8x8xbf16>, vector<8x8xbf16>, vector<8x8xf32> -> vector<8x8xf32>
    "tpu.trace_stop"() : () -> ()
    %cst_12 = arith.constant 0.353553385 : f32
    %35 = vector.broadcast %cst_12 : f32 to vector<8x8xf32>
    %36 = arith.mulf %34, %35 : vector<8x8xf32>
    %cst_13 = arith.constant -1.000000e+10 : f32
    %37 = vector.broadcast %cst_13 : f32 to vector<8x8xf32>
    %38 = arith.select %10, %36, %37 : vector<8x8xi1>, vector<8x8xf32>
    %cst_14 = arith.constant dense<0xFF800000> : vector<8xf32>
    %39 = vector.multi_reduction <maximumf>, %38, %cst_14 [1] : vector<8x8xf32> to vector<8xf32>
    %40 = vector.shape_cast %39 : vector<8xf32> to vector<8x1xf32>
    %41 = vector.broadcast %40 : vector<8x1xf32> to vector<8x8xf32>
    %42 = arith.subf %38, %41 : vector<8x8xf32>
    %43 = math.exp %42 : vector<8x8xf32>
    %cst_15 = arith.constant dense<0.000000e+00> : vector<8xf32>
    %44 = vector.multi_reduction <add>, %43, %cst_15 [1] : vector<8x8xf32> to vector<8xf32>
    %45 = vector.shape_cast %44 : vector<8xf32> to vector<8x1xf32>
    %46 = tpu.reciprocal %45 {approx = true} : vector<8x1xf32> -> vector<8x1xf32>
    %47 = vector.broadcast %46 : vector<8x1xf32> to vector<8x8xf32>
    %48 = arith.mulf %43, %47 : vector<8x8xf32>
    %49 = arith.truncf %48 : vector<8x8xf32> to vector<8x8xbf16>
    %cst_16 = arith.constant dense<0.000000e+00> : vector<8x8xf32>
    %50 = tpu.matmul %49, %33, %cst_16 {dimension_numbers = #tpu.dot_dimension_numbers<[1], [0], [0], [1], [0, 0, 1, 1], [], []>} : vector<8x8xbf16>, vector<8x8xbf16>, vector<8x8xf32> -> vector<8x8xf32>
    %51 = vector.extract_strided_slice %1 {offsets = [0, 16], sizes = [8, 8], strides = [1, 1]} : vector<8x96xbf16> to vector<8x8xbf16>
    %52 = vector.extract_strided_slice %1 {offsets = [0, 48], sizes = [8, 8], strides = [1, 1]} : vector<8x96xbf16> to vector<8x8xbf16>
    %53 = vector.extract_strided_slice %1 {offsets = [0, 80], sizes = [8, 8], strides = [1, 1]} : vector<8x96xbf16> to vector<8x8xbf16>
    "tpu.trace_start"() <{level = 10 : i32, message = "qd,kd->qk"}> : () -> ()
    %cst_17 = arith.constant dense<0.000000e+00> : vector<8x8xf32>
    %54 = tpu.matmul %51, %52, %cst_17 {dimension_numbers = #tpu.dot_dimension_numbers<[1], [1], [0], [0], [0, 0, 1, 0], [], []>} : vector<8x8xbf16>, vector<8x8xbf16>, vector<8x8xf32> -> vector<8x8xf32>
    "tpu.trace_stop"() : () -> ()
    %cst_18 = arith.constant 0.353553385 : f32
    %55 = vector.broadcast %cst_18 : f32 to vector<8x8xf32>
    %56 = arith.mulf %54, %55 : vector<8x8xf32>
    %cst_19 = arith.constant -1.000000e+10 : f32
    %57 = vector.broadcast %cst_19 : f32 to vector<8x8xf32>
    %58 = arith.select %10, %56, %57 : vector<8x8xi1>, vector<8x8xf32>
    %cst_20 = arith.constant dense<0xFF800000> : vector<8xf32>
    %59 = vector.multi_reduction <maximumf>, %58, %cst_20 [1] : vector<8x8xf32> to vector<8xf32>
    %60 = vector.shape_cast %59 : vector<8xf32> to vector<8x1xf32>
    %61 = vector.broadcast %60 : vector<8x1xf32> to vector<8x8xf32>
    %62 = arith.subf %58, %61 : vector<8x8xf32>
    %63 = math.exp %62 : vector<8x8xf32>
    %cst_21 = arith.constant dense<0.000000e+00> : vector<8xf32>
    %64 = vector.multi_reduction <add>, %63, %cst_21 [1] : vector<8x8xf32> to vector<8xf32>
    %65 = vector.shape_cast %64 : vector<8xf32> to vector<8x1xf32>
    %66 = tpu.reciprocal %65 {approx = true} : vector<8x1xf32> -> vector<8x1xf32>
    %67 = vector.broadcast %66 : vector<8x1xf32> to vector<8x8xf32>
    %68 = arith.mulf %63, %67 : vector<8x8xf32>
    %69 = arith.truncf %68 : vector<8x8xf32> to vector<8x8xbf16>
    %cst_22 = arith.constant dense<0.000000e+00> : vector<8x8xf32>
    %70 = tpu.matmul %69, %53, %cst_22 {dimension_numbers = #tpu.dot_dimension_numbers<[1], [0], [0], [1], [0, 0, 1, 1], [], []>} : vector<8x8xbf16>, vector<8x8xbf16>, vector<8x8xf32> -> vector<8x8xf32>
    %71 = vector.extract_strided_slice %1 {offsets = [0, 24], sizes = [8, 8], strides = [1, 1]} : vector<8x96xbf16> to vector<8x8xbf16>
    %72 = vector.extract_strided_slice %1 {offsets = [0, 56], sizes = [8, 8], strides = [1, 1]} : vector<8x96xbf16> to vector<8x8xbf16>
    %73 = vector.extract_strided_slice %1 {offsets = [0, 88], sizes = [8, 8], strides = [1, 1]} : vector<8x96xbf16> to vector<8x8xbf16>
    "tpu.trace_start"() <{level = 10 : i32, message = "qd,kd->qk"}> : () -> ()
    %cst_23 = arith.constant dense<0.000000e+00> : vector<8x8xf32>
    %74 = tpu.matmul %71, %72, %cst_23 {dimension_numbers = #tpu.dot_dimension_numbers<[1], [1], [0], [0], [0, 0, 1, 0], [], []>} : vector<8x8xbf16>, vector<8x8xbf16>, vector<8x8xf32> -> vector<8x8xf32>
    "tpu.trace_stop"() : () -> ()
    %cst_24 = arith.constant 0.353553385 : f32
    %75 = vector.broadcast %cst_24 : f32 to vector<8x8xf32>
    %76 = arith.mulf %74, %75 : vector<8x8xf32>
    %cst_25 = arith.constant -1.000000e+10 : f32
    %77 = vector.broadcast %cst_25 : f32 to vector<8x8xf32>
    %78 = arith.select %10, %76, %77 : vector<8x8xi1>, vector<8x8xf32>
    %cst_26 = arith.constant dense<0xFF800000> : vector<8xf32>
    %79 = vector.multi_reduction <maximumf>, %78, %cst_26 [1] : vector<8x8xf32> to vector<8xf32>
    %80 = vector.shape_cast %79 : vector<8xf32> to vector<8x1xf32>
    %81 = vector.broadcast %80 : vector<8x1xf32> to vector<8x8xf32>
    %82 = arith.subf %78, %81 : vector<8x8xf32>
    %83 = math.exp %82 : vector<8x8xf32>
    %cst_27 = arith.constant dense<0.000000e+00> : vector<8xf32>
    %84 = vector.multi_reduction <add>, %83, %cst_27 [1] : vector<8x8xf32> to vector<8xf32>
    %85 = vector.shape_cast %84 : vector<8xf32> to vector<8x1xf32>
    %86 = tpu.reciprocal %85 {approx = true} : vector<8x1xf32> -> vector<8x1xf32>
    %87 = vector.broadcast %86 : vector<8x1xf32> to vector<8x8xf32>
    %88 = arith.mulf %83, %87 : vector<8x8xf32>
    %89 = arith.truncf %88 : vector<8x8xf32> to vector<8x8xbf16>
    %cst_28 = arith.constant dense<0.000000e+00> : vector<8x8xf32>
    %90 = tpu.matmul %89, %73, %cst_28 {dimension_numbers = #tpu.dot_dimension_numbers<[1], [0], [0], [1], [0, 0, 1, 1], [], []>} : vector<8x8xbf16>, vector<8x8xbf16>, vector<8x8xf32> -> vector<8x8xf32>
    %91 = tpu.concatenate %30, %50, %70, %90 in 1 : vector<8x8xf32>, vector<8x8xf32>, vector<8x8xf32>, vector<8x8xf32> -> vector<8x32xf32>
    %92 = arith.truncf %91 : vector<8x32xf32> to vector<8x32xbf16>
    %c0_29 = arith.constant 0 : index
    %c0_30 = arith.constant 0 : index
    %c0_31 = arith.constant 0 : index
    %93 = vector.load %arg3[%c0_29, %c0_30, %c0_31] : memref<1x8x32xbf16, #tpu.memory_space<vmem>>, vector<1x8x32xbf16>
    %94 = vector.shape_cast %93 : vector<1x8x32xbf16> to vector<8x32xbf16>
    %95 = vector.shape_cast %92 : vector<8x32xbf16> to vector<1x8x32xbf16>
    tpu.vector_store %arg3[%c0_29, %c0_30, %c0_31], %95 {strides = array<i32>} : memref<1x8x32xbf16, #tpu.memory_space<vmem>>, vector<1x8x32xbf16>,
    return
  }
  func.func @transform_0(%arg0: i32) -> (i32, i32, i32) {
    %c0_i32 = arith.constant 0 : i32
    %c0_i32_0 = arith.constant 0 : i32
    %c0_i32_1 = arith.constant 0 : i32
    return %arg0, %c0_i32, %c0_i32_0 : i32, i32, i32
  }
  func.func @transform_1(%arg0: i32) -> (i32, i32, i32) {
    %c0_i32 = arith.constant 0 : i32
    %c0_i32_0 = arith.constant 0 : i32
    %c0_i32_1 = arith.constant 0 : i32
    return %arg0, %c0_i32, %c0_i32_0 : i32, i32, i32
  }
  func.func @transform_2(%arg0: i32) -> (i32, i32, i32) {
    %c0_i32 = arith.constant 0 : i32
    %c0_i32_0 = arith.constant 0 : i32
    %c0_i32_1 = arith.constant 0 : i32
    return %arg0, %c0_i32, %c0_i32_0 : i32, i32, i32
  }
}

module attributes {stable_mosaic.version = 11 : i64} {
  func.func @_linear_kernel(%arg0: i32, %arg1: i32, %arg2: memref<16x32xf32, #tpu.memory_space<vmem>>, %arg3: memref<32x32xbf16, #tpu.memory_space<vmem>>, %arg4: memref<1x32xf32, #tpu.memory_space<vmem>>, %arg5: memref<16x32xbf16, #tpu.memory_space<vmem>>) attributes {dimension_semantics = [#tpu.dimension_semantics<parallel>, #tpu.dimension_semantics<parallel>], iteration_bounds = array<i64: 1, 1>, scalar_prefetch = 0 : i64, scratch_operands = 0 : i64, tpu.core_type = #tpu.core_type<tc>, window_params = [{transform_indices = @transform_0, window_bounds = array<i64: 16, 32>}, {transform_indices = @transform_1, window_bounds = array<i64: 32, 32>}, {transform_indices = @transform_2, window_bounds = array<i64: 1, 32>}, {transform_indices = @transform_3, window_bounds = array<i64: 16, 32>}]} {
    %c0 = arith.constant 0 : index
    %c0_0 = arith.constant 0 : index
    %0 = vector.load %arg2[%c0, %c0_0] : memref<16x32xf32, #tpu.memory_space<vmem>>, vector<16x32xf32>
    %1 = arith.truncf %0 : vector<16x32xf32> to vector<16x32xbf16>
    %c0_1 = arith.constant 0 : index
    %c0_2 = arith.constant 0 : index
    %2 = vector.load %arg3[%c0_1, %c0_2] : memref<32x32xbf16, #tpu.memory_space<vmem>>, vector<32x32xbf16>
    %cst = arith.constant dense<0.000000e+00> : vector<16x32xf32>
    %3 = tpu.matmul %1, %2, %cst {dimension_numbers = #tpu.dot_dimension_numbers<[1], [0], [0], [1], [0, 0, 1, 1], [], []>} : vector<16x32xbf16>, vector<32x32xbf16>, vector<16x32xf32> -> vector<16x32xf32>
    %c0_3 = arith.constant 0 : index
    %c0_4 = arith.constant 0 : index
    %4 = vector.load %arg4[%c0_3, %c0_4] : memref<1x32xf32, #tpu.memory_space<vmem>>, vector<1x32xf32>
    %5 = vector.broadcast %4 : vector<1x32xf32> to vector<16x32xf32>
    %6 = arith.addf %3, %5 : vector<16x32xf32>
    %7 = arith.truncf %6 : vector<16x32xf32> to vector<16x32xbf16>
    %c0_5 = arith.constant 0 : index
    %c0_6 = arith.constant 0 : index
    %8 = vector.load %arg5[%c0_5, %c0_6] : memref<16x32xbf16, #tpu.memory_space<vmem>>, vector<16x32xbf16>
    tpu.vector_store %arg5[%c0_5, %c0_6], %7 {strides = array<i32>} : memref<16x32xbf16, #tpu.memory_space<vmem>>, vector<16x32xbf16>,
    return
  }
  func.func @transform_0(%arg0: i32, %arg1: i32) -> (i32, i32) {
    %c0_i32 = arith.constant 0 : i32
    %c0_i32_0 = arith.constant 0 : i32
    return %arg0, %c0_i32 : i32, i32
  }
  func.func @transform_1(%arg0: i32, %arg1: i32) -> (i32, i32) {
    %c0_i32 = arith.constant 0 : i32
    %c0_i32_0 = arith.constant 0 : i32
    return %c0_i32, %arg1 : i32, i32
  }
  func.func @transform_2(%arg0: i32, %arg1: i32) -> (i32, i32) {
    %c0_i32 = arith.constant 0 : i32
    %c0_i32_0 = arith.constant 0 : i32
    return %c0_i32, %arg1 : i32, i32
  }
  func.func @transform_3(%arg0: i32, %arg1: i32) -> (i32, i32) {
    %c0_i32 = arith.constant 0 : i32
    return %arg0, %arg1 : i32, i32
  }
}

module attributes {stable_mosaic.version = 11 : i64} {
  func.func @_cross_attn_kernel(%arg0: i32, %arg1: memref<1x8x32xbf16, #tpu.memory_space<vmem>>, %arg2: memref<1x8x64xbf16, #tpu.memory_space<vmem>>, %arg3: memref<1x1x8xf32, #tpu.memory_space<vmem>>, %arg4: memref<1x8x32xbf16, #tpu.memory_space<vmem>>) attributes {dimension_semantics = [#tpu.dimension_semantics<parallel>], iteration_bounds = array<i64: 2>, scalar_prefetch = 0 : i64, scratch_operands = 0 : i64, tpu.core_type = #tpu.core_type<tc>, window_params = [{transform_indices = @transform_0, window_bounds = array<i64: 1, 8, 32>}, {transform_indices = @transform_1, window_bounds = array<i64: 1, 8, 64>}, {transform_indices = @transform_2, window_bounds = array<i64: 1, 1, 8>}, {transform_indices = @transform_3, window_bounds = array<i64: 1, 8, 32>}]} {
    %c0 = arith.constant 0 : index
    %c0_0 = arith.constant 0 : index
    %c0_1 = arith.constant 0 : index
    %0 = vector.load %arg1[%c0, %c0_0, %c0_1] : memref<1x8x32xbf16, #tpu.memory_space<vmem>>, vector<1x8x32xbf16>
    %1 = vector.shape_cast %0 : vector<1x8x32xbf16> to vector<8x32xbf16>
    %c0_2 = arith.constant 0 : index
    %c0_3 = arith.constant 0 : index
    %c0_4 = arith.constant 0 : index
    %2 = vector.load %arg2[%c0_2, %c0_3, %c0_4] : memref<1x8x64xbf16, #tpu.memory_space<vmem>>, vector<1x8x64xbf16>
    %3 = vector.shape_cast %2 : vector<1x8x64xbf16> to vector<8x64xbf16>
    %c0_5 = arith.constant 0 : index
    %c0_6 = arith.constant 0 : index
    %c0_7 = arith.constant 0 : index
    %4 = vector.load %arg3[%c0_5, %c0_6, %c0_7] : memref<1x1x8xf32, #tpu.memory_space<vmem>>, vector<1x1x8xf32>
    %5 = vector.shape_cast %4 : vector<1x1x8xf32> to vector<1x8xf32>
    %cst = arith.constant 0.000000e+00 : f32
    %6 = vector.broadcast %cst : f32 to vector<1x8xf32>
    %7 = arith.cmpf ogt, %5, %6 : vector<1x8xf32>
    %8 = vector.extract_strided_slice %1 {offsets = [0, 0], sizes = [8, 8], strides = [1, 1]} : vector<8x32xbf16> to vector<8x8xbf16>
    %9 = vector.extract_strided_slice %3 {offsets = [0, 0], sizes = [8, 8], strides = [1, 1]} : vector<8x64xbf16> to vector<8x8xbf16>
    %10 = vector.extract_strided_slice %3 {offsets = [0, 32], sizes = [8, 8], strides = [1, 1]} : vector<8x64xbf16> to vector<8x8xbf16>
    "tpu.trace_start"() <{level = 10 : i32, message = "qd,kd->qk"}> : () -> ()
    %cst_8 = arith.constant dense<0.000000e+00> : vector<8x8xf32>
    %11 = tpu.matmul %8, %9, %cst_8 {dimension_numbers = #tpu.dot_dimension_numbers<[1], [1], [0], [0], [0, 0, 1, 0], [], []>} : vector<8x8xbf16>, vector<8x8xbf16>, vector<8x8xf32> -> vector<8x8xf32>
    "tpu.trace_stop"() : () -> ()
    %cst_9 = arith.constant 0.353553385 : f32
    %12 = vector.broadcast %cst_9 : f32 to vector<8x8xf32>
    %13 = arith.mulf %11, %12 : vector<8x8xf32>
    %cst_10 = arith.constant -1.000000e+10 : f32
    %14 = vector.shape_cast %7 : vector<1x8xi1> to vector<1x8xi1>
    %15 = vector.broadcast %14 : vector<1x8xi1> to vector<8x8xi1>
    %16 = vector.broadcast %cst_10 : f32 to vector<8x8xf32>
    %17 = arith.select %15, %13, %16 : vector<8x8xi1>, vector<8x8xf32>
    %cst_11 = arith.constant dense<0xFF800000> : vector<8xf32>
    %18 = vector.multi_reduction <maximumf>, %17, %cst_11 [1] : vector<8x8xf32> to vector<8xf32>
    %19 = vector.shape_cast %18 : vector<8xf32> to vector<8x1xf32>
    %20 = vector.broadcast %19 : vector<8x1xf32> to vector<8x8xf32>
    %21 = arith.subf %17, %20 : vector<8x8xf32>
    %22 = math.exp %21 : vector<8x8xf32>
    %cst_12 = arith.constant dense<0.000000e+00> : vector<8xf32>
    %23 = vector.multi_reduction <add>, %22, %cst_12 [1] : vector<8x8xf32> to vector<8xf32>
    %24 = vector.shape_cast %23 : vector<8xf32> to vector<8x1xf32>
    %25 = tpu.reciprocal %24 {approx = true} : vector<8x1xf32> -> vector<8x1xf32>
    %26 = vector.broadcast %25 : vector<8x1xf32> to vector<8x8xf32>
    %27 = arith.mulf %22, %26 : vector<8x8xf32>
    %28 = arith.truncf %27 : vector<8x8xf32> to vector<8x8xbf16>
    %cst_13 = arith.constant dense<0.000000e+00> : vector<8x8xf32>
    %29 = tpu.matmul %28, %10, %cst_13 {dimension_numbers = #tpu.dot_dimension_numbers<[1], [0], [0], [1], [0, 0, 1, 1], [], []>} : vector<8x8xbf16>, vector<8x8xbf16>, vector<8x8xf32> -> vector<8x8xf32>
    %30 = vector.extract_strided_slice %1 {offsets = [0, 8], sizes = [8, 8], strides = [1, 1]} : vector<8x32xbf16> to vector<8x8xbf16>
    %31 = vector.extract_strided_slice %3 {offsets = [0, 8], sizes = [8, 8], strides = [1, 1]} : vector<8x64xbf16> to vector<8x8xbf16>
    %32 = vector.extract_strided_slice %3 {offsets = [0, 40], sizes = [8, 8], strides = [1, 1]} : vector<8x64xbf16> to vector<8x8xbf16>
    "tpu.trace_start"() <{level = 10 : i32, message = "qd,kd->qk"}> : () -> ()
    %cst_14 = arith.constant dense<0.000000e+00> : vector<8x8xf32>
    %33 = tpu.matmul %30, %31, %cst_14 {dimension_numbers = #tpu.dot_dimension_numbers<[1], [1], [0], [0], [0, 0, 1, 0], [], []>} : vector<8x8xbf16>, vector<8x8xbf16>, vector<8x8xf32> -> vector<8x8xf32>
    "tpu.trace_stop"() : () -> ()
    %cst_15 = arith.constant 0.353553385 : f32
    %34 = vector.broadcast %cst_15 : f32 to vector<8x8xf32>
    %35 = arith.mulf %33, %34 : vector<8x8xf32>
    %cst_16 = arith.constant -1.000000e+10 : f32
    %36 = vector.shape_cast %7 : vector<1x8xi1> to vector<1x8xi1>
    %37 = vector.broadcast %36 : vector<1x8xi1> to vector<8x8xi1>
    %38 = vector.broadcast %cst_16 : f32 to vector<8x8xf32>
    %39 = arith.select %37, %35, %38 : vector<8x8xi1>, vector<8x8xf32>
    %cst_17 = arith.constant dense<0xFF800000> : vector<8xf32>
    %40 = vector.multi_reduction <maximumf>, %39, %cst_17 [1] : vector<8x8xf32> to vector<8xf32>
    %41 = vector.shape_cast %40 : vector<8xf32> to vector<8x1xf32>
    %42 = vector.broadcast %41 : vector<8x1xf32> to vector<8x8xf32>
    %43 = arith.subf %39, %42 : vector<8x8xf32>
    %44 = math.exp %43 : vector<8x8xf32>
    %cst_18 = arith.constant dense<0.000000e+00> : vector<8xf32>
    %45 = vector.multi_reduction <add>, %44, %cst_18 [1] : vector<8x8xf32> to vector<8xf32>
    %46 = vector.shape_cast %45 : vector<8xf32> to vector<8x1xf32>
    %47 = tpu.reciprocal %46 {approx = true} : vector<8x1xf32> -> vector<8x1xf32>
    %48 = vector.broadcast %47 : vector<8x1xf32> to vector<8x8xf32>
    %49 = arith.mulf %44, %48 : vector<8x8xf32>
    %50 = arith.truncf %49 : vector<8x8xf32> to vector<8x8xbf16>
    %cst_19 = arith.constant dense<0.000000e+00> : vector<8x8xf32>
    %51 = tpu.matmul %50, %32, %cst_19 {dimension_numbers = #tpu.dot_dimension_numbers<[1], [0], [0], [1], [0, 0, 1, 1], [], []>} : vector<8x8xbf16>, vector<8x8xbf16>, vector<8x8xf32> -> vector<8x8xf32>
    %52 = vector.extract_strided_slice %1 {offsets = [0, 16], sizes = [8, 8], strides = [1, 1]} : vector<8x32xbf16> to vector<8x8xbf16>
    %53 = vector.extract_strided_slice %3 {offsets = [0, 16], sizes = [8, 8], strides = [1, 1]} : vector<8x64xbf16> to vector<8x8xbf16>
    %54 = vector.extract_strided_slice %3 {offsets = [0, 48], sizes = [8, 8], strides = [1, 1]} : vector<8x64xbf16> to vector<8x8xbf16>
    "tpu.trace_start"() <{level = 10 : i32, message = "qd,kd->qk"}> : () -> ()
    %cst_20 = arith.constant dense<0.000000e+00> : vector<8x8xf32>
    %55 = tpu.matmul %52, %53, %cst_20 {dimension_numbers = #tpu.dot_dimension_numbers<[1], [1], [0], [0], [0, 0, 1, 0], [], []>} : vector<8x8xbf16>, vector<8x8xbf16>, vector<8x8xf32> -> vector<8x8xf32>
    "tpu.trace_stop"() : () -> ()
    %cst_21 = arith.constant 0.353553385 : f32
    %56 = vector.broadcast %cst_21 : f32 to vector<8x8xf32>
    %57 = arith.mulf %55, %56 : vector<8x8xf32>
    %cst_22 = arith.constant -1.000000e+10 : f32
    %58 = vector.shape_cast %7 : vector<1x8xi1> to vector<1x8xi1>
    %59 = vector.broadcast %58 : vector<1x8xi1> to vector<8x8xi1>
    %60 = vector.broadcast %cst_22 : f32 to vector<8x8xf32>
    %61 = arith.select %59, %57, %60 : vector<8x8xi1>, vector<8x8xf32>
    %cst_23 = arith.constant dense<0xFF800000> : vector<8xf32>
    %62 = vector.multi_reduction <maximumf>, %61, %cst_23 [1] : vector<8x8xf32> to vector<8xf32>
    %63 = vector.shape_cast %62 : vector<8xf32> to vector<8x1xf32>
    %64 = vector.broadcast %63 : vector<8x1xf32> to vector<8x8xf32>
    %65 = arith.subf %61, %64 : vector<8x8xf32>
    %66 = math.exp %65 : vector<8x8xf32>
    %cst_24 = arith.constant dense<0.000000e+00> : vector<8xf32>
    %67 = vector.multi_reduction <add>, %66, %cst_24 [1] : vector<8x8xf32> to vector<8xf32>
    %68 = vector.shape_cast %67 : vector<8xf32> to vector<8x1xf32>
    %69 = tpu.reciprocal %68 {approx = true} : vector<8x1xf32> -> vector<8x1xf32>
    %70 = vector.broadcast %69 : vector<8x1xf32> to vector<8x8xf32>
    %71 = arith.mulf %66, %70 : vector<8x8xf32>
    %72 = arith.truncf %71 : vector<8x8xf32> to vector<8x8xbf16>
    %cst_25 = arith.constant dense<0.000000e+00> : vector<8x8xf32>
    %73 = tpu.matmul %72, %54, %cst_25 {dimension_numbers = #tpu.dot_dimension_numbers<[1], [0], [0], [1], [0, 0, 1, 1], [], []>} : vector<8x8xbf16>, vector<8x8xbf16>, vector<8x8xf32> -> vector<8x8xf32>
    %74 = vector.extract_strided_slice %1 {offsets = [0, 24], sizes = [8, 8], strides = [1, 1]} : vector<8x32xbf16> to vector<8x8xbf16>
    %75 = vector.extract_strided_slice %3 {offsets = [0, 24], sizes = [8, 8], strides = [1, 1]} : vector<8x64xbf16> to vector<8x8xbf16>
    %76 = vector.extract_strided_slice %3 {offsets = [0, 56], sizes = [8, 8], strides = [1, 1]} : vector<8x64xbf16> to vector<8x8xbf16>
    "tpu.trace_start"() <{level = 10 : i32, message = "qd,kd->qk"}> : () -> ()
    %cst_26 = arith.constant dense<0.000000e+00> : vector<8x8xf32>
    %77 = tpu.matmul %74, %75, %cst_26 {dimension_numbers = #tpu.dot_dimension_numbers<[1], [1], [0], [0], [0, 0, 1, 0], [], []>} : vector<8x8xbf16>, vector<8x8xbf16>, vector<8x8xf32> -> vector<8x8xf32>
    "tpu.trace_stop"() : () -> ()
    %cst_27 = arith.constant 0.353553385 : f32
    %78 = vector.broadcast %cst_27 : f32 to vector<8x8xf32>
    %79 = arith.mulf %77, %78 : vector<8x8xf32>
    %cst_28 = arith.constant -1.000000e+10 : f32
    %80 = vector.shape_cast %7 : vector<1x8xi1> to vector<1x8xi1>
    %81 = vector.broadcast %80 : vector<1x8xi1> to vector<8x8xi1>
    %82 = vector.broadcast %cst_28 : f32 to vector<8x8xf32>
    %83 = arith.select %81, %79, %82 : vector<8x8xi1>, vector<8x8xf32>
    %cst_29 = arith.constant dense<0xFF800000> : vector<8xf32>
    %84 = vector.multi_reduction <maximumf>, %83, %cst_29 [1] : vector<8x8xf32> to vector<8xf32>
    %85 = vector.shape_cast %84 : vector<8xf32> to vector<8x1xf32>
    %86 = vector.broadcast %85 : vector<8x1xf32> to vector<8x8xf32>
    %87 = arith.subf %83, %86 : vector<8x8xf32>
    %88 = math.exp %87 : vector<8x8xf32>
    %cst_30 = arith.constant dense<0.000000e+00> : vector<8xf32>
    %89 = vector.multi_reduction <add>, %88, %cst_30 [1] : vector<8x8xf32> to vector<8xf32>
    %90 = vector.shape_cast %89 : vector<8xf32> to vector<8x1xf32>
    %91 = tpu.reciprocal %90 {approx = true} : vector<8x1xf32> -> vector<8x1xf32>
    %92 = vector.broadcast %91 : vector<8x1xf32> to vector<8x8xf32>
    %93 = arith.mulf %88, %92 : vector<8x8xf32>
    %94 = arith.truncf %93 : vector<8x8xf32> to vector<8x8xbf16>
    %cst_31 = arith.constant dense<0.000000e+00> : vector<8x8xf32>
    %95 = tpu.matmul %94, %76, %cst_31 {dimension_numbers = #tpu.dot_dimension_numbers<[1], [0], [0], [1], [0, 0, 1, 1], [], []>} : vector<8x8xbf16>, vector<8x8xbf16>, vector<8x8xf32> -> vector<8x8xf32>
    %96 = tpu.concatenate %29, %51, %73, %95 in 1 : vector<8x8xf32>, vector<8x8xf32>, vector<8x8xf32>, vector<8x8xf32> -> vector<8x32xf32>
    %97 = arith.truncf %96 : vector<8x32xf32> to vector<8x32xbf16>
    %c0_32 = arith.constant 0 : index
    %c0_33 = arith.constant 0 : index
    %c0_34 = arith.constant 0 : index
    %98 = vector.load %arg4[%c0_32, %c0_33, %c0_34] : memref<1x8x32xbf16, #tpu.memory_space<vmem>>, vector<1x8x32xbf16>
    %99 = vector.shape_cast %98 : vector<1x8x32xbf16> to vector<8x32xbf16>
    %100 = vector.shape_cast %97 : vector<8x32xbf16> to vector<1x8x32xbf16>
    tpu.vector_store %arg4[%c0_32, %c0_33, %c0_34], %100 {strides = array<i32>} : memref<1x8x32xbf16, #tpu.memory_space<vmem>>, vector<1x8x32xbf16>,
    return
  }
  func.func @transform_0(%arg0: i32) -> (i32, i32, i32) {
    %c0_i32 = arith.constant 0 : i32
    %c0_i32_0 = arith.constant 0 : i32
    %c0_i32_1 = arith.constant 0 : i32
    return %arg0, %c0_i32, %c0_i32_0 : i32, i32, i32
  }
  func.func @transform_1(%arg0: i32) -> (i32, i32, i32) {
    %c0_i32 = arith.constant 0 : i32
    %c0_i32_0 = arith.constant 0 : i32
    %c0_i32_1 = arith.constant 0 : i32
    return %arg0, %c0_i32, %c0_i32_0 : i32, i32, i32
  }
  func.func @transform_2(%arg0: i32) -> (i32, i32, i32) {
    %c0_i32 = arith.constant 0 : i32
    %c0_i32_0 = arith.constant 0 : i32
    %c0_i32_1 = arith.constant 0 : i32
    return %arg0, %c0_i32, %c0_i32_0 : i32, i32, i32
  }
  func.func @transform_3(%arg0: i32) -> (i32, i32, i32) {
    %c0_i32 = arith.constant 0 : i32
    %c0_i32_0 = arith.constant 0 : i32
    %c0_i32_1 = arith.constant 0 : i32
    return %arg0, %c0_i32, %c0_i32_0 : i32, i32, i32
  }
}

module attributes {stable_mosaic.version = 11 : i64} {
  func.func @_cross_attn_probs_kernel(%arg0: i32, %arg1: memref<1x8x32xbf16, #tpu.memory_space<vmem>>, %arg2: memref<1x8x64xbf16, #tpu.memory_space<vmem>>, %arg3: memref<1x1x8xf32, #tpu.memory_space<vmem>>, %arg4: memref<1x8x32xbf16, #tpu.memory_space<vmem>>, %arg5: memref<1x4x8x8xf32, #tpu.memory_space<vmem>>) attributes {dimension_semantics = [#tpu.dimension_semantics<parallel>], iteration_bounds = array<i64: 2>, scalar_prefetch = 0 : i64, scratch_operands = 0 : i64, tpu.core_type = #tpu.core_type<tc>, window_params = [{transform_indices = @transform_0, window_bounds = array<i64: 1, 8, 32>}, {transform_indices = @transform_1, window_bounds = array<i64: 1, 8, 64>}, {transform_indices = @transform_2, window_bounds = array<i64: 1, 1, 8>}, {transform_indices = @transform_3, window_bounds = array<i64: 1, 8, 32>}, {transform_indices = @transform_4, window_bounds = array<i64: 1, 4, 8, 8>}]} {
    %c0 = arith.constant 0 : index
    %c0_0 = arith.constant 0 : index
    %c0_1 = arith.constant 0 : index
    %0 = vector.load %arg1[%c0, %c0_0, %c0_1] : memref<1x8x32xbf16, #tpu.memory_space<vmem>>, vector<1x8x32xbf16>
    %1 = vector.shape_cast %0 : vector<1x8x32xbf16> to vector<8x32xbf16>
    %c0_2 = arith.constant 0 : index
    %c0_3 = arith.constant 0 : index
    %c0_4 = arith.constant 0 : index
    %2 = vector.load %arg2[%c0_2, %c0_3, %c0_4] : memref<1x8x64xbf16, #tpu.memory_space<vmem>>, vector<1x8x64xbf16>
    %3 = vector.shape_cast %2 : vector<1x8x64xbf16> to vector<8x64xbf16>
    %c0_5 = arith.constant 0 : index
    %c0_6 = arith.constant 0 : index
    %c0_7 = arith.constant 0 : index
    %4 = vector.load %arg3[%c0_5, %c0_6, %c0_7] : memref<1x1x8xf32, #tpu.memory_space<vmem>>, vector<1x1x8xf32>
    %5 = vector.shape_cast %4 : vector<1x1x8xf32> to vector<1x8xf32>
    %cst = arith.constant 0.000000e+00 : f32
    %6 = vector.broadcast %cst : f32 to vector<1x8xf32>
    %7 = arith.cmpf ogt, %5, %6 : vector<1x8xf32>
    %8 = vector.extract_strided_slice %1 {offsets = [0, 0], sizes = [8, 8], strides = [1, 1]} : vector<8x32xbf16> to vector<8x8xbf16>
    %9 = vector.extract_strided_slice %3 {offsets = [0, 0], sizes = [8, 8], strides = [1, 1]} : vector<8x64xbf16> to vector<8x8xbf16>
    %10 = vector.extract_strided_slice %3 {offsets = [0, 32], sizes = [8, 8], strides = [1, 1]} : vector<8x64xbf16> to vector<8x8xbf16>
    "tpu.trace_start"() <{level = 10 : i32, message = "qd,kd->qk"}> : () -> ()
    %cst_8 = arith.constant dense<0.000000e+00> : vector<8x8xf32>
    %11 = tpu.matmul %8, %9, %cst_8 {dimension_numbers = #tpu.dot_dimension_numbers<[1], [1], [0], [0], [0, 0, 1, 0], [], []>} : vector<8x8xbf16>, vector<8x8xbf16>, vector<8x8xf32> -> vector<8x8xf32>
    "tpu.trace_stop"() : () -> ()
    %cst_9 = arith.constant 0.353553385 : f32
    %12 = vector.broadcast %cst_9 : f32 to vector<8x8xf32>
    %13 = arith.mulf %11, %12 : vector<8x8xf32>
    %cst_10 = arith.constant -1.000000e+10 : f32
    %14 = vector.shape_cast %7 : vector<1x8xi1> to vector<1x8xi1>
    %15 = vector.broadcast %14 : vector<1x8xi1> to vector<8x8xi1>
    %16 = vector.broadcast %cst_10 : f32 to vector<8x8xf32>
    %17 = arith.select %15, %13, %16 : vector<8x8xi1>, vector<8x8xf32>
    %cst_11 = arith.constant dense<0xFF800000> : vector<8xf32>
    %18 = vector.multi_reduction <maximumf>, %17, %cst_11 [1] : vector<8x8xf32> to vector<8xf32>
    %19 = vector.shape_cast %18 : vector<8xf32> to vector<8x1xf32>
    %20 = vector.broadcast %19 : vector<8x1xf32> to vector<8x8xf32>
    %21 = arith.subf %17, %20 : vector<8x8xf32>
    %22 = math.exp %21 : vector<8x8xf32>
    %cst_12 = arith.constant dense<0.000000e+00> : vector<8xf32>
    %23 = vector.multi_reduction <add>, %22, %cst_12 [1] : vector<8x8xf32> to vector<8xf32>
    %24 = vector.shape_cast %23 : vector<8xf32> to vector<8x1xf32>
    %25 = tpu.reciprocal %24 {approx = true} : vector<8x1xf32> -> vector<8x1xf32>
    %26 = vector.broadcast %25 : vector<8x1xf32> to vector<8x8xf32>
    %27 = arith.mulf %22, %26 : vector<8x8xf32>
    %c0_13 = arith.constant 0 : index
    %c0_14 = arith.constant 0 : index
    %c0_15 = arith.constant 0 : index
    %c0_16 = arith.constant 0 : index
    %28 = vector.load %arg5[%c0_13, %c0_14, %c0_15, %c0_16] : memref<1x4x8x8xf32, #tpu.memory_space<vmem>>, vector<1x1x8x8xf32>
    %29 = vector.shape_cast %28 : vector<1x1x8x8xf32> to vector<8x8xf32>
    %30 = vector.shape_cast %27 : vector<8x8xf32> to vector<1x1x8x8xf32>
    tpu.vector_store %arg5[%c0_13, %c0_14, %c0_15, %c0_16], %30 {strides = array<i32>} : memref<1x4x8x8xf32, #tpu.memory_space<vmem>>, vector<1x1x8x8xf32>,
    %31 = arith.truncf %27 : vector<8x8xf32> to vector<8x8xbf16>
    %cst_17 = arith.constant dense<0.000000e+00> : vector<8x8xf32>
    %32 = tpu.matmul %31, %10, %cst_17 {dimension_numbers = #tpu.dot_dimension_numbers<[1], [0], [0], [1], [0, 0, 1, 1], [], []>} : vector<8x8xbf16>, vector<8x8xbf16>, vector<8x8xf32> -> vector<8x8xf32>
    %33 = vector.extract_strided_slice %1 {offsets = [0, 8], sizes = [8, 8], strides = [1, 1]} : vector<8x32xbf16> to vector<8x8xbf16>
    %34 = vector.extract_strided_slice %3 {offsets = [0, 8], sizes = [8, 8], strides = [1, 1]} : vector<8x64xbf16> to vector<8x8xbf16>
    %35 = vector.extract_strided_slice %3 {offsets = [0, 40], sizes = [8, 8], strides = [1, 1]} : vector<8x64xbf16> to vector<8x8xbf16>
    "tpu.trace_start"() <{level = 10 : i32, message = "qd,kd->qk"}> : () -> ()
    %cst_18 = arith.constant dense<0.000000e+00> : vector<8x8xf32>
    %36 = tpu.matmul %33, %34, %cst_18 {dimension_numbers = #tpu.dot_dimension_numbers<[1], [1], [0], [0], [0, 0, 1, 0], [], []>} : vector<8x8xbf16>, vector<8x8xbf16>, vector<8x8xf32> -> vector<8x8xf32>
    "tpu.trace_stop"() : () -> ()
    %cst_19 = arith.constant 0.353553385 : f32
    %37 = vector.broadcast %cst_19 : f32 to vector<8x8xf32>
    %38 = arith.mulf %36, %37 : vector<8x8xf32>
    %cst_20 = arith.constant -1.000000e+10 : f32
    %39 = vector.shape_cast %7 : vector<1x8xi1> to vector<1x8xi1>
    %40 = vector.broadcast %39 : vector<1x8xi1> to vector<8x8xi1>
    %41 = vector.broadcast %cst_20 : f32 to vector<8x8xf32>
    %42 = arith.select %40, %38, %41 : vector<8x8xi1>, vector<8x8xf32>
    %cst_21 = arith.constant dense<0xFF800000> : vector<8xf32>
    %43 = vector.multi_reduction <maximumf>, %42, %cst_21 [1] : vector<8x8xf32> to vector<8xf32>
    %44 = vector.shape_cast %43 : vector<8xf32> to vector<8x1xf32>
    %45 = vector.broadcast %44 : vector<8x1xf32> to vector<8x8xf32>
    %46 = arith.subf %42, %45 : vector<8x8xf32>
    %47 = math.exp %46 : vector<8x8xf32>
    %cst_22 = arith.constant dense<0.000000e+00> : vector<8xf32>
    %48 = vector.multi_reduction <add>, %47, %cst_22 [1] : vector<8x8xf32> to vector<8xf32>
    %49 = vector.shape_cast %48 : vector<8xf32> to vector<8x1xf32>
    %50 = tpu.reciprocal %49 {approx = true} : vector<8x1xf32> -> vector<8x1xf32>
    %51 = vector.broadcast %50 : vector<8x1xf32> to vector<8x8xf32>
    %52 = arith.mulf %47, %51 : vector<8x8xf32>
    %c0_23 = arith.constant 0 : index
    %c1 = arith.constant 1 : index
    %c0_24 = arith.constant 0 : index
    %c0_25 = arith.constant 0 : index
    %53 = vector.load %arg5[%c0_23, %c1, %c0_24, %c0_25] : memref<1x4x8x8xf32, #tpu.memory_space<vmem>>, vector<1x1x8x8xf32>
    %54 = vector.shape_cast %53 : vector<1x1x8x8xf32> to vector<8x8xf32>
    %55 = vector.shape_cast %52 : vector<8x8xf32> to vector<1x1x8x8xf32>
    tpu.vector_store %arg5[%c0_23, %c1, %c0_24, %c0_25], %55 {strides = array<i32>} : memref<1x4x8x8xf32, #tpu.memory_space<vmem>>, vector<1x1x8x8xf32>,
    %56 = arith.truncf %52 : vector<8x8xf32> to vector<8x8xbf16>
    %cst_26 = arith.constant dense<0.000000e+00> : vector<8x8xf32>
    %57 = tpu.matmul %56, %35, %cst_26 {dimension_numbers = #tpu.dot_dimension_numbers<[1], [0], [0], [1], [0, 0, 1, 1], [], []>} : vector<8x8xbf16>, vector<8x8xbf16>, vector<8x8xf32> -> vector<8x8xf32>
    %58 = vector.extract_strided_slice %1 {offsets = [0, 16], sizes = [8, 8], strides = [1, 1]} : vector<8x32xbf16> to vector<8x8xbf16>
    %59 = vector.extract_strided_slice %3 {offsets = [0, 16], sizes = [8, 8], strides = [1, 1]} : vector<8x64xbf16> to vector<8x8xbf16>
    %60 = vector.extract_strided_slice %3 {offsets = [0, 48], sizes = [8, 8], strides = [1, 1]} : vector<8x64xbf16> to vector<8x8xbf16>
    "tpu.trace_start"() <{level = 10 : i32, message = "qd,kd->qk"}> : () -> ()
    %cst_27 = arith.constant dense<0.000000e+00> : vector<8x8xf32>
    %61 = tpu.matmul %58, %59, %cst_27 {dimension_numbers = #tpu.dot_dimension_numbers<[1], [1], [0], [0], [0, 0, 1, 0], [], []>} : vector<8x8xbf16>, vector<8x8xbf16>, vector<8x8xf32> -> vector<8x8xf32>
    "tpu.trace_stop"() : () -> ()
    %cst_28 = arith.constant 0.353553385 : f32
    %62 = vector.broadcast %cst_28 : f32 to vector<8x8xf32>
    %63 = arith.mulf %61, %62 : vector<8x8xf32>
    %cst_29 = arith.constant -1.000000e+10 : f32
    %64 = vector.shape_cast %7 : vector<1x8xi1> to vector<1x8xi1>
    %65 = vector.broadcast %64 : vector<1x8xi1> to vector<8x8xi1>
    %66 = vector.broadcast %cst_29 : f32 to vector<8x8xf32>
    %67 = arith.select %65, %63, %66 : vector<8x8xi1>, vector<8x8xf32>
    %cst_30 = arith.constant dense<0xFF800000> : vector<8xf32>
    %68 = vector.multi_reduction <maximumf>, %67, %cst_30 [1] : vector<8x8xf32> to vector<8xf32>
    %69 = vector.shape_cast %68 : vector<8xf32> to vector<8x1xf32>
    %70 = vector.broadcast %69 : vector<8x1xf32> to vector<8x8xf32>
    %71 = arith.subf %67, %70 : vector<8x8xf32>
    %72 = math.exp %71 : vector<8x8xf32>
    %cst_31 = arith.constant dense<0.000000e+00> : vector<8xf32>
    %73 = vector.multi_reduction <add>, %72, %cst_31 [1] : vector<8x8xf32> to vector<8xf32>
    %74 = vector.shape_cast %73 : vector<8xf32> to vector<8x1xf32>
    %75 = tpu.reciprocal %74 {approx = true} : vector<8x1xf32> -> vector<8x1xf32>
    %76 = vector.broadcast %75 : vector<8x1xf32> to vector<8x8xf32>
    %77 = arith.mulf %72, %76 : vector<8x8xf32>
    %c0_32 = arith.constant 0 : index
    %c2 = arith.constant 2 : index
    %c0_33 = arith.constant 0 : index
    %c0_34 = arith.constant 0 : index
    %78 = vector.load %arg5[%c0_32, %c2, %c0_33, %c0_34] : memref<1x4x8x8xf32, #tpu.memory_space<vmem>>, vector<1x1x8x8xf32>
    %79 = vector.shape_cast %78 : vector<1x1x8x8xf32> to vector<8x8xf32>
    %80 = vector.shape_cast %77 : vector<8x8xf32> to vector<1x1x8x8xf32>
    tpu.vector_store %arg5[%c0_32, %c2, %c0_33, %c0_34], %80 {strides = array<i32>} : memref<1x4x8x8xf32, #tpu.memory_space<vmem>>, vector<1x1x8x8xf32>,
    %81 = arith.truncf %77 : vector<8x8xf32> to vector<8x8xbf16>
    %cst_35 = arith.constant dense<0.000000e+00> : vector<8x8xf32>
    %82 = tpu.matmul %81, %60, %cst_35 {dimension_numbers = #tpu.dot_dimension_numbers<[1], [0], [0], [1], [0, 0, 1, 1], [], []>} : vector<8x8xbf16>, vector<8x8xbf16>, vector<8x8xf32> -> vector<8x8xf32>
    %83 = vector.extract_strided_slice %1 {offsets = [0, 24], sizes = [8, 8], strides = [1, 1]} : vector<8x32xbf16> to vector<8x8xbf16>
    %84 = vector.extract_strided_slice %3 {offsets = [0, 24], sizes = [8, 8], strides = [1, 1]} : vector<8x64xbf16> to vector<8x8xbf16>
    %85 = vector.extract_strided_slice %3 {offsets = [0, 56], sizes = [8, 8], strides = [1, 1]} : vector<8x64xbf16> to vector<8x8xbf16>
    "tpu.trace_start"() <{level = 10 : i32, message = "qd,kd->qk"}> : () -> ()
    %cst_36 = arith.constant dense<0.000000e+00> : vector<8x8xf32>
    %86 = tpu.matmul %83, %84, %cst_36 {dimension_numbers = #tpu.dot_dimension_numbers<[1], [1], [0], [0], [0, 0, 1, 0], [], []>} : vector<8x8xbf16>, vector<8x8xbf16>, vector<8x8xf32> -> vector<8x8xf32>
    "tpu.trace_stop"() : () -> ()
    %cst_37 = arith.constant 0.353553385 : f32
    %87 = vector.broadcast %cst_37 : f32 to vector<8x8xf32>
    %88 = arith.mulf %86, %87 : vector<8x8xf32>
    %cst_38 = arith.constant -1.000000e+10 : f32
    %89 = vector.shape_cast %7 : vector<1x8xi1> to vector<1x8xi1>
    %90 = vector.broadcast %89 : vector<1x8xi1> to vector<8x8xi1>
    %91 = vector.broadcast %cst_38 : f32 to vector<8x8xf32>
    %92 = arith.select %90, %88, %91 : vector<8x8xi1>, vector<8x8xf32>
    %cst_39 = arith.constant dense<0xFF800000> : vector<8xf32>
    %93 = vector.multi_reduction <maximumf>, %92, %cst_39 [1] : vector<8x8xf32> to vector<8xf32>
    %94 = vector.shape_cast %93 : vector<8xf32> to vector<8x1xf32>
    %95 = vector.broadcast %94 : vector<8x1xf32> to vector<8x8xf32>
    %96 = arith.subf %92, %95 : vector<8x8xf32>
    %97 = math.exp %96 : vector<8x8xf32>
    %cst_40 = arith.constant dense<0.000000e+00> : vector<8xf32>
    %98 = vector.multi_reduction <add>, %97, %cst_40 [1] : vector<8x8xf32> to vector<8xf32>
    %99 = vector.shape_cast %98 : vector<8xf32> to vector<8x1xf32>
    %100 = tpu.reciprocal %99 {approx = true} : vector<8x1xf32> -> vector<8x1xf32>
    %101 = vector.broadcast %100 : vector<8x1xf32> to vector<8x8xf32>
    %102 = arith.mulf %97, %101 : vector<8x8xf32>
    %c0_41 = arith.constant 0 : index
    %c3 = arith.constant 3 : index
    %c0_42 = arith.constant 0 : index
    %c0_43 = arith.constant 0 : index
    %103 = vector.load %arg5[%c0_41, %c3, %c0_42, %c0_43] : memref<1x4x8x8xf32, #tpu.memory_space<vmem>>, vector<1x1x8x8xf32>
    %104 = vector.shape_cast %103 : vector<1x1x8x8xf32> to vector<8x8xf32>
    %105 = vector.shape_cast %102 : vector<8x8xf32> to vector<1x1x8x8xf32>
    tpu.vector_store %arg5[%c0_41, %c3, %c0_42, %c0_43], %105 {strides = array<i32>} : memref<1x4x8x8xf32, #tpu.memory_space<vmem>>, vector<1x1x8x8xf32>,
    %106 = arith.truncf %102 : vector<8x8xf32> to vector<8x8xbf16>
    %cst_44 = arith.constant dense<0.000000e+00> : vector<8x8xf32>
    %107 = tpu.matmul %106, %85, %cst_44 {dimension_numbers = #tpu.dot_dimension_numbers<[1], [0], [0], [1], [0, 0, 1, 1], [], []>} : vector<8x8xbf16>, vector<8x8xbf16>, vector<8x8xf32> -> vector<8x8xf32>
    %108 = tpu.concatenate %32, %57, %82, %107 in 1 : vector<8x8xf32>, vector<8x8xf32>, vector<8x8xf32>, vector<8x8xf32> -> vector<8x32xf32>
    %109 = arith.truncf %108 : vector<8x32xf32> to vector<8x32xbf16>
    %c0_45 = arith.constant 0 : index
    %c0_46 = arith.constant 0 : index
    %c0_47 = arith.constant 0 : index
    %110 = vector.load %arg4[%c0_45, %c0_46, %c0_47] : memref<1x8x32xbf16, #tpu.memory_space<vmem>>, vector<1x8x32xbf16>
    %111 = vector.shape_cast %110 : vector<1x8x32xbf16> to vector<8x32xbf16>
    %112 = vector.shape_cast %109 : vector<8x32xbf16> to vector<1x8x32xbf16>
    tpu.vector_store %arg4[%c0_45, %c0_46, %c0_47], %112 {strides = array<i32>} : memref<1x8x32xbf16, #tpu.memory_space<vmem>>, vector<1x8x32xbf16>,
    return
  }
  func.func @transform_0(%arg0: i32) -> (i32, i32, i32) {
    %c0_i32 = arith.constant 0 : i32
    %c0_i32_0 = arith.constant 0 : i32
    %c0_i32_1 = arith.constant 0 : i32
    return %arg0, %c0_i32, %c0_i32_0 : i32, i32, i32
  }
  func.func @transform_1(%arg0: i32) -> (i32, i32, i32) {
    %c0_i32 = arith.constant 0 : i32
    %c0_i32_0 = arith.constant 0 : i32
    %c0_i32_1 = arith.constant 0 : i32
    return %arg0, %c0_i32, %c0_i32_0 : i32, i32, i32
  }
  func.func @transform_2(%arg0: i32) -> (i32, i32, i32) {
    %c0_i32 = arith.constant 0 : i32
    %c0_i32_0 = arith.constant 0 : i32
    %c0_i32_1 = arith.constant 0 : i32
    return %arg0, %c0_i32, %c0_i32_0 : i32, i32, i32
  }
  func.func @transform_3(%arg0: i32) -> (i32, i32, i32) {
    %c0_i32 = arith.constant 0 : i32
    %c0_i32_0 = arith.constant 0 : i32
    %c0_i32_1 = arith.constant 0 : i32
    return %arg0, %c0_i32, %c0_i32_0 : i32, i32, i32
  }
  func.func @transform_4(%arg0: i32) -> (i32, i32, i32, i32) {
    %c0_i32 = arith.constant 0 : i32
    %c0_i32_0 = arith.constant 0 : i32
    %c0_i32_1 = arith.constant 0 : i32
    %c0_i32_2 = arith.constant 0 : i32
    return %arg0, %c0_i32, %c0_i32_0, %c0_i32_1 : i32, i32, i32, i32
  }
}

module attributes {stable_mosaic.version = 11 : i64} {
  func.func @_linear_kernel(%arg0: i32, %arg1: i32, %arg2: memref<16x32xf32, #tpu.memory_space<vmem>>, %arg3: memref<32x16xbf16, #tpu.memory_space<vmem>>, %arg4: memref<1x16xf32, #tpu.memory_space<vmem>>, %arg5: memref<16x16xf32, #tpu.memory_space<vmem>>) attributes {dimension_semantics = [#tpu.dimension_semantics<parallel>, #tpu.dimension_semantics<parallel>], iteration_bounds = array<i64: 1, 1>, scalar_prefetch = 0 : i64, scratch_operands = 0 : i64, tpu.core_type = #tpu.core_type<tc>, window_params = [{transform_indices = @transform_0, window_bounds = array<i64: 16, 32>}, {transform_indices = @transform_1, window_bounds = array<i64: 32, 16>}, {transform_indices = @transform_2, window_bounds = array<i64: 1, 16>}, {transform_indices = @transform_3, window_bounds = array<i64: 16, 16>}]} {
    %c0 = arith.constant 0 : index
    %c0_0 = arith.constant 0 : index
    %0 = vector.load %arg2[%c0, %c0_0] : memref<16x32xf32, #tpu.memory_space<vmem>>, vector<16x32xf32>
    %1 = arith.truncf %0 : vector<16x32xf32> to vector<16x32xbf16>
    %c0_1 = arith.constant 0 : index
    %c0_2 = arith.constant 0 : index
    %2 = vector.load %arg3[%c0_1, %c0_2] : memref<32x16xbf16, #tpu.memory_space<vmem>>, vector<32x16xbf16>
    %cst = arith.constant dense<0.000000e+00> : vector<16x16xf32>
    %3 = tpu.matmul %1, %2, %cst {dimension_numbers = #tpu.dot_dimension_numbers<[1], [0], [0], [1], [0, 0, 1, 1], [], []>} : vector<16x32xbf16>, vector<32x16xbf16>, vector<16x16xf32> -> vector<16x16xf32>
    %c0_3 = arith.constant 0 : index
    %c0_4 = arith.constant 0 : index
    %4 = vector.load %arg4[%c0_3, %c0_4] : memref<1x16xf32, #tpu.memory_space<vmem>>, vector<1x16xf32>
    %5 = vector.broadcast %4 : vector<1x16xf32> to vector<16x16xf32>
    %6 = arith.addf %3, %5 : vector<16x16xf32>
    %c0_5 = arith.constant 0 : index
    %c0_6 = arith.constant 0 : index
    %7 = vector.load %arg5[%c0_5, %c0_6] : memref<16x16xf32, #tpu.memory_space<vmem>>, vector<16x16xf32>
    tpu.vector_store %arg5[%c0_5, %c0_6], %6 {strides = array<i32>} : memref<16x16xf32, #tpu.memory_space<vmem>>, vector<16x16xf32>,
    return
  }
  func.func @transform_0(%arg0: i32, %arg1: i32) -> (i32, i32) {
    %c0_i32 = arith.constant 0 : i32
    %c0_i32_0 = arith.constant 0 : i32
    return %arg0, %c0_i32 : i32, i32
  }
  func.func @transform_1(%arg0: i32, %arg1: i32) -> (i32, i32) {
    %c0_i32 = arith.constant 0 : i32
    %c0_i32_0 = arith.constant 0 : i32
    return %c0_i32, %arg1 : i32, i32
  }
  func.func @transform_2(%arg0: i32, %arg1: i32) -> (i32, i32) {
    %c0_i32 = arith.constant 0 : i32
    %c0_i32_0 = arith.constant 0 : i32
    return %c0_i32, %arg1 : i32, i32
  }
  func.func @transform_3(%arg0: i32, %arg1: i32) -> (i32, i32) {
    %c0_i32 = arith.constant 0 : i32
    return %arg0, %arg1 : i32, i32
  }
}

</mosaic_0001>

<llo_original>
// kernel: seq2seq_forward.25
$region0: #{seq2seq_forward.25}
  #allocation0 [shape = 'u32[]', space=smem, size = 0x4, offset = 0x4, fixed_abs, tag = 'smem constant byte address 0x4 - core index']
  #allocation1 [shape = 'u32[144,128]{1,0:T(1,128)}', space=vmem, size = 0x12000, scoped, tag = 'internal scratch']
  %s0 = inlined_call_operand.vmem [shape: f32[16,32], index: 0, kind: input, shape index: {}]
  %s1 = inlined_call_operand.vmem [shape: bf16[32,96], index: 1, kind: input, shape index: {}]
  %s2 = inlined_call_operand.vmem [shape: f32[1,96], index: 2, kind: input, shape index: {}]
  %s3 = inlined_call_operand.vmem [shape: bf16[16,96], index: 3, kind: output, shape index: {}]
  %s4 = sld [smem:[#allocation0]]
  $region22: #{seq2seq_forward.25} parent=0
    _
  %s6 = ssub.s32 1, %s4
  %s7 = scalar_select 0, %s6, %s4
  // Predicated region
  $region2: #{seq2seq_forward.25} parent=0 // pred_check
    _
  $region3: #{seq2seq_forward.25} parent=0 // pred_check_branch
    %9 = sbr.rel (0) target = $region5
  $region4: #{seq2seq_forward.25} parent=0 // pred_region
    _
  $region5: #{seq2seq_forward.25} parent=0 // pred_fallthru
    _
  // Predicated region
  $region6: #{seq2seq_forward.25} parent=0 // pred_check
    _
  $region7: #{seq2seq_forward.25} parent=0 // pred_check_branch
    %11 = sbr.rel (0) target = $region9
  $region8: #{seq2seq_forward.25} parent=0 // pred_region
    _
  $region9: #{seq2seq_forward.25} parent=0 // pred_fallthru
    _
  // Predicated region
  $region10: #{seq2seq_forward.25} parent=0 // pred_check
    _
  $region11: #{seq2seq_forward.25} parent=0 // pred_check_branch
    %13 = sbr.rel (0) target = $region13
  $region12: #{seq2seq_forward.25} parent=0 // pred_region
    _
  $region13: #{seq2seq_forward.25} parent=0 // pred_fallthru
    _
  %v15 = vld [vmem:[%s0] sm:$0xff]
  %v16 = vld [vmem:[%s0 + $0x8] sm:$0xff]
  %v17 = vpack.c.bf16 %v16, %v15
  %v18 = vld [vmem:[%s1] sm:$0xf]
  %v19 = vld [vmem:[%s1 + $0x4] sm:$0xf]
  %v20 = vld [vmem:[%s1 + $0x8] sm:$0xf]
  %v21 = vld [vmem:[%s1 + $0xc] sm:$0xf]
  %v22 = vld [vmem:[%s2] sm:$0x1]
  %v24 = vlaneseq
  %v25 = vshrl.u32 %v24, 7
  %v26 = vsub.s32 0, %v25
  %v27 = vrot.slane %v22, %v26
  %v33 = vunpack.c.l.b16 %v18
  %v34 = vunpack.c.l.b16 %v19
  %v35 = vunpack.c.l.b16 %v20
  %v36 = vunpack.c.l.b16 %v21
  %v37 = vpack.c.b16 %v34, %v33
  %v38 = vpack.c.b16 %v36, %v35
  %vm41 = vcmask 261120
  %v43 = vsel %vm41, %v17, 0
  %45 = vmatprep.subr.bf16.mxu0 0
  %46 = vmatpush1.bf16.msra.mxu0 0
  %47 = vmatprep.subr.bf16.mxu0 0
  %48 = vmatpush1.bf16.msra.mxu0 0
  %49 = vmatprep.subr.bf16.mxu0 0
  %50 = vmatpush1.bf16.msra.mxu0 0
  %51 = vmatprep.subr.bf16.mxu0 0
  %52 = vmatpush1.bf16.msra.mxu0 0
  %53 = vmatprep.subr.bf16.mxu0 0
  %54 = vmatpush1.bf16.msra.mxu0 0
  %55 = vmatprep.subr.bf16.mxu0 0
  %56 = vmatpush1.bf16.msra.mxu0 0
  %57 = vmatprep.subr.bf16.mxu0 0
  %58 = vmatpush1.bf16.msra.mxu0 %v38
  %59 = vmatprep.subr.bf16.mxu0 0
  %60 = vmatpush1.bf16.msra.mxu0 %v37
  %61 = vmatprep.subr.bf16.mxu0 0
  %62 = vmatpush2.bf16.msra.mxu0 0
  %63 = vmatprep.subr.bf16.mxu0 0
  %64 = vmatpush2.bf16.msra.mxu0 0
  %65 = vmatprep.subr.bf16.mxu0 0
  %66 = vmatpush2.bf16.msra.mxu0 0
  %67 = vmatprep.subr.bf16.mxu0 0
  %68 = vmatpush2.bf16.msra.mxu0 0
  %69 = vmatprep.subr.bf16.mxu0 0
  %70 = vmatpush2.bf16.msra.mxu0 0
  %71 = vmatprep.subr.bf16.mxu0 0
  %72 = vmatpush2.bf16.msra.mxu0 0
  %73 = vmatprep.subr.bf16.mxu0 0
  %74 = vmatpush2.bf16.msra.mxu0 0
  %75 = vmatprep.subr.bf16.mxu0 0
  %76 = vmatpush2.bf16.msra.mxu0 0
  %77 = vmatprep.mubr.bf16.mxu0 0
  %78 = vmatmul.mubr.bf16.gmra.mxu0 %v43
  %v79 = vpop.f32.mrf.mxu0
  %v80 = vadd.f32 %v27, %v79
  %v81 = vpop.f32.mrf.mxu0
  %v82 = vpop.f32.mrf.mxu0
  %v83 = vadd.f32 %v27, %v82
  %v84 = vpop.f32.mrf.mxu0
  %85 = vdwg.mxu0
  %v86 = vpack.c.bf16 %v83, %v80
  %v88 = vunpack.c.l.b16 %v86
  %v89 = vunpack.c.h.b16 %v86
  %v90 = vpack.c.b16 %v88, %v88
  %v91 = vpack.c.b16 %v89, %v89
  %vm94 = vcmask 781312
  %95 = vst.msk [vmem:[%s3] sm:$0xf] %vm94, %v90
  %96 = vst.msk [vmem:[%s3 + $0x4] sm:$0xf] %vm94, %v91
  // Predicated region
  $region14: #{seq2seq_forward.25} parent=0 // pred_check
    _
  $region15: #{seq2seq_forward.25} parent=0 // pred_check_branch
    %98 = sbr.rel (0) target = $region17
  $region16: #{seq2seq_forward.25} parent=0 // pred_region
    _
  $region17: #{seq2seq_forward.25} parent=0 // pred_fallthru
    _
  // Predicated region
  $region18: #{seq2seq_forward.25} parent=0 // pred_check
    _
  $region19: #{seq2seq_forward.25} parent=0 // pred_check_branch
    %100 = sbr.rel (0) target = $region21
  $region20: #{seq2seq_forward.25} parent=0 // pred_region
    _
  $region21: #{seq2seq_forward.25} parent=0 // pred_fallthru
    _

// kernel: seq2seq_forward.27
$region0: #{seq2seq_forward.27}
  #allocation0 [shape = 'u32[]', space=smem, size = 0x4, offset = 0x4, fixed_abs, tag = 'smem constant byte address 0x4 - core index']
  #allocation1 [shape = 'u32[144,128]{1,0:T(1,128)}', space=vmem, size = 0x12000, scoped, tag = 'internal scratch']
  %s0 = inlined_call_operand.vmem [shape: bf16[16,32], index: 0, kind: input, shape index: {}]
  %s1 = inlined_call_operand.vmem [shape: bf16[32,32], index: 1, kind: input, shape index: {}]
  %s2 = inlined_call_operand.vmem [shape: f32[1,32], index: 2, kind: input, shape index: {}]
  %s3 = inlined_call_operand.vmem [shape: f32[16,32], index: 3, kind: input, shape index: {}]
  %s4 = inlined_call_operand.vmem [shape: f32[1,32], index: 4, kind: input, shape index: {}]
  %s5 = inlined_call_operand.vmem [shape: f32[1,32], index: 5, kind: input, shape index: {}]
  %s6 = inlined_call_operand.vmem [shape: f32[16,32], index: 6, kind: output, shape index: {}]
  %s7 = sld [smem:[#allocation0]]
  $region34: #{seq2seq_forward.27} parent=0
    _
  %s9 = ssub.s32 1, %s7
  %s10 = scalar_select 0, %s9, %s7
  // Predicated region
  $region2: #{seq2seq_forward.27} parent=0 // pred_check
    _
  $region3: #{seq2seq_forward.27} parent=0 // pred_check_branch
    %12 = sbr.rel (0) target = $region5
  $region4: #{seq2seq_forward.27} parent=0 // pred_region
    _
  $region5: #{seq2seq_forward.27} parent=0 // pred_fallthru
    _
  // Predicated region
  $region6: #{seq2seq_forward.27} parent=0 // pred_check
    _
  $region7: #{seq2seq_forward.27} parent=0 // pred_check_branch
    %14 = sbr.rel (0) target = $region9
  $region8: #{seq2seq_forward.27} parent=0 // pred_region
    _
  $region9: #{seq2seq_forward.27} parent=0 // pred_fallthru
    _
  // Predicated region
  $region10: #{seq2seq_forward.27} parent=0 // pred_check
    _
  $region11: #{seq2seq_forward.27} parent=0 // pred_check_branch
    %16 = sbr.rel (0) target = $region13
  $region12: #{seq2seq_forward.27} parent=0 // pred_region
    _
  $region13: #{seq2seq_forward.27} parent=0 // pred_fallthru
    _
  // Predicated region
  $region14: #{seq2seq_forward.27} parent=0 // pred_check
    _
  $region15: #{seq2seq_forward.27} parent=0 // pred_check_branch
    %18 = sbr.rel (0) target = $region17
  $region16: #{seq2seq_forward.27} parent=0 // pred_region
    _
  $region17: #{seq2seq_forward.27} parent=0 // pred_fallthru
    _
  // Predicated region
  $region18: #{seq2seq_forward.27} parent=0 // pred_check
    _
  $region19: #{seq2seq_forward.27} parent=0 // pred_check_branch
    %20 = sbr.rel (0) target = $region21
  $region20: #{seq2seq_forward.27} parent=0 // pred_region
    _
  $region21: #{seq2seq_forward.27} parent=0 // pred_fallthru
    _
  // Predicated region
  $region22: #{seq2seq_forward.27} parent=0 // pred_check
    _
  $region23: #{seq2seq_forward.27} parent=0 // pred_check_branch
    %22 = sbr.rel (0) target = $region25
  $region24: #{seq2seq_forward.27} parent=0 // pred_region
    _
  $region25: #{seq2seq_forward.27} parent=0 // pred_fallthru
    _
  %v24 = vld [vmem:[%s0] sm:$0xf]
  %v25 = vld [vmem:[%s0 + $0x4] sm:$0xf]
  %v26 = vld [vmem:[%s1] sm:$0xf]
  %v27 = vld [vmem:[%s1 + $0x4] sm:$0xf]
  %v28 = vld [vmem:[%s1 + $0x8] sm:$0xf]
  %v29 = vld [vmem:[%s1 + $0xc] sm:$0xf]
  %v30 = vld [vmem:[%s2] sm:$0x1]
  %v32 = vlaneseq
  %v33 = vshrl.u32 %v32, 7
  %v34 = vsub.s32 0, %v33
  %v35 = vrot.slane %v30, %v34
  %v39 = vunpack.c.l.b16 %v24
  %v40 = vunpack.c.l.b16 %v25
  %v41 = vpack.c.b16 %v40, %v39
  %v46 = vunpack.c.l.b16 %v26
  %v47 = vunpack.c.l.b16 %v27
  %v48 = vunpack.c.l.b16 %v28
  %v49 = vunpack.c.l.b16 %v29
  %v50 = vpack.c.b16 %v47, %v46
  %v51 = vpack.c.b16 %v49, %v48
  %vm54 = vcmask 261120
  %v56 = vsel %vm54, %v41, 0
  %58 = vmatprep.subr.bf16.mxu0 0
  %59 = vmatpush1.bf16.msra.mxu0 0
  %60 = vmatprep.subr.bf16.mxu0 0
  %61 = vmatpush1.bf16.msra.mxu0 0
  %62 = vmatprep.subr.bf16.mxu0 0
  %63 = vmatpush1.bf16.msra.mxu0 0
  %64 = vmatprep.subr.bf16.mxu0 0
  %65 = vmatpush1.bf16.msra.mxu0 0
  %66 = vmatprep.subr.bf16.mxu0 0
  %67 = vmatpush1.bf16.msra.mxu0 0
  %68 = vmatprep.subr.bf16.mxu0 0
  %69 = vmatpush1.bf16.msra.mxu0 0
  %70 = vmatprep.subr.bf16.mxu0 0
  %71 = vmatpush1.bf16.msra.mxu0 %v51
  %72 = vmatprep.subr.bf16.mxu0 0
  %73 = vmatpush1.bf16.msra.mxu0 %v50
  %74 = vmatprep.subr.bf16.mxu0 0
  %75 = vmatpush2.bf16.msra.mxu0 0
  %76 = vmatprep.subr.bf16.mxu0 0
  %77 = vmatpush2.bf16.msra.mxu0 0
  %78 = vmatprep.subr.bf16.mxu0 0
  %79 = vmatpush2.bf16.msra.mxu0 0
  %80 = vmatprep.subr.bf16.mxu0 0
  %81 = vmatpush2.bf16.msra.mxu0 0
  %82 = vmatprep.subr.bf16.mxu0 0
  %83 = vmatpush2.bf16.msra.mxu0 0
  %84 = vmatprep.subr.bf16.mxu0 0
  %85 = vmatpush2.bf16.msra.mxu0 0
  %86 = vmatprep.subr.bf16.mxu0 0
  %87 = vmatpush2.bf16.msra.mxu0 0
  %88 = vmatprep.subr.bf16.mxu0 0
  %89 = vmatpush2.bf16.msra.mxu0 0
  %90 = vmatprep.mubr.bf16.mxu0 0
  %91 = vmatmul.mubr.bf16.gmra.mxu0 %v56
  %v92 = vpop.f32.mrf.mxu0
  %v93 = vadd.f32 %v35, %v92
  %v94 = vpop.f32.mrf.mxu0
  %v95 = vpop.f32.mrf.mxu0
  %v96 = vadd.f32 %v35, %v95
  %v97 = vpop.f32.mrf.mxu0
  %98 = vdwg.mxu0
  %v99 = vld [vmem:[%s3] sm:$0xff]
  %v100 = vld [vmem:[%s3 + $0x8] sm:$0xff]
  %v101 = vadd.f32 %v93, %v99
  %v102 = vadd.f32 %v96, %v100
  %v103 = vsel %vm54, %v101, 0.0
  %104 = vadd.xlane.f32.xlu0 %v103
  %v105 = vpop.xlane.xlu0 %104
  %v106 = vsel %vm54, %v102, 0.0
  %107 = vadd.xlane.f32.xlu0 %v106
  %v108 = vpop.xlane.xlu0 %107
  %v109 = vrcp.pop 32.0
  %v110 = vmul.f32 %v105, %v109
  %v111 = vmul.f32 %v108, %v109
  %v112 = vsub.f32 %v101, %v110
  %v113 = vsub.f32 %v102, %v111
  %v114 = vmul.f32 %v112, %v112
  %v115 = vmul.f32 %v113, %v113
  %v116 = vsel %vm54, %v114, 0.0
  %117 = vadd.xlane.f32.xlu0 %v116
  %v118 = vpop.xlane.xlu0 %117
  %v119 = vsel %vm54, %v115, 0.0
  %120 = vadd.xlane.f32.xlu0 %v119
  %v121 = vpop.xlane.xlu0 %120
  %v122 = vmul.f32 %v118, %v109
  %v123 = vmul.f32 %v121, %v109
  %v124 = vadd.f32 %v122, 1e-05
  %v125 = vadd.f32 %v123, 1e-05
  %v126 = vrsqrt.pop %v124
  %v127 = vrsqrt.pop %v125
  %v128 = vmul.f32 %v112, %v126
  %v129 = vmul.f32 %v113, %v127
  %v130 = vld [vmem:[%s4] sm:$0x1]
  %v132 = vlaneseq
  %v133 = vshrl.u32 %v132, 7
  %v134 = vsub.s32 0, %v133
  %v135 = vrot.slane %v130, %v134
  %v137 = vmul.f32 %v128, %v135
  %v138 = vmul.f32 %v129, %v135
  %v139 = vld [vmem:[%s5] sm:$0x1]
  %v141 = vlaneseq
  %v142 = vshrl.u32 %v141, 7
  %v143 = vsub.s32 0, %v142
  %v144 = vrot.slane %v139, %v143
  %v146 = vadd.f32 %v137, %v144
  %v147 = vadd.f32 %v138, %v144
  %148 = vst.msk [vmem:[%s6] sm:$0xff] %vm54, %v146
  %149 = vst.msk [vmem:[%s6 + $0x8] sm:$0xff] %vm54, %v147
  // Predicated region
  $region26: #{seq2seq_forward.27} parent=0 // pred_check
    _
  $region27: #{seq2seq_forward.27} parent=0 // pred_check_branch
    %151 = sbr.rel (0) target = $region29
  $region28: #{seq2seq_forward.27} parent=0 // pred_region
    _
  $region29: #{seq2seq_forward.27} parent=0 // pred_fallthru
    _
  // Predicated region
  $region30: #{seq2seq_forward.27} parent=0 // pred_check
    _
  $region31: #{seq2seq_forward.27} parent=0 // pred_check_branch
    %153 = sbr.rel (0) target = $region33
  $region32: #{seq2seq_forward.27} parent=0 // pred_region
    _
  $region33: #{seq2seq_forward.27} parent=0 // pred_fallthru
    _

// kernel: seq2seq_forward.28
$region0: #{seq2seq_forward.28}
  #allocation0 [shape = 'u32[]', space=smem, size = 0x4, offset = 0x4, fixed_abs, tag = 'smem constant byte address 0x4 - core index']
  #allocation1 [shape = 'u32[144,128]{1,0:T(1,128)}', space=vmem, size = 0x12000, scoped, tag = 'internal scratch']
  #allocation2 [shape = 'f32[16,32]{1,0:T(8,128)}', space=vmem, size = 0x2000, scoped, tag = 'scratch operand']
  %s0 = inlined_call_operand.vmem [shape: f32[16,32], index: 0, kind: input, shape index: {}]
  %s1 = inlined_call_operand.vmem [shape: bf16[32,64], index: 1, kind: input, shape index: {}]
  %s2 = inlined_call_operand.vmem [shape: f32[1,64], index: 2, kind: input, shape index: {}]
  %s3 = inlined_call_operand.vmem [shape: bf16[64,32], index: 3, kind: input, shape index: {}]
  %s4 = inlined_call_operand.vmem [shape: f32[1,32], index: 4, kind: input, shape index: {}]
  %s5 = inlined_call_operand.vmem [shape: f32[1,32], index: 5, kind: input, shape index: {}]
  %s6 = inlined_call_operand.vmem [shape: f32[1,32], index: 6, kind: input, shape index: {}]
  %s7 = inlined_call_operand.vmem [shape: f32[16,32], index: 7, kind: output, shape index: {}]
  %s8 = sld [smem:[#allocation0]]
  $region46: #{seq2seq_forward.28} parent=0
    _
  %s10 = ssub.s32 1, %s8
  %s11 = scalar_select 0, %s10, %s8
  // Predicated region
  $region2: #{seq2seq_forward.28} parent=0 // pred_check
    _
  $region3: #{seq2seq_forward.28} parent=0 // pred_check_branch
    %13 = sbr.rel (0) target = $region5
  $region4: #{seq2seq_forward.28} parent=0 // pred_region
    _
  $region5: #{seq2seq_forward.28} parent=0 // pred_fallthru
    _
  // Predicated region
  $region6: #{seq2seq_forward.28} parent=0 // pred_check
    _
  $region7: #{seq2seq_forward.28} parent=0 // pred_check_branch
    %15 = sbr.rel (0) target = $region9
  $region8: #{seq2seq_forward.28} parent=0 // pred_region
    _
  $region9: #{seq2seq_forward.28} parent=0 // pred_fallthru
    _
  // Predicated region
  $region10: #{seq2seq_forward.28} parent=0 // pred_check
    _
  $region11: #{seq2seq_forward.28} parent=0 // pred_check_branch
    %17 = sbr.rel (0) target = $region13
  $region12: #{seq2seq_forward.28} parent=0 // pred_region
    _
  $region13: #{seq2seq_forward.28} parent=0 // pred_fallthru
    _
  // Predicated region
  $region14: #{seq2seq_forward.28} parent=0 // pred_check
    _
  $region15: #{seq2seq_forward.28} parent=0 // pred_check_branch
    %19 = sbr.rel (0) target = $region17
  $region16: #{seq2seq_forward.28} parent=0 // pred_region
    _
  $region17: #{seq2seq_forward.28} parent=0 // pred_fallthru
    _
  // Predicated region
  $region18: #{seq2seq_forward.28} parent=0 // pred_check
    _
  $region19: #{seq2seq_forward.28} parent=0 // pred_check_branch
    %21 = sbr.rel (0) target = $region21
  $region20: #{seq2seq_forward.28} parent=0 // pred_region
    _
  $region21: #{seq2seq_forward.28} parent=0 // pred_fallthru
    _
  // Predicated region
  $region22: #{seq2seq_forward.28} parent=0 // pred_check
    _
  $region23: #{seq2seq_forward.28} parent=0 // pred_check_branch
    %23 = sbr.rel (0) target = $region25
  $region24: #{seq2seq_forward.28} parent=0 // pred_region
    _
  $region25: #{seq2seq_forward.28} parent=0 // pred_fallthru
    _
  // Predicated region
  $region26: #{seq2seq_forward.28} parent=0 // pred_check
    _
  $region27: #{seq2seq_forward.28} parent=0 // pred_check_branch
    %25 = sbr.rel (0) target = $region29
  $region28: #{seq2seq_forward.28} parent=0 // pred_region
    _
  $region29: #{seq2seq_forward.28} parent=0 // pred_fallthru
    _
  %p27 = scmp.eq.s32.totalorder 0, 0
  // Predicated region
  $region30: #{seq2seq_forward.28} parent=0 // pred_check
    %p28 = pneg %p27
  $region31: #{seq2seq_forward.28} parent=0 // pred_check_branch
    %30 = sbr.rel (%p28) target = $region33
  $region32: #{seq2seq_forward.28} parent=0 // pred_region
    %vm31 = vcmask 261120
    %32 = vst.msk [vmem:[#allocation2] sm:$0xff] %vm31, 0.0
    %33 = vst.msk [vmem:[#allocation2 + $0x8] sm:$0xff] %vm31, 0.0
  $region33: #{seq2seq_forward.28} parent=0 // pred_fallthru
    _
  %v34 = vld [vmem:[%s0] sm:$0xff]
  %v35 = vld [vmem:[%s0 + $0x8] sm:$0xff]
  %v36 = vpack.c.bf16 %v35, %v34
  %v37 = vld [vmem:[%s1] sm:$0xf]
  %v38 = vld [vmem:[%s1 + $0x4] sm:$0xf]
  %v39 = vld [vmem:[%s1 + $0x8] sm:$0xf]
  %v40 = vld [vmem:[%s1 + $0xc] sm:$0xf]
  %v41 = vld [vmem:[%s2] sm:$0x1]
  %v43 = vlaneseq
  %v44 = vshrl.u32 %v43, 7
  %v45 = vsub.s32 0, %v44
  %v46 = vrot.slane %v41, %v45
  %v52 = vunpack.c.l.b16 %v37
  %v53 = vunpack.c.l.b16 %v38
  %v54 = vunpack.c.l.b16 %v39
  %v55 = vunpack.c.l.b16 %v40
  %v56 = vpack.c.b16 %v53, %v52
  %v57 = vpack.c.b16 %v55, %v54
  %vm60 = vcmask 261120
  %v62 = vsel %vm60, %v36, 0
  %64 = vmatprep.subr.bf16.mxu0 0
  %65 = vmatpush1.bf16.msra.mxu0 0
  %66 = vmatprep.subr.bf16.mxu0 0
  %67 = vmatpush1.bf16.msra.mxu0 0
  %68 = vmatprep.subr.bf16.mxu0 0
  %69 = vmatpush1.bf16.msra.mxu0 0
  %70 = vmatprep.subr.bf16.mxu0 0
  %71 = vmatpush1.bf16.msra.mxu0 0
  %72 = vmatprep.subr.bf16.mxu0 0
  %73 = vmatpush1.bf16.msra.mxu0 0
  %74 = vmatprep.subr.bf16.mxu0 0
  %75 = vmatpush1.bf16.msra.mxu0 0
  %76 = vmatprep.subr.bf16.mxu0 0
  %77 = vmatpush1.bf16.msra.mxu0 %v57
  %78 = vmatprep.subr.bf16.mxu0 0
  %79 = vmatpush1.bf16.msra.mxu0 %v56
  %80 = vmatprep.subr.bf16.mxu0 0
  %81 = vmatpush2.bf16.msra.mxu0 0
  %82 = vmatprep.subr.bf16.mxu0 0
  %83 = vmatpush2.bf16.msra.mxu0 0
  %84 = vmatprep.subr.bf16.mxu0 0
  %85 = vmatpush2.bf16.msra.mxu0 0
  %86 = vmatprep.subr.bf16.mxu0 0
  %87 = vmatpush2.bf16.msra.mxu0 0
  %88 = vmatprep.subr.bf16.mxu0 0
  %89 = vmatpush2.bf16.msra.mxu0 0
  %90 = vmatprep.subr.bf16.mxu0 0
  %91 = vmatpush2.bf16.msra.mxu0 0
  %92 = vmatprep.subr.bf16.mxu0 0
  %93 = vmatpush2.bf16.msra.mxu0 0
  %94 = vmatprep.subr.bf16.mxu0 0
  %95 = vmatpush2.bf16.msra.mxu0 0
  %96 = vmatprep.mubr.bf16.mxu0 0
  %97 = vmatmul.mubr.bf16.gmra.mxu0 %v62
  %v98 = vpop.f32.mrf.mxu0
  %v99 = vadd.f32 %v46, %v98
  %v100 = vpop.f32.mrf.mxu0
  %v101 = vpop.f32.mrf.mxu0
  %v102 = vadd.f32 %v46, %v101
  %v103 = vpop.f32.mrf.mxu0
  %104 = vdwg.mxu0
  %v105 = vmax.f32 %v99, 0.0
  %v106 = vmax.f32 %v102, 0.0
  %v107 = vld [vmem:[#allocation2] sm:$0xff]
  %v108 = vld [vmem:[#allocation2 + $0x8] sm:$0xff]
  %v109 = vpack.c.bf16 %v106, %v105
  %v110 = vld [vmem:[%s3] sm:$0xf]
  %v111 = vld [vmem:[%s3 + $0x4] sm:$0xf]
  %v112 = vld [vmem:[%s3 + $0x8] sm:$0xf]
  %v113 = vld [vmem:[%s3 + $0xc] sm:$0xf]
  %v114 = vld [vmem:[%s3 + $0x10] sm:$0xf]
  %v115 = vld [vmem:[%s3 + $0x14] sm:$0xf]
  %v116 = vld [vmem:[%s3 + $0x18] sm:$0xf]
  %v117 = vld [vmem:[%s3 + $0x1c] sm:$0xf]
  %v126 = vunpack.c.l.b16 %v110
  %v127 = vunpack.c.l.b16 %v111
  %v128 = vunpack.c.l.b16 %v112
  %v129 = vunpack.c.l.b16 %v113
  %v130 = vunpack.c.l.b16 %v114
  %v131 = vunpack.c.l.b16 %v115
  %v132 = vunpack.c.l.b16 %v116
  %v133 = vunpack.c.l.b16 %v117
  %v134 = vpack.c.b16 %v127, %v126
  %v135 = vpack.c.b16 %v129, %v128
  %v136 = vpack.c.b16 %v131, %v130
  %v137 = vpack.c.b16 %v133, %v132
  %vm142 = vcmask 523264
  %v144 = vsel %vm142, %v109, 0
  %146 = vmatprep.subr.bf16.mxu0 0
  %147 = vmatpush1.bf16.msra.mxu0 0
  %148 = vmatprep.subr.bf16.mxu0 0
  %149 = vmatpush1.bf16.msra.mxu0 0
  %150 = vmatprep.subr.bf16.mxu0 0
  %151 = vmatpush1.bf16.msra.mxu0 0
  %152 = vmatprep.subr.bf16.mxu0 0
  %153 = vmatpush1.bf16.msra.mxu0 0
  %154 = vmatprep.subr.bf16.mxu0 0
  %155 = vmatpush1.bf16.msra.mxu0 %v137
  %156 = vmatprep.subr.bf16.mxu0 0
  %157 = vmatpush1.bf16.msra.mxu0 %v136
  %158 = vmatprep.subr.bf16.mxu0 0
  %159 = vmatpush1.bf16.msra.mxu0 %v135
  %160 = vmatprep.subr.bf16.mxu0 0
  %161 = vmatpush1.bf16.msra.mxu0 %v134
  %162 = vmatprep.subr.bf16.mxu0 0
  %163 = vmatpush2.bf16.msra.mxu0 0
  %164 = vmatprep.subr.bf16.mxu0 0
  %165 = vmatpush2.bf16.msra.mxu0 0
  %166 = vmatprep.subr.bf16.mxu0 0
  %167 = vmatpush2.bf16.msra.mxu0 0
  %168 = vmatprep.subr.bf16.mxu0 0
  %169 = vmatpush2.bf16.msra.mxu0 0
  %170 = vmatprep.subr.bf16.mxu0 0
  %171 = vmatpush2.bf16.msra.mxu0 0
  %172 = vmatprep.subr.bf16.mxu0 0
  %173 = vmatpush2.bf16.msra.mxu0 0
  %174 = vmatprep.subr.bf16.mxu0 0
  %175 = vmatpush2.bf16.msra.mxu0 0
  %176 = vmatprep.subr.bf16.mxu0 0
  %177 = vmatpush2.bf16.msra.mxu0 0
  %178 = vmatprep.mubr.bf16.mxu0 0
  %179 = vmatmul.mubr.bf16.gmra.mxu0 %v144
  %v180 = vpop.f32.mrf.mxu0
  %v181 = vadd.f32 0.0, %v180
  %v182 = vpop.f32.mrf.mxu0
  %v183 = vpop.f32.mrf.mxu0
  %v184 = vadd.f32 0.0, %v183
  %v185 = vpop.f32.mrf.mxu0
  %186 = vdwg.mxu0
  %v187 = vadd.f32 %v107, %v181
  %v188 = vadd.f32 %v108, %v184
  %189 = vst.msk [vmem:[#allocation2] sm:$0xff] %vm60, %v187
  %190 = vst.msk [vmem:[#allocation2 + $0x8] sm:$0xff] %vm60, %v188
  // Predicated region
  $region34: #{seq2seq_forward.28} parent=0 // pred_check
    %p191 = pneg %p27
  $region35: #{seq2seq_forward.28} parent=0 // pred_check_branch
    %193 = sbr.rel (%p191) target = $region37
  $region36: #{seq2seq_forward.28} parent=0 // pred_region
    %v194 = vld [vmem:[#allocation2] sm:$0xff]
    %v195 = vld [vmem:[#allocation2 + $0x8] sm:$0xff]
    %v196 = vld [vmem:[%s4] sm:$0x1]
    %v198 = vlaneseq
    %v199 = vshrl.u32 %v198, 7
    %v200 = vsub.s32 0, %v199
    %v201 = vrot.slane %v196, %v200
    %v203 = vadd.f32 %v194, %v201
    %v204 = vadd.f32 %v195, %v201
    %v205 = vld [vmem:[%s0] sm:$0xff]
    %v206 = vld [vmem:[%s0 + $0x8] sm:$0xff]
    %v207 = vadd.f32 %v203, %v205
    %v208 = vadd.f32 %v204, %v206
    %v209 = vsel %vm60, %v207, 0.0
    %210 = vadd.xlane.f32.xlu0 %v209
    %v211 = vpop.xlane.xlu0 %210
    %v212 = vsel %vm60, %v208, 0.0
    %213 = vadd.xlane.f32.xlu0 %v212
    %v214 = vpop.xlane.xlu0 %213
    %v215 = vrcp.pop 32.0
    %v216 = vmul.f32 %v211, %v215
    %v217 = vmul.f32 %v214, %v215
    %v218 = vsub.f32 %v207, %v216
    %v219 = vsub.f32 %v208, %v217
    %v220 = vmul.f32 %v218, %v218
    %v221 = vmul.f32 %v219, %v219
    %v222 = vsel %vm60, %v220, 0.0
    %223 = vadd.xlane.f32.xlu0 %v222
    %v224 = vpop.xlane.xlu0 %223
    %v225 = vsel %vm60, %v221, 0.0
    %226 = vadd.xlane.f32.xlu0 %v225
    %v227 = vpop.xlane.xlu0 %226
    %v228 = vmul.f32 %v224, %v215
    %v229 = vmul.f32 %v227, %v215
    %v230 = vadd.f32 %v228, 1e-05
    %v231 = vadd.f32 %v229, 1e-05
    %v232 = vrsqrt.pop %v230
    %v233 = vrsqrt.pop %v231
    %v234 = vmul.f32 %v218, %v232
    %v235 = vmul.f32 %v219, %v233
    %v236 = vld [vmem:[%s5] sm:$0x1]
    %v238 = vlaneseq
    %v239 = vshrl.u32 %v238, 7
    %v240 = vsub.s32 0, %v239
    %v241 = vrot.slane %v236, %v240
    %v243 = vmul.f32 %v234, %v241
    %v244 = vmul.f32 %v235, %v241
    %v245 = vld [vmem:[%s6] sm:$0x1]
    %v247 = vlaneseq
    %v248 = vshrl.u32 %v247, 7
    %v249 = vsub.s32 0, %v248
    %v250 = vrot.slane %v245, %v249
    %v252 = vadd.f32 %v243, %v250
    %v253 = vadd.f32 %v244, %v250
    %254 = vst.msk [vmem:[%s7] sm:$0xff] %vm60, %v252
    %255 = vst.msk [vmem:[%s7 + $0x8] sm:$0xff] %vm60, %v253
  $region37: #{seq2seq_forward.28} parent=0 // pred_fallthru
    _
  // Predicated region
  $region38: #{seq2seq_forward.28} parent=0 // pred_check
    _
  $region39: #{seq2seq_forward.28} parent=0 // pred_check_branch
    %257 = sbr.rel (0) target = $region41
  $region40: #{seq2seq_forward.28} parent=0 // pred_region
    _
  $region41: #{seq2seq_forward.28} parent=0 // pred_fallthru
    _
  // Predicated region
  $region42: #{seq2seq_forward.28} parent=0 // pred_check
    _
  $region43: #{seq2seq_forward.28} parent=0 // pred_check_branch
    %259 = sbr.rel (0) target = $region45
  $region44: #{seq2seq_forward.28} parent=0 // pred_region
    _
  $region45: #{seq2seq_forward.28} parent=0 // pred_fallthru
    _

// kernel: seq2seq_forward.26
$region0: #{seq2seq_forward.26}
  #allocation0 [shape = 'u32[]', space=smem, size = 0x4, offset = 0x4, fixed_abs, tag = 'smem constant byte address 0x4 - core index']
  #allocation1 [shape = 'u32[144,128]{1,0:T(1,128)}', space=vmem, size = 0x12000, scoped, tag = 'internal scratch']
  %s0 = inlined_call_operand.vmem [shape: bf16[2,8,96], index: 0, kind: input, shape index: {}]
  %s1 = inlined_call_operand.vmem [shape: f32[2,1,8], index: 1, kind: input, shape index: {}]
  %s2 = inlined_call_operand.vmem [shape: bf16[2,8,32], index: 2, kind: output, shape index: {}]
  %s3 = sld [smem:[#allocation0]]
  $region41: #{seq2seq_forward.26} parent=0
    _
  %s5 = ssub.s32 1, %s3
  %s6 = scalar_select 0, %s5, %s3
  loop: start=0, step=1, limit=4
  $region2: #{seq2seq_forward.26} parent=0 // loop_pre_header
    _
  $region3: #{seq2seq_forward.26} parent=0 // loop_header
    %s8 = sphi 0, %s12
    %p9 = scmp.ge.s32.totalorder %s8, 4
    %s18 = sphi 0, %s20
    %s21 = sphi 0, %s18
    %s22 = sphi 0, %s21
    %s38 = sphi 0, %s22
    %s44 = sphi 0, %s46
    %s47 = sphi 0, %s44
    %s48 = sphi 0, %s47
    %s64 = sphi 0, %s48
    %s70 = sphi 0, %s72
    %s73 = sphi 0, %s70
    %s74 = sphi 0, %s73
    %s90 = sphi 0, %s74
  $region4: #{seq2seq_forward.26} parent=0 // loop_header_branch
    %11 = sbr.rel (%p9) target = $region8
  $region5: #{seq2seq_forward.26} parent=0 // loop_body
    %s13 = ssub.s32 %s8, 1
    %s14 = ssub.s32 %s8, 2
    %s15 = sadd.s32 %s8, 1
    %s16 = ssub.s32 %s8, %s15
    %p17 = scmp.eq.s32.totalorder %s16, 0
    %s19 = sadd.s32 %s18, 1
    %s20 = scalar_select %p17, %s18, %s19
    %p23 = pneg %p17
    %p24 = scmp.eq.s32.totalorder %s8, 1
    %p25 = por %p23, %p24
    %p26 = scmp.ne.s32.totalorder %s18, %s21
    %p27 = scmp.eq.s32.totalorder %s8, 0
    %p28 = por %p26, %p27
    %p29 = scmp.ne.s32.totalorder %s18, %s21
    %p30 = scmp.eq.s32.totalorder %s13, 1
    %p31 = por %p29, %p30
    %p32 = scmp.ne.s32.totalorder %s21, %s22
    %p33 = scmp.eq.s32.totalorder %s13, 0
    %p34 = por %p32, %p33
    %p35 = scmp.ne.s32.totalorder %s21, %s22
    %p36 = scmp.eq.s32.totalorder %s14, 1
    %p37 = por %p35, %p36
    %p39 = scmp.ne.s32.totalorder %s22, %s38
    %p40 = scmp.eq.s32.totalorder %s14, 0
    %p41 = por %p39, %p40
    %s42 = ssub.s32 %s8, %s15
    %p43 = scmp.eq.s32.totalorder %s42, 0
    %s45 = sadd.s32 %s44, 1
    %s46 = scalar_select %p43, %s44, %s45
    %p49 = pneg %p43
    %p50 = scmp.eq.s32.totalorder %s8, 1
    %p51 = por %p49, %p50
    %p52 = scmp.ne.s32.totalorder %s44, %s47
    %p53 = scmp.eq.s32.totalorder %s8, 0
    %p54 = por %p52, %p53
    %p55 = scmp.ne.s32.totalorder %s44, %s47
    %p56 = scmp.eq.s32.totalorder %s13, 1
    %p57 = por %p55, %p56
    %p58 = scmp.ne.s32.totalorder %s47, %s48
    %p59 = scmp.eq.s32.totalorder %s13, 0
    %p60 = por %p58, %p59
    %p61 = scmp.ne.s32.totalorder %s47, %s48
    %p62 = scmp.eq.s32.totalorder %s14, 1
    %p63 = por %p61, %p62
    %p65 = scmp.ne.s32.totalorder %s48, %s64
    %p66 = scmp.eq.s32.totalorder %s14, 0
    %p67 = por %p65, %p66
    %s68 = ssub.s32 %s8, %s15
    %p69 = scmp.eq.s32.totalorder %s68, 0
    %s71 = sadd.s32 %s70, 1
    %s72 = scalar_select %p69, %s70, %s71
    %p75 = pneg %p69
    %p76 = scmp.eq.s32.totalorder %s8, 1
    %p77 = por %p75, %p76
    %p78 = scmp.ne.s32.totalorder %s70, %s73
    %p79 = scmp.eq.s32.totalorder %s8, 0
    %p80 = por %p78, %p79
    %p81 = scmp.ne.s32.totalorder %s70, %s73
    %p82 = scmp.eq.s32.totalorder %s13, 1
    %p83 = por %p81, %p82
    %p84 = scmp.ne.s32.totalorder %s73, %s74
    %p85 = scmp.eq.s32.totalorder %s13, 0
    %p86 = por %p84, %p85
    %p87 = scmp.ne.s32.totalorder %s73, %s74
    %p88 = scmp.eq.s32.totalorder %s14, 1
    %p89 = por %p87, %p88
    %p91 = scmp.ne.s32.totalorder %s74, %s90
    %p92 = scmp.eq.s32.totalorder %s14, 0
    %p93 = por %p91, %p92
    %p94 = scmp.le.s32.totalorder 1, %s8
    %p95 = scmp.lt.s32.totalorder %s8, 3
    %p96 = pnand %p94, %p95
    %p97 = pneg %p96
    // Predicated region
    $region9: #{seq2seq_forward.26} parent=5 // pred_check
      _
    $region10: #{seq2seq_forward.26} parent=5 // pred_check_branch
      %99 = sbr.rel (%p96) target = $region12
    $region11: #{seq2seq_forward.26} parent=5 // pred_region
      %s100 = ssub.s32 %s8, 1
    $region12: #{seq2seq_forward.26} parent=5 // pred_fallthru
      _
    %p101 = scmp.lt.s32.totalorder %s8, 2
    // Predicated region
    $region13: #{seq2seq_forward.26} parent=5 // pred_check
      %p102 = pneg %p101
    $region14: #{seq2seq_forward.26} parent=5 // pred_check_branch
      %104 = sbr.rel (%p102) target = $region16
    $region15: #{seq2seq_forward.26} parent=5 // pred_region
      // Predicated region
      $region17: #{seq2seq_forward.26} parent=15 // pred_check
        %p105 = pneg %p28
      $region18: #{seq2seq_forward.26} parent=15 // pred_check_branch
        %107 = sbr.rel (%p105) target = $region20
      $region19: #{seq2seq_forward.26} parent=15 // pred_region
        %p108 = scmp.lt.s32.totalorder %s8, 1
        %s109 = scalar_select %p108, %s8, 1
        %s110 = smul.addr %s109, 4
        %s111 = scalar_lea.vmem %s0, %s110
      $region20: #{seq2seq_forward.26} parent=15 // pred_fallthru
        _
      // Predicated region
      $region21: #{seq2seq_forward.26} parent=15 // pred_check
        %p112 = pneg %p54
      $region22: #{seq2seq_forward.26} parent=15 // pred_check_branch
        %114 = sbr.rel (%p112) target = $region24
      $region23: #{seq2seq_forward.26} parent=15 // pred_region
        %p115 = scmp.lt.s32.totalorder %s8, 1
        %s116 = scalar_select %p115, %s8, 1
        %s117 = scalar_lea.vmem %s1, %s116
      $region24: #{seq2seq_forward.26} parent=15 // pred_fallthru
        _
    $region16: #{seq2seq_forward.26} parent=5 // pred_fallthru
      _
    %p118 = scmp.le.s32.totalorder 1, %s8
    %p119 = scmp.lt.s32.totalorder %s8, 3
    %p120 = pnand %p118, %p119
    %p121 = pneg %p120
    // Predicated region
    $region25: #{seq2seq_forward.26} parent=5 // pred_check
      _
    $region26: #{seq2seq_forward.26} parent=5 // pred_check_branch
      %123 = sbr.rel (%p120) target = $region28
    $region27: #{seq2seq_forward.26} parent=5 // pred_region
      %s124 = ssub.s32 %s8, 1
      %p125 = scmp.lt.s32.totalorder %s13, 1
      %s126 = scalar_select %p125, %s13, 1
      %s127 = smul.addr %s126, 4
      %s128 = scalar_lea.vmem %s0, %s127
      %p129 = pneg %p34
      %p130 = pneg %p31
      %p131 = scmp.lt.s32.totalorder %s13, 1
      %s132 = scalar_select %p131, %s13, 1
      %s133 = scalar_lea.vmem %s1, %s132
      %p134 = pneg %p60
      %p135 = pneg %p57
      %p136 = pneg %p86
      %p137 = pneg %p83
      %p138 = scmp.lt.s32.totalorder %s13, 1
      %s139 = scalar_select %p138, %s13, 1
      %s140 = smul.addr %s139, 4
      %s141 = scalar_lea.vmem %s2, %s140
      %p142 = scmp.lt.s32.totalorder %s13, 1
      %s143 = scalar_select %p142, %s13, 1
      %s144 = smul.addr %s143, 4
      %s145 = scalar_lea.vmem %s0, %s144
      %p146 = scmp.lt.s32.totalorder %s13, 1
      %s147 = scalar_select %p146, %s13, 1
      %s148 = scalar_lea.vmem %s1, %s147
      %p149 = scmp.lt.s32.totalorder %s13, 1
      %s150 = scalar_select %p149, %s13, 1
      %s151 = smul.addr %s150, 4
      %s152 = scalar_lea.vmem %s2, %s151
      %v154 = vld [vmem:[%s145] sm:$0xf]
      %v155 = vld [vmem:[%s148] sm:$0x1]
      %vm156 = vcmp.gt.f32.partialorder %v155, 0.0
      %v158 = vunpack.c.l.b16 %v154
      %v159 = vpack.c.b16 %v158, %v158
      %160 = vrot.lane.b32.xlu0 %v159, 96
      %v161 = vpop.permute.xlu0 %160
      %vm162 = vcmask 64512
      %v164 = vsel %vm162, %v154, 0
      %v167 = vsel %vm162, %v161, 0
      %169 = vmatprep.subr.bf16.mxu0 0
      %170 = vmatpush1.bf16.xpose.msra.mxu0 0
      %171 = vmatprep.subr.bf16.mxu0 0
      %172 = vmatpush1.bf16.xpose.msra.mxu0 0
      %173 = vmatprep.subr.bf16.mxu0 0
      %174 = vmatpush1.bf16.xpose.msra.mxu0 0
      %175 = vmatprep.subr.bf16.mxu0 0
      %176 = vmatpush1.bf16.xpose.msra.mxu0 0
      %177 = vmatprep.subr.bf16.mxu0 0
      %178 = vmatpush1.bf16.xpose.msra.mxu0 0
      %179 = vmatprep.subr.bf16.mxu0 0
      %180 = vmatpush1.bf16.xpose.msra.mxu0 0
      %181 = vmatprep.subr.bf16.mxu0 0
      %182 = vmatpush1.bf16.xpose.msra.mxu0 0
      %183 = vmatprep.subr.bf16.mxu0 0
      %184 = vmatpush1.bf16.xpose.msra.mxu0 %v167
      %185 = vmatprep.subr.bf16.mxu0 0
      %186 = vmatpush2.bf16.xpose.msra.mxu0 0
      %187 = vmatprep.subr.bf16.mxu0 0
      %188 = vmatpush2.bf16.xpose.msra.mxu0 0
      %189 = vmatprep.subr.bf16.mxu0 0
      %190 = vmatpush2.bf16.xpose.msra.mxu0 0
      %191 = vmatprep.subr.bf16.mxu0 0
      %192 = vmatpush2.bf16.xpose.msra.mxu0 0
      %193 = vmatprep.subr.bf16.mxu0 0
      %194 = vmatpush2.bf16.xpose.msra.mxu0 0
      %195 = vmatprep.subr.bf16.mxu0 0
      %196 = vmatpush2.bf16.xpose.msra.mxu0 0
      %197 = vmatprep.subr.bf16.mxu0 0
      %198 = vmatpush2.bf16.xpose.msra.mxu0 0
      %199 = vmatprep.subr.bf16.mxu0 0
      %200 = vmatpush2.bf16.xpose.msra.mxu0 0
      %201 = vmatprep.mubr.bf16.mxu0 0
      %202 = vmatmul.mubr.bf16.gmra.mxu0 %v164
      %v203 = vpop.f32.mrf.mxu0
      %v204 = vadd.f32 0.0, %v203
      %v205 = vpop.f32.mrf.mxu0
      %v206 = vpop.f32.mrf.mxu0
      %v207 = vpop.f32.mrf.mxu0
      %208 = vdwg.mxu0
      %v209 = vmul.f32 %v204, 0.35355338
      %v210 = vsel %vm156, 1, 0
      %v211 = vlaneseq
      %v212 = vshrl.u32 %v211, 7
      %v213 = vsub.s32 0, %v212
      %v214 = vrot.slane %v210, %v213
      %vm215 = vcmp.eq.s32.totalorder %v214, 1
      %v216 = vsel %vm215, %v209, -1e+10
      %v217 = vsel %vm162, %v216, -inf
      %218 = vmax.xlane.f32.xlu0 %v217
      %v219 = vpop.xlane.xlu0 %218
      %v220 = vsub.f32 %v216, %v219
      %v221 = vmul.f32 %v220, 1.442695
      %v222 = vpow.pop %v221
      %v223 = vsel %vm162, %v222, 0.0
      %224 = vadd.xlane.f32.xlu0 %v223
      %v225 = vpop.xlane.xlu0 %224
      %v226 = vrcp.pop %v225
      %v227 = vmul.f32 %v222, %v226
      %v228 = vpack.c.bf16 %v227, %v227
      %229 = vrot.lane.b32.xlu0 %v159, 64
      %v230 = vpop.permute.xlu0 %229
      %v232 = vsel %vm162, %v228, 0
      %vm234 = vcmask 1043456
      %v236 = vsel %vm234, %v230, 0
      %238 = vmatprep.subr.bf16.mxu0 0
      %239 = vmatpush1.bf16.msra.mxu0 0
      %240 = vmatprep.subr.bf16.mxu0 0
      %241 = vmatpush1.bf16.msra.mxu0 0
      %242 = vmatprep.subr.bf16.mxu0 0
      %243 = vmatpush1.bf16.msra.mxu0 0
      %244 = vmatprep.subr.bf16.mxu0 0
      %245 = vmatpush1.bf16.msra.mxu0 0
      %246 = vmatprep.subr.bf16.mxu0 0
      %247 = vmatpush1.bf16.msra.mxu0 0
      %248 = vmatprep.subr.bf16.mxu0 0
      %249 = vmatpush1.bf16.msra.mxu0 0
      %250 = vmatprep.subr.bf16.mxu0 0
      %251 = vmatpush1.bf16.msra.mxu0 0
      %252 = vmatprep.subr.bf16.mxu0 0
      %253 = vmatpush1.bf16.msra.mxu0 %v236
      %254 = vmatprep.subr.bf16.mxu0 0
      %255 = vmatpush2.bf16.msra.mxu0 0
      %256 = vmatprep.subr.bf16.mxu0 0
      %257 = vmatpush2.bf16.msra.mxu0 0
      %258 = vmatprep.subr.bf16.mxu0 0
      %259 = vmatpush2.bf16.msra.mxu0 0
      %260 = vmatprep.subr.bf16.mxu0 0
      %261 = vmatpush2.bf16.msra.mxu0 0
      %262 = vmatprep.subr.bf16.mxu0 0
      %263 = vmatpush2.bf16.msra.mxu0 0
      %264 = vmatprep.subr.bf16.mxu0 0
      %265 = vmatpush2.bf16.msra.mxu0 0
      %266 = vmatprep.subr.bf16.mxu0 0
      %267 = vmatpush2.bf16.msra.mxu0 0
      %268 = vmatprep.subr.bf16.mxu0 0
      %269 = vmatpush2.bf16.msra.mxu0 0
      %270 = vmatprep.mubr.bf16.mxu0 0
      %271 = vmatmul.mubr.bf16.gmra.mxu0 %v232
      %v272 = vpop.f32.mrf.mxu0
      %v273 = vadd.f32 0.0, %v272
      %v274 = vpop.f32.mrf.mxu0
      %v275 = vpop.f32.mrf.mxu0
      %v276 = vpop.f32.mrf.mxu0
      %277 = vdwg.mxu0
      %278 = vrot.lane.b32.xlu0 %v159, 120
      %v279 = vpop.permute.xlu0 %278
      %280 = vrot.lane.b32.xlu0 %v159, 88
      %v281 = vpop.permute.xlu0 %280
      %v283 = vsel %vm162, %v279, 0
      %v286 = vsel %vm162, %v281, 0
      %288 = vmatprep.subr.bf16.mxu0 0
      %289 = vmatpush1.bf16.xpose.msra.mxu0 0
      %290 = vmatprep.subr.bf16.mxu0 0
      %291 = vmatpush1.bf16.xpose.msra.mxu0 0
      %292 = vmatprep.subr.bf16.mxu0 0
      %293 = vmatpush1.bf16.xpose.msra.mxu0 0
      %294 = vmatprep.subr.bf16.mxu0 0
      %295 = vmatpush1.bf16.xpose.msra.mxu0 0
      %296 = vmatprep.subr.bf16.mxu0 0
      %297 = vmatpush1.bf16.xpose.msra.mxu0 0
      %298 = vmatprep.subr.bf16.mxu0 0
      %299 = vmatpush1.bf16.xpose.msra.mxu0 0
      %300 = vmatprep.subr.bf16.mxu0 0
      %301 = vmatpush1.bf16.xpose.msra.mxu0 0
      %302 = vmatprep.subr.bf16.mxu0 0
      %303 = vmatpush1.bf16.xpose.msra.mxu0 %v286
      %304 = vmatprep.subr.bf16.mxu0 0
      %305 = vmatpush2.bf16.xpose.msra.mxu0 0
      %306 = vmatprep.subr.bf16.mxu0 0
      %307 = vmatpush2.bf16.xpose.msra.mxu0 0
      %308 = vmatprep.subr.bf16.mxu0 0
      %309 = vmatpush2.bf16.xpose.msra.mxu0 0
      %310 = vmatprep.subr.bf16.mxu0 0
      %311 = vmatpush2.bf16.xpose.msra.mxu0 0
      %312 = vmatprep.subr.bf16.mxu0 0
      %313 = vmatpush2.bf16.xpose.msra.mxu0 0
      %314 = vmatprep.subr.bf16.mxu0 0
      %315 = vmatpush2.bf16.xpose.msra.mxu0 0
      %316 = vmatprep.subr.bf16.mxu0 0
      %317 = vmatpush2.bf16.xpose.msra.mxu0 0
      %318 = vmatprep.subr.bf16.mxu0 0
      %319 = vmatpush2.bf16.xpose.msra.mxu0 0
      %320 = vmatprep.mubr.bf16.mxu0 0
      %321 = vmatmul.mubr.bf16.gmra.mxu0 %v283
      %v322 = vpop.f32.mrf.mxu0
      %v323 = vadd.f32 0.0, %v322
      %v324 = vpop.f32.mrf.mxu0
      %v325 = vpop.f32.mrf.mxu0
      %v326 = vpop.f32.mrf.mxu0
      %327 = vdwg.mxu0
      %v328 = vmul.f32 %v323, 0.35355338
      %v329 = vsel %vm215, %v328, -1e+10
      %v330 = vsel %vm162, %v329, -inf
      %331 = vmax.xlane.f32.xlu0 %v330
      %v332 = vpop.xlane.xlu0 %331
      %v333 = vsub.f32 %v329, %v332
      %v334 = vmul.f32 %v333, 1.442695
      %v335 = vpow.pop %v334
      %v336 = vsel %vm162, %v335, 0.0
      %337 = vadd.xlane.f32.xlu0 %v336
      %v338 = vpop.xlane.xlu0 %337
      %v339 = vrcp.pop %v338
      %v340 = vmul.f32 %v335, %v339
      %v341 = vpack.c.bf16 %v340, %v340
      %342 = vrot.lane.b32.xlu0 %v159, 56
      %v343 = vpop.permute.xlu0 %342
      %v345 = vsel %vm162, %v341, 0
      %v348 = vsel %vm234, %v343, 0
      %350 = vmatprep.subr.bf16.mxu0 0
      %351 = vmatpush1.bf16.msra.mxu0 0
      %352 = vmatprep.subr.bf16.mxu0 0
      %353 = vmatpush1.bf16.msra.mxu0 0
      %354 = vmatprep.subr.bf16.mxu0 0
      %355 = vmatpush1.bf16.msra.mxu0 0
      %356 = vmatprep.subr.bf16.mxu0 0
      %357 = vmatpush1.bf16.msra.mxu0 0
      %358 = vmatprep.subr.bf16.mxu0 0
      %359 = vmatpush1.bf16.msra.mxu0 0
      %360 = vmatprep.subr.bf16.mxu0 0
      %361 = vmatpush1.bf16.msra.mxu0 0
      %362 = vmatprep.subr.bf16.mxu0 0
      %363 = vmatpush1.bf16.msra.mxu0 0
      %364 = vmatprep.subr.bf16.mxu0 0
      %365 = vmatpush1.bf16.msra.mxu0 %v348
      %366 = vmatprep.subr.bf16.mxu0 0
      %367 = vmatpush2.bf16.msra.mxu0 0
      %368 = vmatprep.subr.bf16.mxu0 0
      %369 = vmatpush2.bf16.msra.mxu0 0
      %370 = vmatprep.subr.bf16.mxu0 0
      %371 = vmatpush2.bf16.msra.mxu0 0
      %372 = vmatprep.subr.bf16.mxu0 0
      %373 = vmatpush2.bf16.msra.mxu0 0
      %374 = vmatprep.subr.bf16.mxu0 0
      %375 = vmatpush2.bf16.msra.mxu0 0
      %376 = vmatprep.subr.bf16.mxu0 0
      %377 = vmatpush2.bf16.msra.mxu0 0
      %378 = vmatprep.subr.bf16.mxu0 0
      %379 = vmatpush2.bf16.msra.mxu0 0
      %380 = vmatprep.subr.bf16.mxu0 0
      %381 = vmatpush2.bf16.msra.mxu0 0
      %382 = vmatprep.mubr.bf16.mxu0 0
      %383 = vmatmul.mubr.bf16.gmra.mxu0 %v345
      %v384 = vpop.f32.mrf.mxu0
      %v385 = vadd.f32 0.0, %v384
      %v386 = vpop.f32.mrf.mxu0
      %v387 = vpop.f32.mrf.mxu0
      %v388 = vpop.f32.mrf.mxu0
      %389 = vdwg.mxu0
      %390 = vrot.lane.b32.xlu0 %v159, 112
      %v391 = vpop.permute.xlu0 %390
      %392 = vrot.lane.b32.xlu0 %v159, 80
      %v393 = vpop.permute.xlu0 %392
      %v395 = vsel %vm162, %v391, 0
      %v398 = vsel %vm162, %v393, 0
      %400 = vmatprep.subr.bf16.mxu0 0
      %401 = vmatpush1.bf16.xpose.msra.mxu0 0
      %402 = vmatprep.subr.bf16.mxu0 0
      %403 = vmatpush1.bf16.xpose.msra.mxu0 0
      %404 = vmatprep.subr.bf16.mxu0 0
      %405 = vmatpush1.bf16.xpose.msra.mxu0 0
      %406 = vmatprep.subr.bf16.mxu0 0
      %407 = vmatpush1.bf16.xpose.msra.mxu0 0
      %408 = vmatprep.subr.bf16.mxu0 0
      %409 = vmatpush1.bf16.xpose.msra.mxu0 0
      %410 = vmatprep.subr.bf16.mxu0 0
      %411 = vmatpush1.bf16.xpose.msra.mxu0 0
      %412 = vmatprep.subr.bf16.mxu0 0
      %413 = vmatpush1.bf16.xpose.msra.mxu0 0
      %414 = vmatprep.subr.bf16.mxu0 0
      %415 = vmatpush1.bf16.xpose.msra.mxu0 %v398
      %416 = vmatprep.subr.bf16.mxu0 0
      %417 = vmatpush2.bf16.xpose.msra.mxu0 0
      %418 = vmatprep.subr.bf16.mxu0 0
      %419 = vmatpush2.bf16.xpose.msra.mxu0 0
      %420 = vmatprep.subr.bf16.mxu0 0
      %421 = vmatpush2.bf16.xpose.msra.mxu0 0
      %422 = vmatprep.subr.bf16.mxu0 0
      %423 = vmatpush2.bf16.xpose.msra.mxu0 0
      %424 = vmatprep.subr.bf16.mxu0 0
      %425 = vmatpush2.bf16.xpose.msra.mxu0 0
      %426 = vmatprep.subr.bf16.mxu0 0
      %427 = vmatpush2.bf16.xpose.msra.mxu0 0
      %428 = vmatprep.subr.bf16.mxu0 0
      %429 = vmatpush2.bf16.xpose.msra.mxu0 0
      %430 = vmatprep.subr.bf16.mxu0 0
      %431 = vmatpush2.bf16.xpose.msra.mxu0 0
      %432 = vmatprep.mubr.bf16.mxu0 0
      %433 = vmatmul.mubr.bf16.gmra.mxu0 %v395
      %v434 = vpop.f32.mrf.mxu0
      %v435 = vadd.f32 0.0, %v434
      %v436 = vpop.f32.mrf.mxu0
      %v437 = vpop.f32.mrf.mxu0
      %v438 = vpop.f32.mrf.mxu0
      %439 = vdwg.mxu0
      %v440 = vmul.f32 %v435, 0.35355338
      %v441 = vsel %vm215, %v440, -1e+10
      %v442 = vsel %vm162, %v441, -inf
      %443 = vmax.xlane.f32.xlu0 %v442
      %v444 = vpop.xlane.xlu0 %443
      %v445 = vsub.f32 %v441, %v444
      %v446 = vmul.f32 %v445, 1.442695
      %v447 = vpow.pop %v446
      %v448 = vsel %vm162, %v447, 0.0
      %449 = vadd.xlane.f32.xlu0 %v448
      %v450 = vpop.xlane.xlu0 %449
      %v451 = vrcp.pop %v450
      %v452 = vmul.f32 %v447, %v451
      %v453 = vpack.c.bf16 %v452, %v452
      %454 = vrot.lane.b32.xlu0 %v159, 48
      %v455 = vpop.permute.xlu0 %454
      %v457 = vsel %vm162, %v453, 0
      %v460 = vsel %vm234, %v455, 0
      %462 = vmatprep.subr.bf16.mxu0 0
      %463 = vmatpush1.bf16.msra.mxu0 0
      %464 = vmatprep.subr.bf16.mxu0 0
      %465 = vmatpush1.bf16.msra.mxu0 0
      %466 = vmatprep.subr.bf16.mxu0 0
      %467 = vmatpush1.bf16.msra.mxu0 0
      %468 = vmatprep.subr.bf16.mxu0 0
      %469 = vmatpush1.bf16.msra.mxu0 0
      %470 = vmatprep.subr.bf16.mxu0 0
      %471 = vmatpush1.bf16.msra.mxu0 0
      %472 = vmatprep.subr.bf16.mxu0 0
      %473 = vmatpush1.bf16.msra.mxu0 0
      %474 = vmatprep.subr.bf16.mxu0 0
      %475 = vmatpush1.bf16.msra.mxu0 0
      %476 = vmatprep.subr.bf16.mxu0 0
      %477 = vmatpush1.bf16.msra.mxu0 %v460
      %478 = vmatprep.subr.bf16.mxu0 0
      %479 = vmatpush2.bf16.msra.mxu0 0
      %480 = vmatprep.subr.bf16.mxu0 0
      %481 = vmatpush2.bf16.msra.mxu0 0
      %482 = vmatprep.subr.bf16.mxu0 0
      %483 = vmatpush2.bf16.msra.mxu0 0
      %484 = vmatprep.subr.bf16.mxu0 0
      %485 = vmatpush2.bf16.msra.mxu0 0
      %486 = vmatprep.subr.bf16.mxu0 0
      %487 = vmatpush2.bf16.msra.mxu0 0
      %488 = vmatprep.subr.bf16.mxu0 0
      %489 = vmatpush2.bf16.msra.mxu0 0
      %490 = vmatprep.subr.bf16.mxu0 0
      %491 = vmatpush2.bf16.msra.mxu0 0
      %492 = vmatprep.subr.bf16.mxu0 0
      %493 = vmatpush2.bf16.msra.mxu0 0
      %494 = vmatprep.mubr.bf16.mxu0 0
      %495 = vmatmul.mubr.bf16.gmra.mxu0 %v457
      %v496 = vpop.f32.mrf.mxu0
      %v497 = vadd.f32 0.0, %v496
      %v498 = vpop.f32.mrf.mxu0
      %v499 = vpop.f32.mrf.mxu0
      %v500 = vpop.f32.mrf.mxu0
      %501 = vdwg.mxu0
      %502 = vrot.lane.b32.xlu0 %v159, 104
      %v503 = vpop.permute.xlu0 %502
      %504 = vrot.lane.b32.xlu0 %v159, 72
      %v505 = vpop.permute.xlu0 %504
      %v507 = vsel %vm162, %v503, 0
      %v510 = vsel %vm162, %v505, 0
      %512 = vmatprep.subr.bf16.mxu0 0
      %513 = vmatpush1.bf16.xpose.msra.mxu0 0
      %514 = vmatprep.subr.bf16.mxu0 0
      %515 = vmatpush1.bf16.xpose.msra.mxu0 0
      %516 = vmatprep.subr.bf16.mxu0 0
      %517 = vmatpush1.bf16.xpose.msra.mxu0 0
      %518 = vmatprep.subr.bf16.mxu0 0
      %519 = vmatpush1.bf16.xpose.msra.mxu0 0
      %520 = vmatprep.subr.bf16.mxu0 0
      %521 = vmatpush1.bf16.xpose.msra.mxu0 0
      %522 = vmatprep.subr.bf16.mxu0 0
      %523 = vmatpush1.bf16.xpose.msra.mxu0 0
      %524 = vmatprep.subr.bf16.mxu0 0
      %525 = vmatpush1.bf16.xpose.msra.mxu0 0
      %526 = vmatprep.subr.bf16.mxu0 0
      %527 = vmatpush1.bf16.xpose.msra.mxu0 %v510
      %528 = vmatprep.subr.bf16.mxu0 0
      %529 = vmatpush2.bf16.xpose.msra.mxu0 0
      %530 = vmatprep.subr.bf16.mxu0 0
      %531 = vmatpush2.bf16.xpose.msra.mxu0 0
      %532 = vmatprep.subr.bf16.mxu0 0
      %533 = vmatpush2.bf16.xpose.msra.mxu0 0
      %534 = vmatprep.subr.bf16.mxu0 0
      %535 = vmatpush2.bf16.xpose.msra.mxu0 0
      %536 = vmatprep.subr.bf16.mxu0 0
      %537 = vmatpush2.bf16.xpose.msra.mxu0 0
      %538 = vmatprep.subr.bf16.mxu0 0
      %539 = vmatpush2.bf16.xpose.msra.mxu0 0
      %540 = vmatprep.subr.bf16.mxu0 0
      %541 = vmatpush2.bf16.xpose.msra.mxu0 0
      %542 = vmatprep.subr.bf16.mxu0 0
      %543 = vmatpush2.bf16.xpose.msra.mxu0 0
      %544 = vmatprep.mubr.bf16.mxu0 0
      %545 = vmatmul.mubr.bf16.gmra.mxu0 %v507
      %v546 = vpop.f32.mrf.mxu0
      %v547 = vadd.f32 0.0, %v546
      %v548 = vpop.f32.mrf.mxu0
      %v549 = vpop.f32.mrf.mxu0
      %v550 = vpop.f32.mrf.mxu0
      %551 = vdwg.mxu0
      %v552 = vmul.f32 %v547, 0.35355338
      %v553 = vsel %vm215, %v552, -1e+10
      %v554 = vsel %vm162, %v553, -inf
      %555 = vmax.xlane.f32.xlu0 %v554
      %v556 = vpop.xlane.xlu0 %555
      %v557 = vsub.f32 %v553, %v556
      %v558 = vmul.f32 %v557, 1.442695
      %v559 = vpow.pop %v558
      %v560 = vsel %vm162, %v559, 0.0
      %561 = vadd.xlane.f32.xlu0 %v560
      %v562 = vpop.xlane.xlu0 %561
      %v563 = vrcp.pop %v562
      %v564 = vmul.f32 %v559, %v563
      %v565 = vpack.c.bf16 %v564, %v564
      %566 = vrot.lane.b32.xlu0 %v159, 40
      %v567 = vpop.permute.xlu0 %566
      %v569 = vsel %vm162, %v565, 0
      %v572 = vsel %vm234, %v567, 0
      %574 = vmatprep.subr.bf16.mxu0 0
      %575 = vmatpush1.bf16.msra.mxu0 0
      %576 = vmatprep.subr.bf16.mxu0 0
      %577 = vmatpush1.bf16.msra.mxu0 0
      %578 = vmatprep.subr.bf16.mxu0 0
      %579 = vmatpush1.bf16.msra.mxu0 0
      %580 = vmatprep.subr.bf16.mxu0 0
      %581 = vmatpush1.bf16.msra.mxu0 0
      %582 = vmatprep.subr.bf16.mxu0 0
      %583 = vmatpush1.bf16.msra.mxu0 0
      %584 = vmatprep.subr.bf16.mxu0 0
      %585 = vmatpush1.bf16.msra.mxu0 0
      %586 = vmatprep.subr.bf16.mxu0 0
      %587 = vmatpush1.bf16.msra.mxu0 0
      %588 = vmatprep.subr.bf16.mxu0 0
      %589 = vmatpush1.bf16.msra.mxu0 %v572
      %590 = vmatprep.subr.bf16.mxu0 0
      %591 = vmatpush2.bf16.msra.mxu0 0
      %592 = vmatprep.subr.bf16.mxu0 0
      %593 = vmatpush2.bf16.msra.mxu0 0
      %594 = vmatprep.subr.bf16.mxu0 0
      %595 = vmatpush2.bf16.msra.mxu0 0
      %596 = vmatprep.subr.bf16.mxu0 0
      %597 = vmatpush2.bf16.msra.mxu0 0
      %598 = vmatprep.subr.bf16.mxu0 0
      %599 = vmatpush2.bf16.msra.mxu0 0
      %600 = vmatprep.subr.bf16.mxu0 0
      %601 = vmatpush2.bf16.msra.mxu0 0
      %602 = vmatprep.subr.bf16.mxu0 0
      %603 = vmatpush2.bf16.msra.mxu0 0
      %604 = vmatprep.subr.bf16.mxu0 0
      %605 = vmatpush2.bf16.msra.mxu0 0
      %606 = vmatprep.mubr.bf16.mxu0 0
      %607 = vmatmul.mubr.bf16.gmra.mxu0 %v569
      %v608 = vpop.f32.mrf.mxu0
      %v609 = vadd.f32 0.0, %v608
      %v610 = vpop.f32.mrf.mxu0
      %v611 = vpop.f32.mrf.mxu0
      %v612 = vpop.f32.mrf.mxu0
      %613 = vdwg.mxu0
      %615 = vrot.lane.b32.xlu0 %v385, 8
      %v616 = vpop.permute.xlu0 %615
      %619 = vrot.lane.b32.xlu0 %v497, 16
      %v620 = vpop.permute.xlu0 %619
      %623 = vrot.lane.b32.xlu0 %v609, 24
      %v624 = vpop.permute.xlu0 %623
      %v626 = vsel %vm162, %v273, %v616
      %vm627 = vcmask 130048
      %v628 = vsel %vm627, %v626, %v620
      %vm629 = vcmask 195584
      %v630 = vsel %vm629, %v628, %v624
      %v631 = vpack.c.bf16 %v630, %v630
      %vm632 = vcmask 257024
      %633 = vst.msk [vmem:[%s152] sm:$0xf] %vm632, %v631
      %p634 = scmp.lt.s32.totalorder %s13, 1
      %s635 = scalar_select %p634, %s13, 1
      %s636 = smul.addr %s635, 4
      %s637 = scalar_lea.vmem %s2, %s636
      // Predicated region
      $region29: #{seq2seq_forward.26} parent=27 // pred_check
        %p638 = pneg %p83
      $region30: #{seq2seq_forward.26} parent=27 // pred_check_branch
        %640 = sbr.rel (%p638) target = $region32
      $region31: #{seq2seq_forward.26} parent=27 // pred_region
        _
      $region32: #{seq2seq_forward.26} parent=27 // pred_fallthru
        _
    $region28: #{seq2seq_forward.26} parent=5 // pred_fallthru
      _
    %p641 = scmp.le.s32.totalorder 2, %s8
    // Predicated region
    $region33: #{seq2seq_forward.26} parent=5 // pred_check
      %p642 = pneg %p641
    $region34: #{seq2seq_forward.26} parent=5 // pred_check_branch
      %644 = sbr.rel (%p642) target = $region36
    $region35: #{seq2seq_forward.26} parent=5 // pred_region
      %s645 = ssub.s32 %s8, 2
      // Predicated region
      $region37: #{seq2seq_forward.26} parent=35 // pred_check
        %p646 = pneg %p89
      $region38: #{seq2seq_forward.26} parent=35 // pred_check_branch
        %648 = sbr.rel (%p646) target = $region40
      $region39: #{seq2seq_forward.26} parent=35 // pred_region
        %p649 = scmp.lt.s32.totalorder %s14, 1
        %s650 = scalar_select %p649, %s14, 1
        %s651 = smul.addr %s650, 4
        %s652 = scalar_lea.vmem %s2, %s651
      $region40: #{seq2seq_forward.26} parent=35 // pred_fallthru
        _
    $region36: #{seq2seq_forward.26} parent=5 // pred_fallthru
      _
  $region6: #{seq2seq_forward.26} parent=0 // loop_footer
    %s12 = sadd.s32 1, %s8
  $region7: #{seq2seq_forward.26} parent=0 // loop_footer_branch
    %7 = sbr.rel target = $region3
  $region8: #{seq2seq_forward.26} parent=0 // loop_exit
    _

// kernel: seq2seq_forward.37
$region0: #{seq2seq_forward.37}
  #allocation0 [shape = 'u32[]', space=smem, size = 0x4, offset = 0x4, fixed_abs, tag = 'smem constant byte address 0x4 - core index']
  #allocation1 [shape = 'u32[144,128]{1,0:T(1,128)}', space=vmem, size = 0x12000, scoped, tag = 'internal scratch']
  %s0 = inlined_call_operand.vmem [shape: f32[16,32], index: 0, kind: input, shape index: {}]
  %s1 = inlined_call_operand.vmem [shape: bf16[32,64], index: 1, kind: input, shape index: {}]
  %s2 = inlined_call_operand.vmem [shape: f32[1,64], index: 2, kind: input, shape index: {}]
  %s3 = inlined_call_operand.vmem [shape: bf16[16,64], index: 3, kind: output, shape index: {}]
  %s4 = sld [smem:[#allocation0]]
  $region22: #{seq2seq_forward.37} parent=0
    _
  %s6 = ssub.s32 1, %s4
  %s7 = scalar_select 0, %s6, %s4
  // Predicated region
  $region2: #{seq2seq_forward.37} parent=0 // pred_check
    _
  $region3: #{seq2seq_forward.37} parent=0 // pred_check_branch
    %9 = sbr.rel (0) target = $region5
  $region4: #{seq2seq_forward.37} parent=0 // pred_region
    _
  $region5: #{seq2seq_forward.37} parent=0 // pred_fallthru
    _
  // Predicated region
  $region6: #{seq2seq_forward.37} parent=0 // pred_check
    _
  $region7: #{seq2seq_forward.37} parent=0 // pred_check_branch
    %11 = sbr.rel (0) target = $region9
  $region8: #{seq2seq_forward.37} parent=0 // pred_region
    _
  $region9: #{seq2seq_forward.37} parent=0 // pred_fallthru
    _
  // Predicated region
  $region10: #{seq2seq_forward.37} parent=0 // pred_check
    _
  $region11: #{seq2seq_forward.37} parent=0 // pred_check_branch
    %13 = sbr.rel (0) target = $region13
  $region12: #{seq2seq_forward.37} parent=0 // pred_region
    _
  $region13: #{seq2seq_forward.37} parent=0 // pred_fallthru
    _
  %v15 = vld [vmem:[%s0] sm:$0xff]
  %v16 = vld [vmem:[%s0 + $0x8] sm:$0xff]
  %v17 = vpack.c.bf16 %v16, %v15
  %v18 = vld [vmem:[%s1] sm:$0xf]
  %v19 = vld [vmem:[%s1 + $0x4] sm:$0xf]
  %v20 = vld [vmem:[%s1 + $0x8] sm:$0xf]
  %v21 = vld [vmem:[%s1 + $0xc] sm:$0xf]
  %v22 = vld [vmem:[%s2] sm:$0x1]
  %v24 = vlaneseq
  %v25 = vshrl.u32 %v24, 7
  %v26 = vsub.s32 0, %v25
  %v27 = vrot.slane %v22, %v26
  %v33 = vunpack.c.l.b16 %v18
  %v34 = vunpack.c.l.b16 %v19
  %v35 = vunpack.c.l.b16 %v20
  %v36 = vunpack.c.l.b16 %v21
  %v37 = vpack.c.b16 %v34, %v33
  %v38 = vpack.c.b16 %v36, %v35
  %vm41 = vcmask 261120
  %v43 = vsel %vm41, %v17, 0
  %45 = vmatprep.subr.bf16.mxu0 0
  %46 = vmatpush1.bf16.msra.mxu0 0
  %47 = vmatprep.subr.bf16.mxu0 0
  %48 = vmatpush1.bf16.msra.mxu0 0
  %49 = vmatprep.subr.bf16.mxu0 0
  %50 = vmatpush1.bf16.msra.mxu0 0
  %51 = vmatprep.subr.bf16.mxu0 0
  %52 = vmatpush1.bf16.msra.mxu0 0
  %53 = vmatprep.subr.bf16.mxu0 0
  %54 = vmatpush1.bf16.msra.mxu0 0
  %55 = vmatprep.subr.bf16.mxu0 0
  %56 = vmatpush1.bf16.msra.mxu0 0
  %57 = vmatprep.subr.bf16.mxu0 0
  %58 = vmatpush1.bf16.msra.mxu0 %v38
  %59 = vmatprep.subr.bf16.mxu0 0
  %60 = vmatpush1.bf16.msra.mxu0 %v37
  %61 = vmatprep.subr.bf16.mxu0 0
  %62 = vmatpush2.bf16.msra.mxu0 0
  %63 = vmatprep.subr.bf16.mxu0 0
  %64 = vmatpush2.bf16.msra.mxu0 0
  %65 = vmatprep.subr.bf16.mxu0 0
  %66 = vmatpush2.bf16.msra.mxu0 0
  %67 = vmatprep.subr.bf16.mxu0 0
  %68 = vmatpush2.bf16.msra.mxu0 0
  %69 = vmatprep.subr.bf16.mxu0 0
  %70 = vmatpush2.bf16.msra.mxu0 0
  %71 = vmatprep.subr.bf16.mxu0 0
  %72 = vmatpush2.bf16.msra.mxu0 0
  %73 = vmatprep.subr.bf16.mxu0 0
  %74 = vmatpush2.bf16.msra.mxu0 0
  %75 = vmatprep.subr.bf16.mxu0 0
  %76 = vmatpush2.bf16.msra.mxu0 0
  %77 = vmatprep.mubr.bf16.mxu0 0
  %78 = vmatmul.mubr.bf16.gmra.mxu0 %v43
  %v79 = vpop.f32.mrf.mxu0
  %v80 = vadd.f32 %v27, %v79
  %v81 = vpop.f32.mrf.mxu0
  %v82 = vpop.f32.mrf.mxu0
  %v83 = vadd.f32 %v27, %v82
  %v84 = vpop.f32.mrf.mxu0
  %85 = vdwg.mxu0
  %v86 = vpack.c.bf16 %v83, %v80
  %v88 = vunpack.c.l.b16 %v86
  %v89 = vunpack.c.h.b16 %v86
  %v90 = vpack.c.b16 %v88, %v88
  %v91 = vpack.c.b16 %v89, %v89
  %vm94 = vcmask 519168
  %95 = vst.msk [vmem:[%s3] sm:$0xf] %vm94, %v90
  %96 = vst.msk [vmem:[%s3 + $0x4] sm:$0xf] %vm94, %v91
  // Predicated region
  $region14: #{seq2seq_forward.37} parent=0 // pred_check
    _
  $region15: #{seq2seq_forward.37} parent=0 // pred_check_branch
    %98 = sbr.rel (0) target = $region17
  $region16: #{seq2seq_forward.37} parent=0 // pred_region
    _
  $region17: #{seq2seq_forward.37} parent=0 // pred_fallthru
    _
  // Predicated region
  $region18: #{seq2seq_forward.37} parent=0 // pred_check
    _
  $region19: #{seq2seq_forward.37} parent=0 // pred_check_branch
    %100 = sbr.rel (0) target = $region21
  $region20: #{seq2seq_forward.37} parent=0 // pred_region
    _
  $region21: #{seq2seq_forward.37} parent=0 // pred_fallthru
    _

// kernel: seq2seq_forward.34
$region0: #{seq2seq_forward.34}
  #allocation0 [shape = 'u32[]', space=smem, size = 0x4, offset = 0x4, fixed_abs, tag = 'smem constant byte address 0x4 - core index']
  #allocation1 [shape = 'u32[144,128]{1,0:T(1,128)}', space=vmem, size = 0x12000, scoped, tag = 'internal scratch']
  %s0 = inlined_call_operand.vmem [shape: bf16[2,8,96], index: 0, kind: input, shape index: {}]
  %s1 = inlined_call_operand.vmem [shape: f32[2,1,8], index: 1, kind: input, shape index: {}]
  %s2 = inlined_call_operand.vmem [shape: bf16[2,8,32], index: 2, kind: output, shape index: {}]
  %s3 = sld [smem:[#allocation0]]
  $region41: #{seq2seq_forward.34} parent=0
    _
  %s5 = ssub.s32 1, %s3
  %s6 = scalar_select 0, %s5, %s3
  loop: start=0, step=1, limit=4
  $region2: #{seq2seq_forward.34} parent=0 // loop_pre_header
    _
  $region3: #{seq2seq_forward.34} parent=0 // loop_header
    %s8 = sphi 0, %s12
    %p9 = scmp.ge.s32.totalorder %s8, 4
    %s18 = sphi 0, %s20
    %s21 = sphi 0, %s18
    %s22 = sphi 0, %s21
    %s38 = sphi 0, %s22
    %s44 = sphi 0, %s46
    %s47 = sphi 0, %s44
    %s48 = sphi 0, %s47
    %s64 = sphi 0, %s48
    %s70 = sphi 0, %s72
    %s73 = sphi 0, %s70
    %s74 = sphi 0, %s73
    %s90 = sphi 0, %s74
  $region4: #{seq2seq_forward.34} parent=0 // loop_header_branch
    %11 = sbr.rel (%p9) target = $region8
  $region5: #{seq2seq_forward.34} parent=0 // loop_body
    %s13 = ssub.s32 %s8, 1
    %s14 = ssub.s32 %s8, 2
    %s15 = sadd.s32 %s8, 1
    %s16 = ssub.s32 %s8, %s15
    %p17 = scmp.eq.s32.totalorder %s16, 0
    %s19 = sadd.s32 %s18, 1
    %s20 = scalar_select %p17, %s18, %s19
    %p23 = pneg %p17
    %p24 = scmp.eq.s32.totalorder %s8, 1
    %p25 = por %p23, %p24
    %p26 = scmp.ne.s32.totalorder %s18, %s21
    %p27 = scmp.eq.s32.totalorder %s8, 0
    %p28 = por %p26, %p27
    %p29 = scmp.ne.s32.totalorder %s18, %s21
    %p30 = scmp.eq.s32.totalorder %s13, 1
    %p31 = por %p29, %p30
    %p32 = scmp.ne.s32.totalorder %s21, %s22
    %p33 = scmp.eq.s32.totalorder %s13, 0
    %p34 = por %p32, %p33
    %p35 = scmp.ne.s32.totalorder %s21, %s22
    %p36 = scmp.eq.s32.totalorder %s14, 1
    %p37 = por %p35, %p36
    %p39 = scmp.ne.s32.totalorder %s22, %s38
    %p40 = scmp.eq.s32.totalorder %s14, 0
    %p41 = por %p39, %p40
    %s42 = ssub.s32 %s8, %s15
    %p43 = scmp.eq.s32.totalorder %s42, 0
    %s45 = sadd.s32 %s44, 1
    %s46 = scalar_select %p43, %s44, %s45
    %p49 = pneg %p43
    %p50 = scmp.eq.s32.totalorder %s8, 1
    %p51 = por %p49, %p50
    %p52 = scmp.ne.s32.totalorder %s44, %s47
    %p53 = scmp.eq.s32.totalorder %s8, 0
    %p54 = por %p52, %p53
    %p55 = scmp.ne.s32.totalorder %s44, %s47
    %p56 = scmp.eq.s32.totalorder %s13, 1
    %p57 = por %p55, %p56
    %p58 = scmp.ne.s32.totalorder %s47, %s48
    %p59 = scmp.eq.s32.totalorder %s13, 0
    %p60 = por %p58, %p59
    %p61 = scmp.ne.s32.totalorder %s47, %s48
    %p62 = scmp.eq.s32.totalorder %s14, 1
    %p63 = por %p61, %p62
    %p65 = scmp.ne.s32.totalorder %s48, %s64
    %p66 = scmp.eq.s32.totalorder %s14, 0
    %p67 = por %p65, %p66
    %s68 = ssub.s32 %s8, %s15
    %p69 = scmp.eq.s32.totalorder %s68, 0
    %s71 = sadd.s32 %s70, 1
    %s72 = scalar_select %p69, %s70, %s71
    %p75 = pneg %p69
    %p76 = scmp.eq.s32.totalorder %s8, 1
    %p77 = por %p75, %p76
    %p78 = scmp.ne.s32.totalorder %s70, %s73
    %p79 = scmp.eq.s32.totalorder %s8, 0
    %p80 = por %p78, %p79
    %p81 = scmp.ne.s32.totalorder %s70, %s73
    %p82 = scmp.eq.s32.totalorder %s13, 1
    %p83 = por %p81, %p82
    %p84 = scmp.ne.s32.totalorder %s73, %s74
    %p85 = scmp.eq.s32.totalorder %s13, 0
    %p86 = por %p84, %p85
    %p87 = scmp.ne.s32.totalorder %s73, %s74
    %p88 = scmp.eq.s32.totalorder %s14, 1
    %p89 = por %p87, %p88
    %p91 = scmp.ne.s32.totalorder %s74, %s90
    %p92 = scmp.eq.s32.totalorder %s14, 0
    %p93 = por %p91, %p92
    %p94 = scmp.le.s32.totalorder 1, %s8
    %p95 = scmp.lt.s32.totalorder %s8, 3
    %p96 = pnand %p94, %p95
    %p97 = pneg %p96
    // Predicated region
    $region9: #{seq2seq_forward.34} parent=5 // pred_check
      _
    $region10: #{seq2seq_forward.34} parent=5 // pred_check_branch
      %99 = sbr.rel (%p96) target = $region12
    $region11: #{seq2seq_forward.34} parent=5 // pred_region
      %s100 = ssub.s32 %s8, 1
    $region12: #{seq2seq_forward.34} parent=5 // pred_fallthru
      _
    %p101 = scmp.lt.s32.totalorder %s8, 2
    // Predicated region
    $region13: #{seq2seq_forward.34} parent=5 // pred_check
      %p102 = pneg %p101
    $region14: #{seq2seq_forward.34} parent=5 // pred_check_branch
      %104 = sbr.rel (%p102) target = $region16
    $region15: #{seq2seq_forward.34} parent=5 // pred_region
      // Predicated region
      $region17: #{seq2seq_forward.34} parent=15 // pred_check
        %p105 = pneg %p28
      $region18: #{seq2seq_forward.34} parent=15 // pred_check_branch
        %107 = sbr.rel (%p105) target = $region20
      $region19: #{seq2seq_forward.34} parent=15 // pred_region
        %p108 = scmp.lt.s32.totalorder %s8, 1
        %s109 = scalar_select %p108, %s8, 1
        %s110 = smul.addr %s109, 4
        %s111 = scalar_lea.vmem %s0, %s110
      $region20: #{seq2seq_forward.34} parent=15 // pred_fallthru
        _
      // Predicated region
      $region21: #{seq2seq_forward.34} parent=15 // pred_check
        %p112 = pneg %p54
      $region22: #{seq2seq_forward.34} parent=15 // pred_check_branch
        %114 = sbr.rel (%p112) target = $region24
      $region23: #{seq2seq_forward.34} parent=15 // pred_region
        %p115 = scmp.lt.s32.totalorder %s8, 1
        %s116 = scalar_select %p115, %s8, 1
        %s117 = scalar_lea.vmem %s1, %s116
      $region24: #{seq2seq_forward.34} parent=15 // pred_fallthru
        _
    $region16: #{seq2seq_forward.34} parent=5 // pred_fallthru
      _
    %p118 = scmp.le.s32.totalorder 1, %s8
    %p119 = scmp.lt.s32.totalorder %s8, 3
    %p120 = pnand %p118, %p119
    %p121 = pneg %p120
    // Predicated region
    $region25: #{seq2seq_forward.34} parent=5 // pred_check
      _
    $region26: #{seq2seq_forward.34} parent=5 // pred_check_branch
      %123 = sbr.rel (%p120) target = $region28
    $region27: #{seq2seq_forward.34} parent=5 // pred_region
      %s124 = ssub.s32 %s8, 1
      %p125 = scmp.lt.s32.totalorder %s13, 1
      %s126 = scalar_select %p125, %s13, 1
      %s127 = smul.addr %s126, 4
      %s128 = scalar_lea.vmem %s0, %s127
      %p129 = pneg %p34
      %p130 = pneg %p31
      %p131 = scmp.lt.s32.totalorder %s13, 1
      %s132 = scalar_select %p131, %s13, 1
      %s133 = scalar_lea.vmem %s1, %s132
      %p134 = pneg %p60
      %p135 = pneg %p57
      %p136 = pneg %p86
      %p137 = pneg %p83
      %p138 = scmp.lt.s32.totalorder %s13, 1
      %s139 = scalar_select %p138, %s13, 1
      %s140 = smul.addr %s139, 4
      %s141 = scalar_lea.vmem %s2, %s140
      %p142 = scmp.lt.s32.totalorder %s13, 1
      %s143 = scalar_select %p142, %s13, 1
      %s144 = smul.addr %s143, 4
      %s145 = scalar_lea.vmem %s0, %s144
      %p146 = scmp.lt.s32.totalorder %s13, 1
      %s147 = scalar_select %p146, %s13, 1
      %s148 = scalar_lea.vmem %s1, %s147
      %p149 = scmp.lt.s32.totalorder %s13, 1
      %s150 = scalar_select %p149, %s13, 1
      %s151 = smul.addr %s150, 4
      %s152 = scalar_lea.vmem %s2, %s151
      %v154 = vld [vmem:[%s145] sm:$0xf]
      %v155 = vld [vmem:[%s148] sm:$0x1]
      %vm156 = vcmp.gt.f32.partialorder %v155, 0.0
      %v157 = vlaneseq
      %v158 = vshrl.u32 %v157, 7
      %v159 = vlaneseq
      %v160 = vand.u32 %v159, 127
      %vm161 = vcmp.ge.s32.totalorder %v158, %v160
      %v162 = vsel %vm156, 1, 0
      %v163 = vlaneseq
      %v164 = vshrl.u32 %v163, 7
      %v165 = vsub.s32 0, %v164
      %v166 = vrot.slane %v162, %v165
      %vm167 = vcmp.eq.s32.totalorder %v166, 1
      %vm168 = vmand %vm167, %vm161
      %v170 = vunpack.c.l.b16 %v154
      %v171 = vpack.c.b16 %v170, %v170
      %172 = vrot.lane.b32.xlu0 %v171, 96
      %v173 = vpop.permute.xlu0 %172
      %vm174 = vcmask 64512
      %v176 = vsel %vm174, %v154, 0
      %v179 = vsel %vm174, %v173, 0
      %181 = vmatprep.subr.bf16.mxu0 0
      %182 = vmatpush1.bf16.xpose.msra.mxu0 0
      %183 = vmatprep.subr.bf16.mxu0 0
      %184 = vmatpush1.bf16.xpose.msra.mxu0 0
      %185 = vmatprep.subr.bf16.mxu0 0
      %186 = vmatpush1.bf16.xpose.msra.mxu0 0
      %187 = vmatprep.subr.bf16.mxu0 0
      %188 = vmatpush1.bf16.xpose.msra.mxu0 0
      %189 = vmatprep.subr.bf16.mxu0 0
      %190 = vmatpush1.bf16.xpose.msra.mxu0 0
      %191 = vmatprep.subr.bf16.mxu0 0
      %192 = vmatpush1.bf16.xpose.msra.mxu0 0
      %193 = vmatprep.subr.bf16.mxu0 0
      %194 = vmatpush1.bf16.xpose.msra.mxu0 0
      %195 = vmatprep.subr.bf16.mxu0 0
      %196 = vmatpush1.bf16.xpose.msra.mxu0 %v179
      %197 = vmatprep.subr.bf16.mxu0 0
      %198 = vmatpush2.bf16.xpose.msra.mxu0 0
      %199 = vmatprep.subr.bf16.mxu0 0
      %200 = vmatpush2.bf16.xpose.msra.mxu0 0
      %201 = vmatprep.subr.bf16.mxu0 0
      %202 = vmatpush2.bf16.xpose.msra.mxu0 0
      %203 = vmatprep.subr.bf16.mxu0 0
      %204 = vmatpush2.bf16.xpose.msra.mxu0 0
      %205 = vmatprep.subr.bf16.mxu0 0
      %206 = vmatpush2.bf16.xpose.msra.mxu0 0
      %207 = vmatprep.subr.bf16.mxu0 0
      %208 = vmatpush2.bf16.xpose.msra.mxu0 0
      %209 = vmatprep.subr.bf16.mxu0 0
      %210 = vmatpush2.bf16.xpose.msra.mxu0 0
      %211 = vmatprep.subr.bf16.mxu0 0
      %212 = vmatpush2.bf16.xpose.msra.mxu0 0
      %213 = vmatprep.mubr.bf16.mxu0 0
      %214 = vmatmul.mubr.bf16.gmra.mxu0 %v176
      %v215 = vpop.f32.mrf.mxu0
      %v216 = vadd.f32 0.0, %v215
      %v217 = vpop.f32.mrf.mxu0
      %v218 = vpop.f32.mrf.mxu0
      %v219 = vpop.f32.mrf.mxu0
      %220 = vdwg.mxu0
      %v221 = vmul.f32 %v216, 0.35355338
      %v222 = vsel %vm168, %v221, -1e+10
      %v223 = vsel %vm174, %v222, -inf
      %224 = vmax.xlane.f32.xlu0 %v223
      %v225 = vpop.xlane.xlu0 %224
      %v226 = vsub.f32 %v222, %v225
      %v227 = vmul.f32 %v226, 1.442695
      %v228 = vpow.pop %v227
      %v229 = vsel %vm174, %v228, 0.0
      %230 = vadd.xlane.f32.xlu0 %v229
      %v231 = vpop.xlane.xlu0 %230
      %v232 = vrcp.pop %v231
      %v233 = vmul.f32 %v228, %v232
      %v234 = vpack.c.bf16 %v233, %v233
      %235 = vrot.lane.b32.xlu0 %v171, 64
      %v236 = vpop.permute.xlu0 %235
      %v238 = vsel %vm174, %v234, 0
      %vm240 = vcmask 1043456
      %v242 = vsel %vm240, %v236, 0
      %244 = vmatprep.subr.bf16.mxu0 0
      %245 = vmatpush1.bf16.msra.mxu0 0
      %246 = vmatprep.subr.bf16.mxu0 0
      %247 = vmatpush1.bf16.msra.mxu0 0
      %248 = vmatprep.subr.bf16.mxu0 0
      %249 = vmatpush1.bf16.msra.mxu0 0
      %250 = vmatprep.subr.bf16.mxu0 0
      %251 = vmatpush1.bf16.msra.mxu0 0
      %252 = vmatprep.subr.bf16.mxu0 0
      %253 = vmatpush1.bf16.msra.mxu0 0
      %254 = vmatprep.subr.bf16.mxu0 0
      %255 = vmatpush1.bf16.msra.mxu0 0
      %256 = vmatprep.subr.bf16.mxu0 0
      %257 = vmatpush1.bf16.msra.mxu0 0
      %258 = vmatprep.subr.bf16.mxu0 0
      %259 = vmatpush1.bf16.msra.mxu0 %v242
      %260 = vmatprep.subr.bf16.mxu0 0
      %261 = vmatpush2.bf16.msra.mxu0 0
      %262 = vmatprep.subr.bf16.mxu0 0
      %263 = vmatpush2.bf16.msra.mxu0 0
      %264 = vmatprep.subr.bf16.mxu0 0
      %265 = vmatpush2.bf16.msra.mxu0 0
      %266 = vmatprep.subr.bf16.mxu0 0
      %267 = vmatpush2.bf16.msra.mxu0 0
      %268 = vmatprep.subr.bf16.mxu0 0
      %269 = vmatpush2.bf16.msra.mxu0 0
      %270 = vmatprep.subr.bf16.mxu0 0
      %271 = vmatpush2.bf16.msra.mxu0 0
      %272 = vmatprep.subr.bf16.mxu0 0
      %273 = vmatpush2.bf16.msra.mxu0 0
      %274 = vmatprep.subr.bf16.mxu0 0
      %275 = vmatpush2.bf16.msra.mxu0 0
      %276 = vmatprep.mubr.bf16.mxu0 0
      %277 = vmatmul.mubr.bf16.gmra.mxu0 %v238
      %v278 = vpop.f32.mrf.mxu0
      %v279 = vadd.f32 0.0, %v278
      %v280 = vpop.f32.mrf.mxu0
      %v281 = vpop.f32.mrf.mxu0
      %v282 = vpop.f32.mrf.mxu0
      %283 = vdwg.mxu0
      %284 = vrot.lane.b32.xlu0 %v171, 120
      %v285 = vpop.permute.xlu0 %284
      %286 = vrot.lane.b32.xlu0 %v171, 88
      %v287 = vpop.permute.xlu0 %286
      %v289 = vsel %vm174, %v285, 0
      %v292 = vsel %vm174, %v287, 0
      %294 = vmatprep.subr.bf16.mxu0 0
      %295 = vmatpush1.bf16.xpose.msra.mxu0 0
      %296 = vmatprep.subr.bf16.mxu0 0
      %297 = vmatpush1.bf16.xpose.msra.mxu0 0
      %298 = vmatprep.subr.bf16.mxu0 0
      %299 = vmatpush1.bf16.xpose.msra.mxu0 0
      %300 = vmatprep.subr.bf16.mxu0 0
      %301 = vmatpush1.bf16.xpose.msra.mxu0 0
      %302 = vmatprep.subr.bf16.mxu0 0
      %303 = vmatpush1.bf16.xpose.msra.mxu0 0
      %304 = vmatprep.subr.bf16.mxu0 0
      %305 = vmatpush1.bf16.xpose.msra.mxu0 0
      %306 = vmatprep.subr.bf16.mxu0 0
      %307 = vmatpush1.bf16.xpose.msra.mxu0 0
      %308 = vmatprep.subr.bf16.mxu0 0
      %309 = vmatpush1.bf16.xpose.msra.mxu0 %v292
      %310 = vmatprep.subr.bf16.mxu0 0
      %311 = vmatpush2.bf16.xpose.msra.mxu0 0
      %312 = vmatprep.subr.bf16.mxu0 0
      %313 = vmatpush2.bf16.xpose.msra.mxu0 0
      %314 = vmatprep.subr.bf16.mxu0 0
      %315 = vmatpush2.bf16.xpose.msra.mxu0 0
      %316 = vmatprep.subr.bf16.mxu0 0
      %317 = vmatpush2.bf16.xpose.msra.mxu0 0
      %318 = vmatprep.subr.bf16.mxu0 0
      %319 = vmatpush2.bf16.xpose.msra.mxu0 0
      %320 = vmatprep.subr.bf16.mxu0 0
      %321 = vmatpush2.bf16.xpose.msra.mxu0 0
      %322 = vmatprep.subr.bf16.mxu0 0
      %323 = vmatpush2.bf16.xpose.msra.mxu0 0
      %324 = vmatprep.subr.bf16.mxu0 0
      %325 = vmatpush2.bf16.xpose.msra.mxu0 0
      %326 = vmatprep.mubr.bf16.mxu0 0
      %327 = vmatmul.mubr.bf16.gmra.mxu0 %v289
      %v328 = vpop.f32.mrf.mxu0
      %v329 = vadd.f32 0.0, %v328
      %v330 = vpop.f32.mrf.mxu0
      %v331 = vpop.f32.mrf.mxu0
      %v332 = vpop.f32.mrf.mxu0
      %333 = vdwg.mxu0
      %v334 = vmul.f32 %v329, 0.35355338
      %v335 = vsel %vm168, %v334, -1e+10
      %v336 = vsel %vm174, %v335, -inf
      %337 = vmax.xlane.f32.xlu0 %v336
      %v338 = vpop.xlane.xlu0 %337
      %v339 = vsub.f32 %v335, %v338
      %v340 = vmul.f32 %v339, 1.442695
      %v341 = vpow.pop %v340
      %v342 = vsel %vm174, %v341, 0.0
      %343 = vadd.xlane.f32.xlu0 %v342
      %v344 = vpop.xlane.xlu0 %343
      %v345 = vrcp.pop %v344
      %v346 = vmul.f32 %v341, %v345
      %v347 = vpack.c.bf16 %v346, %v346
      %348 = vrot.lane.b32.xlu0 %v171, 56
      %v349 = vpop.permute.xlu0 %348
      %v351 = vsel %vm174, %v347, 0
      %v354 = vsel %vm240, %v349, 0
      %356 = vmatprep.subr.bf16.mxu0 0
      %357 = vmatpush1.bf16.msra.mxu0 0
      %358 = vmatprep.subr.bf16.mxu0 0
      %359 = vmatpush1.bf16.msra.mxu0 0
      %360 = vmatprep.subr.bf16.mxu0 0
      %361 = vmatpush1.bf16.msra.mxu0 0
      %362 = vmatprep.subr.bf16.mxu0 0
      %363 = vmatpush1.bf16.msra.mxu0 0
      %364 = vmatprep.subr.bf16.mxu0 0
      %365 = vmatpush1.bf16.msra.mxu0 0
      %366 = vmatprep.subr.bf16.mxu0 0
      %367 = vmatpush1.bf16.msra.mxu0 0
      %368 = vmatprep.subr.bf16.mxu0 0
      %369 = vmatpush1.bf16.msra.mxu0 0
      %370 = vmatprep.subr.bf16.mxu0 0
      %371 = vmatpush1.bf16.msra.mxu0 %v354
      %372 = vmatprep.subr.bf16.mxu0 0
      %373 = vmatpush2.bf16.msra.mxu0 0
      %374 = vmatprep.subr.bf16.mxu0 0
      %375 = vmatpush2.bf16.msra.mxu0 0
      %376 = vmatprep.subr.bf16.mxu0 0
      %377 = vmatpush2.bf16.msra.mxu0 0
      %378 = vmatprep.subr.bf16.mxu0 0
      %379 = vmatpush2.bf16.msra.mxu0 0
      %380 = vmatprep.subr.bf16.mxu0 0
      %381 = vmatpush2.bf16.msra.mxu0 0
      %382 = vmatprep.subr.bf16.mxu0 0
      %383 = vmatpush2.bf16.msra.mxu0 0
      %384 = vmatprep.subr.bf16.mxu0 0
      %385 = vmatpush2.bf16.msra.mxu0 0
      %386 = vmatprep.subr.bf16.mxu0 0
      %387 = vmatpush2.bf16.msra.mxu0 0
      %388 = vmatprep.mubr.bf16.mxu0 0
      %389 = vmatmul.mubr.bf16.gmra.mxu0 %v351
      %v390 = vpop.f32.mrf.mxu0
      %v391 = vadd.f32 0.0, %v390
      %v392 = vpop.f32.mrf.mxu0
      %v393 = vpop.f32.mrf.mxu0
      %v394 = vpop.f32.mrf.mxu0
      %395 = vdwg.mxu0
      %396 = vrot.lane.b32.xlu0 %v171, 112
      %v397 = vpop.permute.xlu0 %396
      %398 = vrot.lane.b32.xlu0 %v171, 80
      %v399 = vpop.permute.xlu0 %398
      %v401 = vsel %vm174, %v397, 0
      %v404 = vsel %vm174, %v399, 0
      %406 = vmatprep.subr.bf16.mxu0 0
      %407 = vmatpush1.bf16.xpose.msra.mxu0 0
      %408 = vmatprep.subr.bf16.mxu0 0
      %409 = vmatpush1.bf16.xpose.msra.mxu0 0
      %410 = vmatprep.subr.bf16.mxu0 0
      %411 = vmatpush1.bf16.xpose.msra.mxu0 0
      %412 = vmatprep.subr.bf16.mxu0 0
      %413 = vmatpush1.bf16.xpose.msra.mxu0 0
      %414 = vmatprep.subr.bf16.mxu0 0
      %415 = vmatpush1.bf16.xpose.msra.mxu0 0
      %416 = vmatprep.subr.bf16.mxu0 0
      %417 = vmatpush1.bf16.xpose.msra.mxu0 0
      %418 = vmatprep.subr.bf16.mxu0 0
      %419 = vmatpush1.bf16.xpose.msra.mxu0 0
      %420 = vmatprep.subr.bf16.mxu0 0
      %421 = vmatpush1.bf16.xpose.msra.mxu0 %v404
      %422 = vmatprep.subr.bf16.mxu0 0
      %423 = vmatpush2.bf16.xpose.msra.mxu0 0
      %424 = vmatprep.subr.bf16.mxu0 0
      %425 = vmatpush2.bf16.xpose.msra.mxu0 0
      %426 = vmatprep.subr.bf16.mxu0 0
      %427 = vmatpush2.bf16.xpose.msra.mxu0 0
      %428 = vmatprep.subr.bf16.mxu0 0
      %429 = vmatpush2.bf16.xpose.msra.mxu0 0
      %430 = vmatprep.subr.bf16.mxu0 0
      %431 = vmatpush2.bf16.xpose.msra.mxu0 0
      %432 = vmatprep.subr.bf16.mxu0 0
      %433 = vmatpush2.bf16.xpose.msra.mxu0 0
      %434 = vmatprep.subr.bf16.mxu0 0
      %435 = vmatpush2.bf16.xpose.msra.mxu0 0
      %436 = vmatprep.subr.bf16.mxu0 0
      %437 = vmatpush2.bf16.xpose.msra.mxu0 0
      %438 = vmatprep.mubr.bf16.mxu0 0
      %439 = vmatmul.mubr.bf16.gmra.mxu0 %v401
      %v440 = vpop.f32.mrf.mxu0
      %v441 = vadd.f32 0.0, %v440
      %v442 = vpop.f32.mrf.mxu0
      %v443 = vpop.f32.mrf.mxu0
      %v444 = vpop.f32.mrf.mxu0
      %445 = vdwg.mxu0
      %v446 = vmul.f32 %v441, 0.35355338
      %v447 = vsel %vm168, %v446, -1e+10
      %v448 = vsel %vm174, %v447, -inf
      %449 = vmax.xlane.f32.xlu0 %v448
      %v450 = vpop.xlane.xlu0 %449
      %v451 = vsub.f32 %v447, %v450
      %v452 = vmul.f32 %v451, 1.442695
      %v453 = vpow.pop %v452
      %v454 = vsel %vm174, %v453, 0.0
      %455 = vadd.xlane.f32.xlu0 %v454
      %v456 = vpop.xlane.xlu0 %455
      %v457 = vrcp.pop %v456
      %v458 = vmul.f32 %v453, %v457
      %v459 = vpack.c.bf16 %v458, %v458
      %460 = vrot.lane.b32.xlu0 %v171, 48
      %v461 = vpop.permute.xlu0 %460
      %v463 = vsel %vm174, %v459, 0
      %v466 = vsel %vm240, %v461, 0
      %468 = vmatprep.subr.bf16.mxu0 0
      %469 = vmatpush1.bf16.msra.mxu0 0
      %470 = vmatprep.subr.bf16.mxu0 0
      %471 = vmatpush1.bf16.msra.mxu0 0
      %472 = vmatprep.subr.bf16.mxu0 0
      %473 = vmatpush1.bf16.msra.mxu0 0
      %474 = vmatprep.subr.bf16.mxu0 0
      %475 = vmatpush1.bf16.msra.mxu0 0
      %476 = vmatprep.subr.bf16.mxu0 0
      %477 = vmatpush1.bf16.msra.mxu0 0
      %478 = vmatprep.subr.bf16.mxu0 0
      %479 = vmatpush1.bf16.msra.mxu0 0
      %480 = vmatprep.subr.bf16.mxu0 0
      %481 = vmatpush1.bf16.msra.mxu0 0
      %482 = vmatprep.subr.bf16.mxu0 0
      %483 = vmatpush1.bf16.msra.mxu0 %v466
      %484 = vmatprep.subr.bf16.mxu0 0
      %485 = vmatpush2.bf16.msra.mxu0 0
      %486 = vmatprep.subr.bf16.mxu0 0
      %487 = vmatpush2.bf16.msra.mxu0 0
      %488 = vmatprep.subr.bf16.mxu0 0
      %489 = vmatpush2.bf16.msra.mxu0 0
      %490 = vmatprep.subr.bf16.mxu0 0
      %491 = vmatpush2.bf16.msra.mxu0 0
      %492 = vmatprep.subr.bf16.mxu0 0
      %493 = vmatpush2.bf16.msra.mxu0 0
      %494 = vmatprep.subr.bf16.mxu0 0
      %495 = vmatpush2.bf16.msra.mxu0 0
      %496 = vmatprep.subr.bf16.mxu0 0
      %497 = vmatpush2.bf16.msra.mxu0 0
      %498 = vmatprep.subr.bf16.mxu0 0
      %499 = vmatpush2.bf16.msra.mxu0 0
      %500 = vmatprep.mubr.bf16.mxu0 0
      %501 = vmatmul.mubr.bf16.gmra.mxu0 %v463
      %v502 = vpop.f32.mrf.mxu0
      %v503 = vadd.f32 0.0, %v502
      %v504 = vpop.f32.mrf.mxu0
      %v505 = vpop.f32.mrf.mxu0
      %v506 = vpop.f32.mrf.mxu0
      %507 = vdwg.mxu0
      %508 = vrot.lane.b32.xlu0 %v171, 104
      %v509 = vpop.permute.xlu0 %508
      %510 = vrot.lane.b32.xlu0 %v171, 72
      %v511 = vpop.permute.xlu0 %510
      %v513 = vsel %vm174, %v509, 0
      %v516 = vsel %vm174, %v511, 0
      %518 = vmatprep.subr.bf16.mxu0 0
      %519 = vmatpush1.bf16.xpose.msra.mxu0 0
      %520 = vmatprep.subr.bf16.mxu0 0
      %521 = vmatpush1.bf16.xpose.msra.mxu0 0
      %522 = vmatprep.subr.bf16.mxu0 0
      %523 = vmatpush1.bf16.xpose.msra.mxu0 0
      %524 = vmatprep.subr.bf16.mxu0 0
      %525 = vmatpush1.bf16.xpose.msra.mxu0 0
      %526 = vmatprep.subr.bf16.mxu0 0
      %527 = vmatpush1.bf16.xpose.msra.mxu0 0
      %528 = vmatprep.subr.bf16.mxu0 0
      %529 = vmatpush1.bf16.xpose.msra.mxu0 0
      %530 = vmatprep.subr.bf16.mxu0 0
      %531 = vmatpush1.bf16.xpose.msra.mxu0 0
      %532 = vmatprep.subr.bf16.mxu0 0
      %533 = vmatpush1.bf16.xpose.msra.mxu0 %v516
      %534 = vmatprep.subr.bf16.mxu0 0
      %535 = vmatpush2.bf16.xpose.msra.mxu0 0
      %536 = vmatprep.subr.bf16.mxu0 0
      %537 = vmatpush2.bf16.xpose.msra.mxu0 0
      %538 = vmatprep.subr.bf16.mxu0 0
      %539 = vmatpush2.bf16.xpose.msra.mxu0 0
      %540 = vmatprep.subr.bf16.mxu0 0
      %541 = vmatpush2.bf16.xpose.msra.mxu0 0
      %542 = vmatprep.subr.bf16.mxu0 0
      %543 = vmatpush2.bf16.xpose.msra.mxu0 0
      %544 = vmatprep.subr.bf16.mxu0 0
      %545 = vmatpush2.bf16.xpose.msra.mxu0 0
      %546 = vmatprep.subr.bf16.mxu0 0
      %547 = vmatpush2.bf16.xpose.msra.mxu0 0
      %548 = vmatprep.subr.bf16.mxu0 0
      %549 = vmatpush2.bf16.xpose.msra.mxu0 0
      %550 = vmatprep.mubr.bf16.mxu0 0
      %551 = vmatmul.mubr.bf16.gmra.mxu0 %v513
      %v552 = vpop.f32.mrf.mxu0
      %v553 = vadd.f32 0.0, %v552
      %v554 = vpop.f32.mrf.mxu0
      %v555 = vpop.f32.mrf.mxu0
      %v556 = vpop.f32.mrf.mxu0
      %557 = vdwg.mxu0
      %v558 = vmul.f32 %v553, 0.35355338
      %v559 = vsel %vm168, %v558, -1e+10
      %v560 = vsel %vm174, %v559, -inf
      %561 = vmax.xlane.f32.xlu0 %v560
      %v562 = vpop.xlane.xlu0 %561
      %v563 = vsub.f32 %v559, %v562
      %v564 = vmul.f32 %v563, 1.442695
      %v565 = vpow.pop %v564
      %v566 = vsel %vm174, %v565, 0.0
      %567 = vadd.xlane.f32.xlu0 %v566
      %v568 = vpop.xlane.xlu0 %567
      %v569 = vrcp.pop %v568
      %v570 = vmul.f32 %v565, %v569
      %v571 = vpack.c.bf16 %v570, %v570
      %572 = vrot.lane.b32.xlu0 %v171, 40
      %v573 = vpop.permute.xlu0 %572
      %v575 = vsel %vm174, %v571, 0
      %v578 = vsel %vm240, %v573, 0
      %580 = vmatprep.subr.bf16.mxu0 0
      %581 = vmatpush1.bf16.msra.mxu0 0
      %582 = vmatprep.subr.bf16.mxu0 0
      %583 = vmatpush1.bf16.msra.mxu0 0
      %584 = vmatprep.subr.bf16.mxu0 0
      %585 = vmatpush1.bf16.msra.mxu0 0
      %586 = vmatprep.subr.bf16.mxu0 0
      %587 = vmatpush1.bf16.msra.mxu0 0
      %588 = vmatprep.subr.bf16.mxu0 0
      %589 = vmatpush1.bf16.msra.mxu0 0
      %590 = vmatprep.subr.bf16.mxu0 0
      %591 = vmatpush1.bf16.msra.mxu0 0
      %592 = vmatprep.subr.bf16.mxu0 0
      %593 = vmatpush1.bf16.msra.mxu0 0
      %594 = vmatprep.subr.bf16.mxu0 0
      %595 = vmatpush1.bf16.msra.mxu0 %v578
      %596 = vmatprep.subr.bf16.mxu0 0
      %597 = vmatpush2.bf16.msra.mxu0 0
      %598 = vmatprep.subr.bf16.mxu0 0
      %599 = vmatpush2.bf16.msra.mxu0 0
      %600 = vmatprep.subr.bf16.mxu0 0
      %601 = vmatpush2.bf16.msra.mxu0 0
      %602 = vmatprep.subr.bf16.mxu0 0
      %603 = vmatpush2.bf16.msra.mxu0 0
      %604 = vmatprep.subr.bf16.mxu0 0
      %605 = vmatpush2.bf16.msra.mxu0 0
      %606 = vmatprep.subr.bf16.mxu0 0
      %607 = vmatpush2.bf16.msra.mxu0 0
      %608 = vmatprep.subr.bf16.mxu0 0
      %609 = vmatpush2.bf16.msra.mxu0 0
      %610 = vmatprep.subr.bf16.mxu0 0
      %611 = vmatpush2.bf16.msra.mxu0 0
      %612 = vmatprep.mubr.bf16.mxu0 0
      %613 = vmatmul.mubr.bf16.gmra.mxu0 %v575
      %v614 = vpop.f32.mrf.mxu0
      %v615 = vadd.f32 0.0, %v614
      %v616 = vpop.f32.mrf.mxu0
      %v617 = vpop.f32.mrf.mxu0
      %v618 = vpop.f32.mrf.mxu0
      %619 = vdwg.mxu0
      %621 = vrot.lane.b32.xlu0 %v391, 8
      %v622 = vpop.permute.xlu0 %621
      %625 = vrot.lane.b32.xlu0 %v503, 16
      %v626 = vpop.permute.xlu0 %625
      %629 = vrot.lane.b32.xlu0 %v615, 24
      %v630 = vpop.permute.xlu0 %629
      %v632 = vsel %vm174, %v279, %v622
      %vm633 = vcmask 130048
      %v634 = vsel %vm633, %v632, %v626
      %vm635 = vcmask 195584
      %v636 = vsel %vm635, %v634, %v630
      %v637 = vpack.c.bf16 %v636, %v636
      %vm638 = vcmask 257024
      %639 = vst.msk [vmem:[%s152] sm:$0xf] %vm638, %v637
      %p640 = scmp.lt.s32.totalorder %s13, 1
      %s641 = scalar_select %p640, %s13, 1
      %s642 = smul.addr %s641, 4
      %s643 = scalar_lea.vmem %s2, %s642
      // Predicated region
      $region29: #{seq2seq_forward.34} parent=27 // pred_check
        %p644 = pneg %p83
      $region30: #{seq2seq_forward.34} parent=27 // pred_check_branch
        %646 = sbr.rel (%p644) target = $region32
      $region31: #{seq2seq_forward.34} parent=27 // pred_region
        _
      $region32: #{seq2seq_forward.34} parent=27 // pred_fallthru
        _
    $region28: #{seq2seq_forward.34} parent=5 // pred_fallthru
      _
    %p647 = scmp.le.s32.totalorder 2, %s8
    // Predicated region
    $region33: #{seq2seq_forward.34} parent=5 // pred_check
      %p648 = pneg %p647
    $region34: #{seq2seq_forward.34} parent=5 // pred_check_branch
      %650 = sbr.rel (%p648) target = $region36
    $region35: #{seq2seq_forward.34} parent=5 // pred_region
      %s651 = ssub.s32 %s8, 2
      // Predicated region
      $region37: #{seq2seq_forward.34} parent=35 // pred_check
        %p652 = pneg %p89
      $region38: #{seq2seq_forward.34} parent=35 // pred_check_branch
        %654 = sbr.rel (%p652) target = $region40
      $region39: #{seq2seq_forward.34} parent=35 // pred_region
        %p655 = scmp.lt.s32.totalorder %s14, 1
        %s656 = scalar_select %p655, %s14, 1
        %s657 = smul.addr %s656, 4
        %s658 = scalar_lea.vmem %s2, %s657
      $region40: #{seq2seq_forward.34} parent=35 // pred_fallthru
        _
    $region36: #{seq2seq_forward.34} parent=5 // pred_fallthru
      _
  $region6: #{seq2seq_forward.34} parent=0 // loop_footer
    %s12 = sadd.s32 1, %s8
  $region7: #{seq2seq_forward.34} parent=0 // loop_footer_branch
    %7 = sbr.rel target = $region3
  $region8: #{seq2seq_forward.34} parent=0 // loop_exit
    _

// kernel: seq2seq_forward.36
$region0: #{seq2seq_forward.36}
  #allocation0 [shape = 'u32[]', space=smem, size = 0x4, offset = 0x4, fixed_abs, tag = 'smem constant byte address 0x4 - core index']
  #allocation1 [shape = 'u32[144,128]{1,0:T(1,128)}', space=vmem, size = 0x12000, scoped, tag = 'internal scratch']
  %s0 = inlined_call_operand.vmem [shape: f32[16,32], index: 0, kind: input, shape index: {}]
  %s1 = inlined_call_operand.vmem [shape: bf16[32,32], index: 1, kind: input, shape index: {}]
  %s2 = inlined_call_operand.vmem [shape: f32[1,32], index: 2, kind: input, shape index: {}]
  %s3 = inlined_call_operand.vmem [shape: bf16[16,32], index: 3, kind: output, shape index: {}]
  %s4 = sld [smem:[#allocation0]]
  $region22: #{seq2seq_forward.36} parent=0
    _
  %s6 = ssub.s32 1, %s4
  %s7 = scalar_select 0, %s6, %s4
  // Predicated region
  $region2: #{seq2seq_forward.36} parent=0 // pred_check
    _
  $region3: #{seq2seq_forward.36} parent=0 // pred_check_branch
    %9 = sbr.rel (0) target = $region5
  $region4: #{seq2seq_forward.36} parent=0 // pred_region
    _
  $region5: #{seq2seq_forward.36} parent=0 // pred_fallthru
    _
  // Predicated region
  $region6: #{seq2seq_forward.36} parent=0 // pred_check
    _
  $region7: #{seq2seq_forward.36} parent=0 // pred_check_branch
    %11 = sbr.rel (0) target = $region9
  $region8: #{seq2seq_forward.36} parent=0 // pred_region
    _
  $region9: #{seq2seq_forward.36} parent=0 // pred_fallthru
    _
  // Predicated region
  $region10: #{seq2seq_forward.36} parent=0 // pred_check
    _
  $region11: #{seq2seq_forward.36} parent=0 // pred_check_branch
    %13 = sbr.rel (0) target = $region13
  $region12: #{seq2seq_forward.36} parent=0 // pred_region
    _
  $region13: #{seq2seq_forward.36} parent=0 // pred_fallthru
    _
  %v15 = vld [vmem:[%s0] sm:$0xff]
  %v16 = vld [vmem:[%s0 + $0x8] sm:$0xff]
  %v17 = vpack.c.bf16 %v16, %v15
  %v18 = vld [vmem:[%s1] sm:$0xf]
  %v19 = vld [vmem:[%s1 + $0x4] sm:$0xf]
  %v20 = vld [vmem:[%s1 + $0x8] sm:$0xf]
  %v21 = vld [vmem:[%s1 + $0xc] sm:$0xf]
  %v22 = vld [vmem:[%s2] sm:$0x1]
  %v24 = vlaneseq
  %v25 = vshrl.u32 %v24, 7
  %v26 = vsub.s32 0, %v25
  %v27 = vrot.slane %v22, %v26
  %v33 = vunpack.c.l.b16 %v18
  %v34 = vunpack.c.l.b16 %v19
  %v35 = vunpack.c.l.b16 %v20
  %v36 = vunpack.c.l.b16 %v21
  %v37 = vpack.c.b16 %v34, %v33
  %v38 = vpack.c.b16 %v36, %v35
  %vm41 = vcmask 261120
  %v43 = vsel %vm41, %v17, 0
  %45 = vmatprep.subr.bf16.mxu0 0
  %46 = vmatpush1.bf16.msra.mxu0 0
  %47 = vmatprep.subr.bf16.mxu0 0
  %48 = vmatpush1.bf16.msra.mxu0 0
  %49 = vmatprep.subr.bf16.mxu0 0
  %50 = vmatpush1.bf16.msra.mxu0 0
  %51 = vmatprep.subr.bf16.mxu0 0
  %52 = vmatpush1.bf16.msra.mxu0 0
  %53 = vmatprep.subr.bf16.mxu0 0
  %54 = vmatpush1.bf16.msra.mxu0 0
  %55 = vmatprep.subr.bf16.mxu0 0
  %56 = vmatpush1.bf16.msra.mxu0 0
  %57 = vmatprep.subr.bf16.mxu0 0
  %58 = vmatpush1.bf16.msra.mxu0 %v38
  %59 = vmatprep.subr.bf16.mxu0 0
  %60 = vmatpush1.bf16.msra.mxu0 %v37
  %61 = vmatprep.subr.bf16.mxu0 0
  %62 = vmatpush2.bf16.msra.mxu0 0
  %63 = vmatprep.subr.bf16.mxu0 0
  %64 = vmatpush2.bf16.msra.mxu0 0
  %65 = vmatprep.subr.bf16.mxu0 0
  %66 = vmatpush2.bf16.msra.mxu0 0
  %67 = vmatprep.subr.bf16.mxu0 0
  %68 = vmatpush2.bf16.msra.mxu0 0
  %69 = vmatprep.subr.bf16.mxu0 0
  %70 = vmatpush2.bf16.msra.mxu0 0
  %71 = vmatprep.subr.bf16.mxu0 0
  %72 = vmatpush2.bf16.msra.mxu0 0
  %73 = vmatprep.subr.bf16.mxu0 0
  %74 = vmatpush2.bf16.msra.mxu0 0
  %75 = vmatprep.subr.bf16.mxu0 0
  %76 = vmatpush2.bf16.msra.mxu0 0
  %77 = vmatprep.mubr.bf16.mxu0 0
  %78 = vmatmul.mubr.bf16.gmra.mxu0 %v43
  %v79 = vpop.f32.mrf.mxu0
  %v80 = vadd.f32 %v27, %v79
  %v81 = vpop.f32.mrf.mxu0
  %v82 = vpop.f32.mrf.mxu0
  %v83 = vadd.f32 %v27, %v82
  %v84 = vpop.f32.mrf.mxu0
  %85 = vdwg.mxu0
  %v86 = vpack.c.bf16 %v83, %v80
  %v88 = vunpack.c.l.b16 %v86
  %v89 = vunpack.c.h.b16 %v86
  %v90 = vpack.c.b16 %v88, %v88
  %v91 = vpack.c.b16 %v89, %v89
  %vm94 = vcmask 257024
  %95 = vst.msk [vmem:[%s3] sm:$0xf] %vm94, %v90
  %96 = vst.msk [vmem:[%s3 + $0x4] sm:$0xf] %vm94, %v91
  // Predicated region
  $region14: #{seq2seq_forward.36} parent=0 // pred_check
    _
  $region15: #{seq2seq_forward.36} parent=0 // pred_check_branch
    %98 = sbr.rel (0) target = $region17
  $region16: #{seq2seq_forward.36} parent=0 // pred_region
    _
  $region17: #{seq2seq_forward.36} parent=0 // pred_fallthru
    _
  // Predicated region
  $region18: #{seq2seq_forward.36} parent=0 // pred_check
    _
  $region19: #{seq2seq_forward.36} parent=0 // pred_check_branch
    %100 = sbr.rel (0) target = $region21
  $region20: #{seq2seq_forward.36} parent=0 // pred_region
    _
  $region21: #{seq2seq_forward.36} parent=0 // pred_fallthru
    _

// kernel: seq2seq_forward.38
$region0: #{seq2seq_forward.38}
  #allocation0 [shape = 'u32[]', space=smem, size = 0x4, offset = 0x4, fixed_abs, tag = 'smem constant byte address 0x4 - core index']
  #allocation1 [shape = 'u32[144,128]{1,0:T(1,128)}', space=vmem, size = 0x12000, scoped, tag = 'internal scratch']
  %s0 = inlined_call_operand.vmem [shape: bf16[2,8,32], index: 0, kind: input, shape index: {}]
  %s1 = inlined_call_operand.vmem [shape: bf16[2,8,64], index: 1, kind: input, shape index: {}]
  %s2 = inlined_call_operand.vmem [shape: f32[2,1,8], index: 2, kind: input, shape index: {}]
  %s3 = inlined_call_operand.vmem [shape: bf16[2,8,32], index: 3, kind: output, shape index: {}]
  %s4 = sld [smem:[#allocation0]]
  $region45: #{seq2seq_forward.38} parent=0
    _
  %s6 = ssub.s32 1, %s4
  %s7 = scalar_select 0, %s6, %s4
  loop: start=0, step=1, limit=4
  $region2: #{seq2seq_forward.38} parent=0 // loop_pre_header
    _
  $region3: #{seq2seq_forward.38} parent=0 // loop_header
    %s9 = sphi 0, %s13
    %p10 = scmp.ge.s32.totalorder %s9, 4
    %s19 = sphi 0, %s21
    %s22 = sphi 0, %s19
    %s23 = sphi 0, %s22
    %s39 = sphi 0, %s23
    %s45 = sphi 0, %s47
    %s48 = sphi 0, %s45
    %s49 = sphi 0, %s48
    %s65 = sphi 0, %s49
    %s71 = sphi 0, %s73
    %s74 = sphi 0, %s71
    %s75 = sphi 0, %s74
    %s91 = sphi 0, %s75
    %s97 = sphi 0, %s99
    %s100 = sphi 0, %s97
    %s101 = sphi 0, %s100
    %s117 = sphi 0, %s101
  $region4: #{seq2seq_forward.38} parent=0 // loop_header_branch
    %12 = sbr.rel (%p10) target = $region8
  $region5: #{seq2seq_forward.38} parent=0 // loop_body
    %s14 = ssub.s32 %s9, 1
    %s15 = ssub.s32 %s9, 2
    %s16 = sadd.s32 %s9, 1
    %s17 = ssub.s32 %s9, %s16
    %p18 = scmp.eq.s32.totalorder %s17, 0
    %s20 = sadd.s32 %s19, 1
    %s21 = scalar_select %p18, %s19, %s20
    %p24 = pneg %p18
    %p25 = scmp.eq.s32.totalorder %s9, 1
    %p26 = por %p24, %p25
    %p27 = scmp.ne.s32.totalorder %s19, %s22
    %p28 = scmp.eq.s32.totalorder %s9, 0
    %p29 = por %p27, %p28
    %p30 = scmp.ne.s32.totalorder %s19, %s22
    %p31 = scmp.eq.s32.totalorder %s14, 1
    %p32 = por %p30, %p31
    %p33 = scmp.ne.s32.totalorder %s22, %s23
    %p34 = scmp.eq.s32.totalorder %s14, 0
    %p35 = por %p33, %p34
    %p36 = scmp.ne.s32.totalorder %s22, %s23
    %p37 = scmp.eq.s32.totalorder %s15, 1
    %p38 = por %p36, %p37
    %p40 = scmp.ne.s32.totalorder %s23, %s39
    %p41 = scmp.eq.s32.totalorder %s15, 0
    %p42 = por %p40, %p41
    %s43 = ssub.s32 %s9, %s16
    %p44 = scmp.eq.s32.totalorder %s43, 0
    %s46 = sadd.s32 %s45, 1
    %s47 = scalar_select %p44, %s45, %s46
    %p50 = pneg %p44
    %p51 = scmp.eq.s32.totalorder %s9, 1
    %p52 = por %p50, %p51
    %p53 = scmp.ne.s32.totalorder %s45, %s48
    %p54 = scmp.eq.s32.totalorder %s9, 0
    %p55 = por %p53, %p54
    %p56 = scmp.ne.s32.totalorder %s45, %s48
    %p57 = scmp.eq.s32.totalorder %s14, 1
    %p58 = por %p56, %p57
    %p59 = scmp.ne.s32.totalorder %s48, %s49
    %p60 = scmp.eq.s32.totalorder %s14, 0
    %p61 = por %p59, %p60
    %p62 = scmp.ne.s32.totalorder %s48, %s49
    %p63 = scmp.eq.s32.totalorder %s15, 1
    %p64 = por %p62, %p63
    %p66 = scmp.ne.s32.totalorder %s49, %s65
    %p67 = scmp.eq.s32.totalorder %s15, 0
    %p68 = por %p66, %p67
    %s69 = ssub.s32 %s9, %s16
    %p70 = scmp.eq.s32.totalorder %s69, 0
    %s72 = sadd.s32 %s71, 1
    %s73 = scalar_select %p70, %s71, %s72
    %p76 = pneg %p70
    %p77 = scmp.eq.s32.totalorder %s9, 1
    %p78 = por %p76, %p77
    %p79 = scmp.ne.s32.totalorder %s71, %s74
    %p80 = scmp.eq.s32.totalorder %s9, 0
    %p81 = por %p79, %p80
    %p82 = scmp.ne.s32.totalorder %s71, %s74
    %p83 = scmp.eq.s32.totalorder %s14, 1
    %p84 = por %p82, %p83
    %p85 = scmp.ne.s32.totalorder %s74, %s75
    %p86 = scmp.eq.s32.totalorder %s14, 0
    %p87 = por %p85, %p86
    %p88 = scmp.ne.s32.totalorder %s74, %s75
    %p89 = scmp.eq.s32.totalorder %s15, 1
    %p90 = por %p88, %p89
    %p92 = scmp.ne.s32.totalorder %s75, %s91
    %p93 = scmp.eq.s32.totalorder %s15, 0
    %p94 = por %p92, %p93
    %s95 = ssub.s32 %s9, %s16
    %p96 = scmp.eq.s32.totalorder %s95, 0
    %s98 = sadd.s32 %s97, 1
    %s99 = scalar_select %p96, %s97, %s98
    %p102 = pneg %p96
    %p103 = scmp.eq.s32.totalorder %s9, 1
    %p104 = por %p102, %p103
    %p105 = scmp.ne.s32.totalorder %s97, %s100
    %p106 = scmp.eq.s32.totalorder %s9, 0
    %p107 = por %p105, %p106
    %p108 = scmp.ne.s32.totalorder %s97, %s100
    %p109 = scmp.eq.s32.totalorder %s14, 1
    %p110 = por %p108, %p109
    %p111 = scmp.ne.s32.totalorder %s100, %s101
    %p112 = scmp.eq.s32.totalorder %s14, 0
    %p113 = por %p111, %p112
    %p114 = scmp.ne.s32.totalorder %s100, %s101
    %p115 = scmp.eq.s32.totalorder %s15, 1
    %p116 = por %p114, %p115
    %p118 = scmp.ne.s32.totalorder %s101, %s117
    %p119 = scmp.eq.s32.totalorder %s15, 0
    %p120 = por %p118, %p119
    %p121 = scmp.le.s32.totalorder 1, %s9
    %p122 = scmp.lt.s32.totalorder %s9, 3
    %p123 = pnand %p121, %p122
    %p124 = pneg %p123
    // Predicated region
    $region9: #{seq2seq_forward.38} parent=5 // pred_check
      _
    $region10: #{seq2seq_forward.38} parent=5 // pred_check_branch
      %126 = sbr.rel (%p123) target = $region12
    $region11: #{seq2seq_forward.38} parent=5 // pred_region
      %s127 = ssub.s32 %s9, 1
    $region12: #{seq2seq_forward.38} parent=5 // pred_fallthru
      _
    %p128 = scmp.lt.s32.totalorder %s9, 2
    // Predicated region
    $region13: #{seq2seq_forward.38} parent=5 // pred_check
      %p129 = pneg %p128
    $region14: #{seq2seq_forward.38} parent=5 // pred_check_branch
      %131 = sbr.rel (%p129) target = $region16
    $region15: #{seq2seq_forward.38} parent=5 // pred_region
      // Predicated region
      $region17: #{seq2seq_forward.38} parent=15 // pred_check
        %p132 = pneg %p29
      $region18: #{seq2seq_forward.38} parent=15 // pred_check_branch
        %134 = sbr.rel (%p132) target = $region20
      $region19: #{seq2seq_forward.38} parent=15 // pred_region
        %p135 = scmp.lt.s32.totalorder %s9, 1
        %s136 = scalar_select %p135, %s9, 1
        %s137 = smul.addr %s136, 4
        %s138 = scalar_lea.vmem %s0, %s137
      $region20: #{seq2seq_forward.38} parent=15 // pred_fallthru
        _
      // Predicated region
      $region21: #{seq2seq_forward.38} parent=15 // pred_check
        %p139 = pneg %p55
      $region22: #{seq2seq_forward.38} parent=15 // pred_check_branch
        %141 = sbr.rel (%p139) target = $region24
      $region23: #{seq2seq_forward.38} parent=15 // pred_region
        %p142 = scmp.lt.s32.totalorder %s9, 1
        %s143 = scalar_select %p142, %s9, 1
        %s144 = smul.addr %s143, 4
        %s145 = scalar_lea.vmem %s1, %s144
      $region24: #{seq2seq_forward.38} parent=15 // pred_fallthru
        _
      // Predicated region
      $region25: #{seq2seq_forward.38} parent=15 // pred_check
        %p146 = pneg %p81
      $region26: #{seq2seq_forward.38} parent=15 // pred_check_branch
        %148 = sbr.rel (%p146) target = $region28
      $region27: #{seq2seq_forward.38} parent=15 // pred_region
        %p149 = scmp.lt.s32.totalorder %s9, 1
        %s150 = scalar_select %p149, %s9, 1
        %s151 = scalar_lea.vmem %s2, %s150
      $region28: #{seq2seq_forward.38} parent=15 // pred_fallthru
        _
    $region16: #{seq2seq_forward.38} parent=5 // pred_fallthru
      _
    %p152 = scmp.le.s32.totalorder 1, %s9
    %p153 = scmp.lt.s32.totalorder %s9, 3
    %p154 = pnand %p152, %p153
    %p155 = pneg %p154
    // Predicated region
    $region29: #{seq2seq_forward.38} parent=5 // pred_check
      _
    $region30: #{seq2seq_forward.38} parent=5 // pred_check_branch
      %157 = sbr.rel (%p154) target = $region32
    $region31: #{seq2seq_forward.38} parent=5 // pred_region
      %s158 = ssub.s32 %s9, 1
      %p159 = scmp.lt.s32.totalorder %s14, 1
      %s160 = scalar_select %p159, %s14, 1
      %s161 = smul.addr %s160, 4
      %s162 = scalar_lea.vmem %s0, %s161
      %p163 = pneg %p35
      %p164 = pneg %p32
      %p165 = scmp.lt.s32.totalorder %s14, 1
      %s166 = scalar_select %p165, %s14, 1
      %s167 = smul.addr %s166, 4
      %s168 = scalar_lea.vmem %s1, %s167
      %p169 = pneg %p61
      %p170 = pneg %p58
      %p171 = scmp.lt.s32.totalorder %s14, 1
      %s172 = scalar_select %p171, %s14, 1
      %s173 = scalar_lea.vmem %s2, %s172
      %p174 = pneg %p87
      %p175 = pneg %p84
      %p176 = pneg %p113
      %p177 = pneg %p110
      %p178 = scmp.lt.s32.totalorder %s14, 1
      %s179 = scalar_select %p178, %s14, 1
      %s180 = smul.addr %s179, 4
      %s181 = scalar_lea.vmem %s3, %s180
      %p182 = scmp.lt.s32.totalorder %s14, 1
      %s183 = scalar_select %p182, %s14, 1
      %s184 = smul.addr %s183, 4
      %s185 = scalar_lea.vmem %s0, %s184
      %p186 = scmp.lt.s32.totalorder %s14, 1
      %s187 = scalar_select %p186, %s14, 1
      %s188 = smul.addr %s187, 4
      %s189 = scalar_lea.vmem %s1, %s188
      %p190 = scmp.lt.s32.totalorder %s14, 1
      %s191 = scalar_select %p190, %s14, 1
      %s192 = scalar_lea.vmem %s2, %s191
      %p193 = scmp.lt.s32.totalorder %s14, 1
      %s194 = scalar_select %p193, %s14, 1
      %s195 = smul.addr %s194, 4
      %s196 = scalar_lea.vmem %s3, %s195
      %v198 = vld [vmem:[%s185] sm:$0xf]
      %v199 = vld [vmem:[%s189] sm:$0xf]
      %v200 = vld [vmem:[%s192] sm:$0x1]
      %vm201 = vcmp.gt.f32.partialorder %v200, 0.0
      %vm202 = vcmask 64512
      %v204 = vsel %vm202, %v198, 0
      %v207 = vsel %vm202, %v199, 0
      %209 = vmatprep.subr.bf16.mxu0 0
      %210 = vmatpush1.bf16.xpose.msra.mxu0 0
      %211 = vmatprep.subr.bf16.mxu0 0
      %212 = vmatpush1.bf16.xpose.msra.mxu0 0
      %213 = vmatprep.subr.bf16.mxu0 0
      %214 = vmatpush1.bf16.xpose.msra.mxu0 0
      %215 = vmatprep.subr.bf16.mxu0 0
      %216 = vmatpush1.bf16.xpose.msra.mxu0 0
      %217 = vmatprep.subr.bf16.mxu0 0
      %218 = vmatpush1.bf16.xpose.msra.mxu0 0
      %219 = vmatprep.subr.bf16.mxu0 0
      %220 = vmatpush1.bf16.xpose.msra.mxu0 0
      %221 = vmatprep.subr.bf16.mxu0 0
      %222 = vmatpush1.bf16.xpose.msra.mxu0 0
      %223 = vmatprep.subr.bf16.mxu0 0
      %224 = vmatpush1.bf16.xpose.msra.mxu0 %v207
      %225 = vmatprep.subr.bf16.mxu0 0
      %226 = vmatpush2.bf16.xpose.msra.mxu0 0
      %227 = vmatprep.subr.bf16.mxu0 0
      %228 = vmatpush2.bf16.xpose.msra.mxu0 0
      %229 = vmatprep.subr.bf16.mxu0 0
      %230 = vmatpush2.bf16.xpose.msra.mxu0 0
      %231 = vmatprep.subr.bf16.mxu0 0
      %232 = vmatpush2.bf16.xpose.msra.mxu0 0
      %233 = vmatprep.subr.bf16.mxu0 0
      %234 = vmatpush2.bf16.xpose.msra.mxu0 0
      %235 = vmatprep.subr.bf16.mxu0 0
      %236 = vmatpush2.bf16.xpose.msra.mxu0 0
      %237 = vmatprep.subr.bf16.mxu0 0
      %238 = vmatpush2.bf16.xpose.msra.mxu0 0
      %239 = vmatprep.subr.bf16.mxu0 0
      %240 = vmatpush2.bf16.xpose.msra.mxu0 0
      %241 = vmatprep.mubr.bf16.mxu0 0
      %242 = vmatmul.mubr.bf16.gmra.mxu0 %v204
      %v243 = vpop.f32.mrf.mxu0
      %v244 = vadd.f32 0.0, %v243
      %v245 = vpop.f32.mrf.mxu0
      %v246 = vpop.f32.mrf.mxu0
      %v247 = vpop.f32.mrf.mxu0
      %248 = vdwg.mxu0
      %v249 = vmul.f32 %v244, 0.35355338
      %v250 = vsel %vm201, 1, 0
      %v251 = vlaneseq
      %v252 = vshrl.u32 %v251, 7
      %v253 = vsub.s32 0, %v252
      %v254 = vrot.slane %v250, %v253
      %vm255 = vcmp.eq.s32.totalorder %v254, 1
      %v256 = vsel %vm255, %v249, -1e+10
      %v257 = vsel %vm202, %v256, -inf
      %258 = vmax.xlane.f32.xlu0 %v257
      %v259 = vpop.xlane.xlu0 %258
      %v260 = vsub.f32 %v256, %v259
      %v261 = vmul.f32 %v260, 1.442695
      %v262 = vpow.pop %v261
      %v263 = vsel %vm202, %v262, 0.0
      %264 = vadd.xlane.f32.xlu0 %v263
      %v265 = vpop.xlane.xlu0 %264
      %v266 = vrcp.pop %v265
      %v267 = vmul.f32 %v262, %v266
      %v268 = vpack.c.bf16 %v267, %v267
      %v270 = vunpack.c.l.b16 %v199
      %v271 = vpack.c.b16 %v270, %v270
      %272 = vrot.lane.b32.xlu0 %v271, 96
      %v273 = vpop.permute.xlu0 %272
      %v275 = vsel %vm202, %v268, 0
      %vm277 = vcmask 1043456
      %v279 = vsel %vm277, %v273, 0
      %281 = vmatprep.subr.bf16.mxu0 0
      %282 = vmatpush1.bf16.msra.mxu0 0
      %283 = vmatprep.subr.bf16.mxu0 0
      %284 = vmatpush1.bf16.msra.mxu0 0
      %285 = vmatprep.subr.bf16.mxu0 0
      %286 = vmatpush1.bf16.msra.mxu0 0
      %287 = vmatprep.subr.bf16.mxu0 0
      %288 = vmatpush1.bf16.msra.mxu0 0
      %289 = vmatprep.subr.bf16.mxu0 0
      %290 = vmatpush1.bf16.msra.mxu0 0
      %291 = vmatprep.subr.bf16.mxu0 0
      %292 = vmatpush1.bf16.msra.mxu0 0
      %293 = vmatprep.subr.bf16.mxu0 0
      %294 = vmatpush1.bf16.msra.mxu0 0
      %295 = vmatprep.subr.bf16.mxu0 0
      %296 = vmatpush1.bf16.msra.mxu0 %v279
      %297 = vmatprep.subr.bf16.mxu0 0
      %298 = vmatpush2.bf16.msra.mxu0 0
      %299 = vmatprep.subr.bf16.mxu0 0
      %300 = vmatpush2.bf16.msra.mxu0 0
      %301 = vmatprep.subr.bf16.mxu0 0
      %302 = vmatpush2.bf16.msra.mxu0 0
      %303 = vmatprep.subr.bf16.mxu0 0
      %304 = vmatpush2.bf16.msra.mxu0 0
      %305 = vmatprep.subr.bf16.mxu0 0
      %306 = vmatpush2.bf16.msra.mxu0 0
      %307 = vmatprep.subr.bf16.mxu0 0
      %308 = vmatpush2.bf16.msra.mxu0 0
      %309 = vmatprep.subr.bf16.mxu0 0
      %310 = vmatpush2.bf16.msra.mxu0 0
      %311 = vmatprep.subr.bf16.mxu0 0
      %312 = vmatpush2.bf16.msra.mxu0 0
      %313 = vmatprep.mubr.bf16.mxu0 0
      %314 = vmatmul.mubr.bf16.gmra.mxu0 %v275
      %v315 = vpop.f32.mrf.mxu0
      %v316 = vadd.f32 0.0, %v315
      %v317 = vpop.f32.mrf.mxu0
      %v318 = vpop.f32.mrf.mxu0
      %v319 = vpop.f32.mrf.mxu0
      %320 = vdwg.mxu0
      %v322 = vunpack.c.l.b16 %v198
      %v323 = vpack.c.b16 %v322, %v322
      %324 = vrot.lane.b32.xlu0 %v323, 120
      %v325 = vpop.permute.xlu0 %324
      %326 = vrot.lane.b32.xlu0 %v271, 120
      %v327 = vpop.permute.xlu0 %326
      %v329 = vsel %vm202, %v325, 0
      %v332 = vsel %vm202, %v327, 0
      %334 = vmatprep.subr.bf16.mxu0 0
      %335 = vmatpush1.bf16.xpose.msra.mxu0 0
      %336 = vmatprep.subr.bf16.mxu0 0
      %337 = vmatpush1.bf16.xpose.msra.mxu0 0
      %338 = vmatprep.subr.bf16.mxu0 0
      %339 = vmatpush1.bf16.xpose.msra.mxu0 0
      %340 = vmatprep.subr.bf16.mxu0 0
      %341 = vmatpush1.bf16.xpose.msra.mxu0 0
      %342 = vmatprep.subr.bf16.mxu0 0
      %343 = vmatpush1.bf16.xpose.msra.mxu0 0
      %344 = vmatprep.subr.bf16.mxu0 0
      %345 = vmatpush1.bf16.xpose.msra.mxu0 0
      %346 = vmatprep.subr.bf16.mxu0 0
      %347 = vmatpush1.bf16.xpose.msra.mxu0 0
      %348 = vmatprep.subr.bf16.mxu0 0
      %349 = vmatpush1.bf16.xpose.msra.mxu0 %v332
      %350 = vmatprep.subr.bf16.mxu0 0
      %351 = vmatpush2.bf16.xpose.msra.mxu0 0
      %352 = vmatprep.subr.bf16.mxu0 0
      %353 = vmatpush2.bf16.xpose.msra.mxu0 0
      %354 = vmatprep.subr.bf16.mxu0 0
      %355 = vmatpush2.bf16.xpose.msra.mxu0 0
      %356 = vmatprep.subr.bf16.mxu0 0
      %357 = vmatpush2.bf16.xpose.msra.mxu0 0
      %358 = vmatprep.subr.bf16.mxu0 0
      %359 = vmatpush2.bf16.xpose.msra.mxu0 0
      %360 = vmatprep.subr.bf16.mxu0 0
      %361 = vmatpush2.bf16.xpose.msra.mxu0 0
      %362 = vmatprep.subr.bf16.mxu0 0
      %363 = vmatpush2.bf16.xpose.msra.mxu0 0
      %364 = vmatprep.subr.bf16.mxu0 0
      %365 = vmatpush2.bf16.xpose.msra.mxu0 0
      %366 = vmatprep.mubr.bf16.mxu0 0
      %367 = vmatmul.mubr.bf16.gmra.mxu0 %v329
      %v368 = vpop.f32.mrf.mxu0
      %v369 = vadd.f32 0.0, %v368
      %v370 = vpop.f32.mrf.mxu0
      %v371 = vpop.f32.mrf.mxu0
      %v372 = vpop.f32.mrf.mxu0
      %373 = vdwg.mxu0
      %v374 = vmul.f32 %v369, 0.35355338
      %v375 = vsel %vm255, %v374, -1e+10
      %v376 = vsel %vm202, %v375, -inf
      %377 = vmax.xlane.f32.xlu0 %v376
      %v378 = vpop.xlane.xlu0 %377
      %v379 = vsub.f32 %v375, %v378
      %v380 = vmul.f32 %v379, 1.442695
      %v381 = vpow.pop %v380
      %v382 = vsel %vm202, %v381, 0.0
      %383 = vadd.xlane.f32.xlu0 %v382
      %v384 = vpop.xlane.xlu0 %383
      %v385 = vrcp.pop %v384
      %v386 = vmul.f32 %v381, %v385
      %v387 = vpack.c.bf16 %v386, %v386
      %388 = vrot.lane.b32.xlu0 %v271, 88
      %v389 = vpop.permute.xlu0 %388
      %v391 = vsel %vm202, %v387, 0
      %v394 = vsel %vm277, %v389, 0
      %396 = vmatprep.subr.bf16.mxu0 0
      %397 = vmatpush1.bf16.msra.mxu0 0
      %398 = vmatprep.subr.bf16.mxu0 0
      %399 = vmatpush1.bf16.msra.mxu0 0
      %400 = vmatprep.subr.bf16.mxu0 0
      %401 = vmatpush1.bf16.msra.mxu0 0
      %402 = vmatprep.subr.bf16.mxu0 0
      %403 = vmatpush1.bf16.msra.mxu0 0
      %404 = vmatprep.subr.bf16.mxu0 0
      %405 = vmatpush1.bf16.msra.mxu0 0
      %406 = vmatprep.subr.bf16.mxu0 0
      %407 = vmatpush1.bf16.msra.mxu0 0
      %408 = vmatprep.subr.bf16.mxu0 0
      %409 = vmatpush1.bf16.msra.mxu0 0
      %410 = vmatprep.subr.bf16.mxu0 0
      %411 = vmatpush1.bf16.msra.mxu0 %v394
      %412 = vmatprep.subr.bf16.mxu0 0
      %413 = vmatpush2.bf16.msra.mxu0 0
      %414 = vmatprep.subr.bf16.mxu0 0
      %415 = vmatpush2.bf16.msra.mxu0 0
      %416 = vmatprep.subr.bf16.mxu0 0
      %417 = vmatpush2.bf16.msra.mxu0 0
      %418 = vmatprep.subr.bf16.mxu0 0
      %419 = vmatpush2.bf16.msra.mxu0 0
      %420 = vmatprep.subr.bf16.mxu0 0
      %421 = vmatpush2.bf16.msra.mxu0 0
      %422 = vmatprep.subr.bf16.mxu0 0
      %423 = vmatpush2.bf16.msra.mxu0 0
      %424 = vmatprep.subr.bf16.mxu0 0
      %425 = vmatpush2.bf16.msra.mxu0 0
      %426 = vmatprep.subr.bf16.mxu0 0
      %427 = vmatpush2.bf16.msra.mxu0 0
      %428 = vmatprep.mubr.bf16.mxu0 0
      %429 = vmatmul.mubr.bf16.gmra.mxu0 %v391
      %v430 = vpop.f32.mrf.mxu0
      %v431 = vadd.f32 0.0, %v430
      %v432 = vpop.f32.mrf.mxu0
      %v433 = vpop.f32.mrf.mxu0
      %v434 = vpop.f32.mrf.mxu0
      %435 = vdwg.mxu0
      %436 = vrot.lane.b32.xlu0 %v323, 112
      %v437 = vpop.permute.xlu0 %436
      %438 = vrot.lane.b32.xlu0 %v271, 112
      %v439 = vpop.permute.xlu0 %438
      %v441 = vsel %vm202, %v437, 0
      %v444 = vsel %vm202, %v439, 0
      %446 = vmatprep.subr.bf16.mxu0 0
      %447 = vmatpush1.bf16.xpose.msra.mxu0 0
      %448 = vmatprep.subr.bf16.mxu0 0
      %449 = vmatpush1.bf16.xpose.msra.mxu0 0
      %450 = vmatprep.subr.bf16.mxu0 0
      %451 = vmatpush1.bf16.xpose.msra.mxu0 0
      %452 = vmatprep.subr.bf16.mxu0 0
      %453 = vmatpush1.bf16.xpose.msra.mxu0 0
      %454 = vmatprep.subr.bf16.mxu0 0
      %455 = vmatpush1.bf16.xpose.msra.mxu0 0
      %456 = vmatprep.subr.bf16.mxu0 0
      %457 = vmatpush1.bf16.xpose.msra.mxu0 0
      %458 = vmatprep.subr.bf16.mxu0 0
      %459 = vmatpush1.bf16.xpose.msra.mxu0 0
      %460 = vmatprep.subr.bf16.mxu0 0
      %461 = vmatpush1.bf16.xpose.msra.mxu0 %v444
      %462 = vmatprep.subr.bf16.mxu0 0
      %463 = vmatpush2.bf16.xpose.msra.mxu0 0
      %464 = vmatprep.subr.bf16.mxu0 0
      %465 = vmatpush2.bf16.xpose.msra.mxu0 0
      %466 = vmatprep.subr.bf16.mxu0 0
      %467 = vmatpush2.bf16.xpose.msra.mxu0 0
      %468 = vmatprep.subr.bf16.mxu0 0
      %469 = vmatpush2.bf16.xpose.msra.mxu0 0
      %470 = vmatprep.subr.bf16.mxu0 0
      %471 = vmatpush2.bf16.xpose.msra.mxu0 0
      %472 = vmatprep.subr.bf16.mxu0 0
      %473 = vmatpush2.bf16.xpose.msra.mxu0 0
      %474 = vmatprep.subr.bf16.mxu0 0
      %475 = vmatpush2.bf16.xpose.msra.mxu0 0
      %476 = vmatprep.subr.bf16.mxu0 0
      %477 = vmatpush2.bf16.xpose.msra.mxu0 0
      %478 = vmatprep.mubr.bf16.mxu0 0
      %479 = vmatmul.mubr.bf16.gmra.mxu0 %v441
      %v480 = vpop.f32.mrf.mxu0
      %v481 = vadd.f32 0.0, %v480
      %v482 = vpop.f32.mrf.mxu0
      %v483 = vpop.f32.mrf.mxu0
      %v484 = vpop.f32.mrf.mxu0
      %485 = vdwg.mxu0
      %v486 = vmul.f32 %v481, 0.35355338
      %v487 = vsel %vm255, %v486, -1e+10
      %v488 = vsel %vm202, %v487, -inf
      %489 = vmax.xlane.f32.xlu0 %v488
      %v490 = vpop.xlane.xlu0 %489
      %v491 = vsub.f32 %v487, %v490
      %v492 = vmul.f32 %v491, 1.442695
      %v493 = vpow.pop %v492
      %v494 = vsel %vm202, %v493, 0.0
      %495 = vadd.xlane.f32.xlu0 %v494
      %v496 = vpop.xlane.xlu0 %495
      %v497 = vrcp.pop %v496
      %v498 = vmul.f32 %v493, %v497
      %v499 = vpack.c.bf16 %v498, %v498
      %500 = vrot.lane.b32.xlu0 %v271, 80
      %v501 = vpop.permute.xlu0 %500
      %v503 = vsel %vm202, %v499, 0
      %v506 = vsel %vm277, %v501, 0
      %508 = vmatprep.subr.bf16.mxu0 0
      %509 = vmatpush1.bf16.msra.mxu0 0
      %510 = vmatprep.subr.bf16.mxu0 0
      %511 = vmatpush1.bf16.msra.mxu0 0
      %512 = vmatprep.subr.bf16.mxu0 0
      %513 = vmatpush1.bf16.msra.mxu0 0
      %514 = vmatprep.subr.bf16.mxu0 0
      %515 = vmatpush1.bf16.msra.mxu0 0
      %516 = vmatprep.subr.bf16.mxu0 0
      %517 = vmatpush1.bf16.msra.mxu0 0
      %518 = vmatprep.subr.bf16.mxu0 0
      %519 = vmatpush1.bf16.msra.mxu0 0
      %520 = vmatprep.subr.bf16.mxu0 0
      %521 = vmatpush1.bf16.msra.mxu0 0
      %522 = vmatprep.subr.bf16.mxu0 0
      %523 = vmatpush1.bf16.msra.mxu0 %v506
      %524 = vmatprep.subr.bf16.mxu0 0
      %525 = vmatpush2.bf16.msra.mxu0 0
      %526 = vmatprep.subr.bf16.mxu0 0
      %527 = vmatpush2.bf16.msra.mxu0 0
      %528 = vmatprep.subr.bf16.mxu0 0
      %529 = vmatpush2.bf16.msra.mxu0 0
      %530 = vmatprep.subr.bf16.mxu0 0
      %531 = vmatpush2.bf16.msra.mxu0 0
      %532 = vmatprep.subr.bf16.mxu0 0
      %533 = vmatpush2.bf16.msra.mxu0 0
      %534 = vmatprep.subr.bf16.mxu0 0
      %535 = vmatpush2.bf16.msra.mxu0 0
      %536 = vmatprep.subr.bf16.mxu0 0
      %537 = vmatpush2.bf16.msra.mxu0 0
      %538 = vmatprep.subr.bf16.mxu0 0
      %539 = vmatpush2.bf16.msra.mxu0 0
      %540 = vmatprep.mubr.bf16.mxu0 0
      %541 = vmatmul.mubr.bf16.gmra.mxu0 %v503
      %v542 = vpop.f32.mrf.mxu0
      %v543 = vadd.f32 0.0, %v542
      %v544 = vpop.f32.mrf.mxu0
      %v545 = vpop.f32.mrf.mxu0
      %v546 = vpop.f32.mrf.mxu0
      %547 = vdwg.mxu0
      %548 = vrot.lane.b32.xlu0 %v323, 104
      %v549 = vpop.permute.xlu0 %548
      %550 = vrot.lane.b32.xlu0 %v271, 104
      %v551 = vpop.permute.xlu0 %550
      %v553 = vsel %vm202, %v549, 0
      %v556 = vsel %vm202, %v551, 0
      %558 = vmatprep.subr.bf16.mxu0 0
      %559 = vmatpush1.bf16.xpose.msra.mxu0 0
      %560 = vmatprep.subr.bf16.mxu0 0
      %561 = vmatpush1.bf16.xpose.msra.mxu0 0
      %562 = vmatprep.subr.bf16.mxu0 0
      %563 = vmatpush1.bf16.xpose.msra.mxu0 0
      %564 = vmatprep.subr.bf16.mxu0 0
      %565 = vmatpush1.bf16.xpose.msra.mxu0 0
      %566 = vmatprep.subr.bf16.mxu0 0
      %567 = vmatpush1.bf16.xpose.msra.mxu0 0
      %568 = vmatprep.subr.bf16.mxu0 0
      %569 = vmatpush1.bf16.xpose.msra.mxu0 0
      %570 = vmatprep.subr.bf16.mxu0 0
      %571 = vmatpush1.bf16.xpose.msra.mxu0 0
      %572 = vmatprep.subr.bf16.mxu0 0
      %573 = vmatpush1.bf16.xpose.msra.mxu0 %v556
      %574 = vmatprep.subr.bf16.mxu0 0
      %575 = vmatpush2.bf16.xpose.msra.mxu0 0
      %576 = vmatprep.subr.bf16.mxu0 0
      %577 = vmatpush2.bf16.xpose.msra.mxu0 0
      %578 = vmatprep.subr.bf16.mxu0 0
      %579 = vmatpush2.bf16.xpose.msra.mxu0 0
      %580 = vmatprep.subr.bf16.mxu0 0
      %581 = vmatpush2.bf16.xpose.msra.mxu0 0
      %582 = vmatprep.subr.bf16.mxu0 0
      %583 = vmatpush2.bf16.xpose.msra.mxu0 0
      %584 = vmatprep.subr.bf16.mxu0 0
      %585 = vmatpush2.bf16.xpose.msra.mxu0 0
      %586 = vmatprep.subr.bf16.mxu0 0
      %587 = vmatpush2.bf16.xpose.msra.mxu0 0
      %588 = vmatprep.subr.bf16.mxu0 0
      %589 = vmatpush2.bf16.xpose.msra.mxu0 0
      %590 = vmatprep.mubr.bf16.mxu0 0
      %591 = vmatmul.mubr.bf16.gmra.mxu0 %v553
      %v592 = vpop.f32.mrf.mxu0
      %v593 = vadd.f32 0.0, %v592
      %v594 = vpop.f32.mrf.mxu0
      %v595 = vpop.f32.mrf.mxu0
      %v596 = vpop.f32.mrf.mxu0
      %597 = vdwg.mxu0
      %v598 = vmul.f32 %v593, 0.35355338
      %v599 = vsel %vm255, %v598, -1e+10
      %v600 = vsel %vm202, %v599, -inf
      %601 = vmax.xlane.f32.xlu0 %v600
      %v602 = vpop.xlane.xlu0 %601
      %v603 = vsub.f32 %v599, %v602
      %v604 = vmul.f32 %v603, 1.442695
      %v605 = vpow.pop %v604
      %v606 = vsel %vm202, %v605, 0.0
      %607 = vadd.xlane.f32.xlu0 %v606
      %v608 = vpop.xlane.xlu0 %607
      %v609 = vrcp.pop %v608
      %v610 = vmul.f32 %v605, %v609
      %v611 = vpack.c.bf16 %v610, %v610
      %612 = vrot.lane.b32.xlu0 %v271, 72
      %v613 = vpop.permute.xlu0 %612
      %v615 = vsel %vm202, %v611, 0
      %v618 = vsel %vm277, %v613, 0
      %620 = vmatprep.subr.bf16.mxu0 0
      %621 = vmatpush1.bf16.msra.mxu0 0
      %622 = vmatprep.subr.bf16.mxu0 0
      %623 = vmatpush1.bf16.msra.mxu0 0
      %624 = vmatprep.subr.bf16.mxu0 0
      %625 = vmatpush1.bf16.msra.mxu0 0
      %626 = vmatprep.subr.bf16.mxu0 0
      %627 = vmatpush1.bf16.msra.mxu0 0
      %628 = vmatprep.subr.bf16.mxu0 0
      %629 = vmatpush1.bf16.msra.mxu0 0
      %630 = vmatprep.subr.bf16.mxu0 0
      %631 = vmatpush1.bf16.msra.mxu0 0
      %632 = vmatprep.subr.bf16.mxu0 0
      %633 = vmatpush1.bf16.msra.mxu0 0
      %634 = vmatprep.subr.bf16.mxu0 0
      %635 = vmatpush1.bf16.msra.mxu0 %v618
      %636 = vmatprep.subr.bf16.mxu0 0
      %637 = vmatpush2.bf16.msra.mxu0 0
      %638 = vmatprep.subr.bf16.mxu0 0
      %639 = vmatpush2.bf16.msra.mxu0 0
      %640 = vmatprep.subr.bf16.mxu0 0
      %641 = vmatpush2.bf16.msra.mxu0 0
      %642 = vmatprep.subr.bf16.mxu0 0
      %643 = vmatpush2.bf16.msra.mxu0 0
      %644 = vmatprep.subr.bf16.mxu0 0
      %645 = vmatpush2.bf16.msra.mxu0 0
      %646 = vmatprep.subr.bf16.mxu0 0
      %647 = vmatpush2.bf16.msra.mxu0 0
      %648 = vmatprep.subr.bf16.mxu0 0
      %649 = vmatpush2.bf16.msra.mxu0 0
      %650 = vmatprep.subr.bf16.mxu0 0
      %651 = vmatpush2.bf16.msra.mxu0 0
      %652 = vmatprep.mubr.bf16.mxu0 0
      %653 = vmatmul.mubr.bf16.gmra.mxu0 %v615
      %v654 = vpop.f32.mrf.mxu0
      %v655 = vadd.f32 0.0, %v654
      %v656 = vpop.f32.mrf.mxu0
      %v657 = vpop.f32.mrf.mxu0
      %v658 = vpop.f32.mrf.mxu0
      %659 = vdwg.mxu0
      %661 = vrot.lane.b32.xlu0 %v431, 8
      %v662 = vpop.permute.xlu0 %661
      %665 = vrot.lane.b32.xlu0 %v543, 16
      %v666 = vpop.permute.xlu0 %665
      %669 = vrot.lane.b32.xlu0 %v655, 24
      %v670 = vpop.permute.xlu0 %669
      %v672 = vsel %vm202, %v316, %v662
      %vm673 = vcmask 130048
      %v674 = vsel %vm673, %v672, %v666
      %vm675 = vcmask 195584
      %v676 = vsel %vm675, %v674, %v670
      %v677 = vpack.c.bf16 %v676, %v676
      %vm678 = vcmask 257024
      %679 = vst.msk [vmem:[%s196] sm:$0xf] %vm678, %v677
      %p680 = scmp.lt.s32.totalorder %s14, 1
      %s681 = scalar_select %p680, %s14, 1
      %s682 = smul.addr %s681, 4
      %s683 = scalar_lea.vmem %s3, %s682
      // Predicated region
      $region33: #{seq2seq_forward.38} parent=31 // pred_check
        %p684 = pneg %p110
      $region34: #{seq2seq_forward.38} parent=31 // pred_check_branch
        %686 = sbr.rel (%p684) target = $region36
      $region35: #{seq2seq_forward.38} parent=31 // pred_region
        _
      $region36: #{seq2seq_forward.38} parent=31 // pred_fallthru
        _
    $region32: #{seq2seq_forward.38} parent=5 // pred_fallthru
      _
    %p687 = scmp.le.s32.totalorder 2, %s9
    // Predicated region
    $region37: #{seq2seq_forward.38} parent=5 // pred_check
      %p688 = pneg %p687
    $region38: #{seq2seq_forward.38} parent=5 // pred_check_branch
      %690 = sbr.rel (%p688) target = $region40
    $region39: #{seq2seq_forward.38} parent=5 // pred_region
      %s691 = ssub.s32 %s9, 2
      // Predicated region
      $region41: #{seq2seq_forward.38} parent=39 // pred_check
        %p692 = pneg %p116
      $region42: #{seq2seq_forward.38} parent=39 // pred_check_branch
        %694 = sbr.rel (%p692) target = $region44
      $region43: #{seq2seq_forward.38} parent=39 // pred_region
        %p695 = scmp.lt.s32.totalorder %s15, 1
        %s696 = scalar_select %p695, %s15, 1
        %s697 = smul.addr %s696, 4
        %s698 = scalar_lea.vmem %s3, %s697
      $region44: #{seq2seq_forward.38} parent=39 // pred_fallthru
        _
    $region40: #{seq2seq_forward.38} parent=5 // pred_fallthru
      _
  $region6: #{seq2seq_forward.38} parent=0 // loop_footer
    %s13 = sadd.s32 1, %s9
  $region7: #{seq2seq_forward.38} parent=0 // loop_footer_branch
    %8 = sbr.rel target = $region3
  $region8: #{seq2seq_forward.38} parent=0 // loop_exit
    _

// kernel: seq2seq_forward.49
$region0: #{seq2seq_forward.49}
  #allocation0 [shape = 'u32[]', space=smem, size = 0x4, offset = 0x4, fixed_abs, tag = 'smem constant byte address 0x4 - core index']
  #allocation1 [shape = 'u32[144,128]{1,0:T(1,128)}', space=vmem, size = 0x12000, scoped, tag = 'internal scratch']
  %s0 = inlined_call_operand.vmem [shape: f32[16,32], index: 0, kind: input, shape index: {}]
  %s1 = inlined_call_operand.vmem [shape: bf16[32,16], index: 1, kind: input, shape index: {}]
  %s2 = inlined_call_operand.vmem [shape: f32[1,16], index: 2, kind: input, shape index: {}]
  %s3 = inlined_call_operand.hbm [shape: f32[16,16], index: 3, kind: output, shape index: {}]
  %s4 = sld [smem:[#allocation0]]
  $region22: #{seq2seq_forward.49} parent=0
    _
  %s6 = ssub.s32 1, %s4
  %s7 = scalar_select 0, %s6, %s4
  $region1: #{seq2seq_forward.49} parent=0
    #allocation2 [shape = 'u8[8192]{0}', space=vmem, size = 0x2000, scoped, tag = 'output window, operand 0, single buffered']
    #allocation3 [shape = 's32[1]{0}', space=sflag, size = 0x4, scoped, tag = 'scoped memory for seq2seq_forward.49']
    %8 = vsyncpa [#allocation3], 0
    // Predicated region
    $region2: #{seq2seq_forward.49} parent=1 // pred_check
      _
    $region3: #{seq2seq_forward.49} parent=1 // pred_check_branch
      %10 = sbr.rel (0) target = $region5
    $region4: #{seq2seq_forward.49} parent=1 // pred_region
      _
    $region5: #{seq2seq_forward.49} parent=1 // pred_fallthru
      _
    // Predicated region
    $region6: #{seq2seq_forward.49} parent=1 // pred_check
      _
    $region7: #{seq2seq_forward.49} parent=1 // pred_check_branch
      %12 = sbr.rel (0) target = $region9
    $region8: #{seq2seq_forward.49} parent=1 // pred_region
      _
    $region9: #{seq2seq_forward.49} parent=1 // pred_fallthru
      _
    // Predicated region
    $region10: #{seq2seq_forward.49} parent=1 // pred_check
      _
    $region11: #{seq2seq_forward.49} parent=1 // pred_check_branch
      %14 = sbr.rel (0) target = $region13
    $region12: #{seq2seq_forward.49} parent=1 // pred_region
      _
    $region13: #{seq2seq_forward.49} parent=1 // pred_fallthru
      _
    %v16 = vld [vmem:[%s0] sm:$0xff]
    %v17 = vld [vmem:[%s0 + $0x8] sm:$0xff]
    %v18 = vpack.c.bf16 %v17, %v16
    %v19 = vld [vmem:[%s1] sm:$0xf]
    %v20 = vld [vmem:[%s1 + $0x4] sm:$0xf]
    %v21 = vld [vmem:[%s1 + $0x8] sm:$0xf]
    %v22 = vld [vmem:[%s1 + $0xc] sm:$0xf]
    %v23 = vld [vmem:[%s2] sm:$0x1]
    %v25 = vlaneseq
    %v26 = vshrl.u32 %v25, 7
    %v27 = vsub.s32 0, %v26
    %v28 = vrot.slane %v23, %v27
    %v34 = vunpack.c.l.b16 %v19
    %v35 = vunpack.c.l.b16 %v20
    %v36 = vunpack.c.l.b16 %v21
    %v37 = vunpack.c.l.b16 %v22
    %v38 = vpack.c.b16 %v35, %v34
    %v39 = vpack.c.b16 %v37, %v36
    %vm42 = vcmask 261120
    %v44 = vsel %vm42, %v18, 0
    %46 = vmatprep.subr.bf16.mxu0 0
    %47 = vmatpush1.bf16.msra.mxu0 0
    %48 = vmatprep.subr.bf16.mxu0 0
    %49 = vmatpush1.bf16.msra.mxu0 0
    %50 = vmatprep.subr.bf16.mxu0 0
    %51 = vmatpush1.bf16.msra.mxu0 0
    %52 = vmatprep.subr.bf16.mxu0 0
    %53 = vmatpush1.bf16.msra.mxu0 0
    %54 = vmatprep.subr.bf16.mxu0 0
    %55 = vmatpush1.bf16.msra.mxu0 0
    %56 = vmatprep.subr.bf16.mxu0 0
    %57 = vmatpush1.bf16.msra.mxu0 0
    %58 = vmatprep.subr.bf16.mxu0 0
    %59 = vmatpush1.bf16.msra.mxu0 %v39
    %60 = vmatprep.subr.bf16.mxu0 0
    %61 = vmatpush1.bf16.msra.mxu0 %v38
    %62 = vmatprep.subr.bf16.mxu0 0
    %63 = vmatpush2.bf16.msra.mxu0 0
    %64 = vmatprep.subr.bf16.mxu0 0
    %65 = vmatpush2.bf16.msra.mxu0 0
    %66 = vmatprep.subr.bf16.mxu0 0
    %67 = vmatpush2.bf16.msra.mxu0 0
    %68 = vmatprep.subr.bf16.mxu0 0
    %69 = vmatpush2.bf16.msra.mxu0 0
    %70 = vmatprep.subr.bf16.mxu0 0
    %71 = vmatpush2.bf16.msra.mxu0 0
    %72 = vmatprep.subr.bf16.mxu0 0
    %73 = vmatpush2.bf16.msra.mxu0 0
    %74 = vmatprep.subr.bf16.mxu0 0
    %75 = vmatpush2.bf16.msra.mxu0 0
    %76 = vmatprep.subr.bf16.mxu0 0
    %77 = vmatpush2.bf16.msra.mxu0 0
    %78 = vmatprep.mubr.bf16.mxu0 0
    %79 = vmatmul.mubr.bf16.gmra.mxu0 %v44
    %v80 = vpop.f32.mrf.mxu0
    %v81 = vadd.f32 %v28, %v80
    %v82 = vpop.f32.mrf.mxu0
    %v83 = vpop.f32.mrf.mxu0
    %v84 = vadd.f32 %v28, %v83
    %v85 = vpop.f32.mrf.mxu0
    %86 = vdwg.mxu0
    %vm87 = vcmask 130048
    %88 = vst.msk [vmem:[#allocation2] sm:$0xff] %vm87, %v81
    %89 = vst.msk [vmem:[#allocation2 + $0x8] sm:$0xff] %vm87, %v84
    // Predicated region
    $region14: #{seq2seq_forward.49} parent=1 // pred_check
      _
    $region15: #{seq2seq_forward.49} parent=1 // pred_check_branch
      %91 = sbr.rel (0) target = $region17
    $region16: #{seq2seq_forward.49} parent=1 // pred_region
      %s93 = ssub.s32 256, 256
      %94 = vsyncadd [#allocation3], %s93
      %s95 = sshll.u32 [#allocation2], 4
      %s96 = int_to_ptr.vmem [resolvable:$true] %s95
      %101 = dma.vmem_to_hbm [thread:$0]  %s96, 256, %s3, [#allocation3], 128, 128, 8
    $region17: #{seq2seq_forward.49} parent=1 // pred_fallthru
      _
    // Predicated region
    $region18: #{seq2seq_forward.49} parent=1 // pred_check
      _
    $region19: #{seq2seq_forward.49} parent=1 // pred_check_branch
      %103 = sbr.rel (0) target = $region21
    $region20: #{seq2seq_forward.49} parent=1 // pred_region
      %104 = dma.done [#allocation3], 256
    $region21: #{seq2seq_forward.49} parent=1 // pred_fallthru
      _
    %105 = vsyncpa [#allocation3], 1

// kernel: seq2seq_forward.46
$region0: #{seq2seq_forward.46}
  #allocation0 [shape = 'u32[]', space=smem, size = 0x4, offset = 0x4, fixed_abs, tag = 'smem constant byte address 0x4 - core index']
  #allocation1 [shape = 'u32[144,128]{1,0:T(1,128)}', space=vmem, size = 0x12000, scoped, tag = 'internal scratch']
  %s0 = inlined_call_operand.vmem [shape: bf16[2,8,32], index: 0, kind: input, shape index: {}]
  %s1 = inlined_call_operand.vmem [shape: bf16[2,8,64], index: 1, kind: input, shape index: {}]
  %s2 = inlined_call_operand.vmem [shape: f32[2,1,8], index: 2, kind: input, shape index: {}]
  %s3 = inlined_call_operand.vmem [shape: bf16[2,8,32], index: 3, kind: output, shape index: {0}]
  %s4 = inlined_call_operand.hbm [shape: f32[2,4,8,8], index: 4, kind: output, shape index: {1}]
  %5 = xla_tuple %s3, %s4
  %s6 = sld [smem:[#allocation0]]
  $region53: #{seq2seq_forward.46} parent=0
    _
  %s8 = ssub.s32 1, %s6
  %s9 = scalar_select 0, %s8, %s6
  $region1: #{seq2seq_forward.46} parent=0
    #allocation2 [shape = 'u8[32768]{0}', space=vmem, size = 0x8000, scoped, tag = 'output window, operand 1']
    #allocation3 [shape = 's32[2]{0}', space=sflag, size = 0x8, scoped, tag = 'scoped memory for seq2seq_forward.46']
    %10 = vsyncpa [#allocation3], 0
    %s11 = scalar_lea.sflag [#allocation3], 1
    %12 = vsyncpa %s11, 0
    loop: start=0, step=1, limit=4
    $region2: #{seq2seq_forward.46} parent=1 // loop_pre_header
      _
    $region3: #{seq2seq_forward.46} parent=1 // loop_header
      %s14 = sphi 0, %s18
      %p15 = scmp.ge.s32.totalorder %s14, 4
      %s24 = sphi 0, %s26
      %s27 = sphi 0, %s24
      %s28 = sphi 0, %s27
      %s44 = sphi 0, %s28
      %s50 = sphi 0, %s52
      %s53 = sphi 0, %s50
      %s54 = sphi 0, %s53
      %s70 = sphi 0, %s54
      %s76 = sphi 0, %s78
      %s79 = sphi 0, %s76
      %s80 = sphi 0, %s79
      %s96 = sphi 0, %s80
      %s102 = sphi 0, %s104
      %s105 = sphi 0, %s102
      %s106 = sphi 0, %s105
      %s122 = sphi 0, %s106
      %s128 = sphi 0, %s130
      %s131 = sphi 0, %s128
      %s132 = sphi 0, %s131
      %s148 = sphi 0, %s132
    $region4: #{seq2seq_forward.46} parent=1 // loop_header_branch
      %17 = sbr.rel (%p15) target = $region8
    $region5: #{seq2seq_forward.46} parent=1 // loop_body
      %s19 = ssub.s32 %s14, 1
      %s20 = ssub.s32 %s14, 2
      %s21 = sadd.s32 %s14, 1
      %s22 = ssub.s32 %s14, %s21
      %p23 = scmp.eq.s32.totalorder %s22, 0
      %s25 = sadd.s32 %s24, 1
      %s26 = scalar_select %p23, %s24, %s25
      %p29 = pneg %p23
      %p30 = scmp.eq.s32.totalorder %s14, 1
      %p31 = por %p29, %p30
      %p32 = scmp.ne.s32.totalorder %s24, %s27
      %p33 = scmp.eq.s32.totalorder %s14, 0
      %p34 = por %p32, %p33
      %p35 = scmp.ne.s32.totalorder %s24, %s27
      %p36 = scmp.eq.s32.totalorder %s19, 1
      %p37 = por %p35, %p36
      %p38 = scmp.ne.s32.totalorder %s27, %s28
      %p39 = scmp.eq.s32.totalorder %s19, 0
      %p40 = por %p38, %p39
      %p41 = scmp.ne.s32.totalorder %s27, %s28
      %p42 = scmp.eq.s32.totalorder %s20, 1
      %p43 = por %p41, %p42
      %p45 = scmp.ne.s32.totalorder %s28, %s44
      %p46 = scmp.eq.s32.totalorder %s20, 0
      %p47 = por %p45, %p46
      %s48 = ssub.s32 %s14, %s21
      %p49 = scmp.eq.s32.totalorder %s48, 0
      %s51 = sadd.s32 %s50, 1
      %s52 = scalar_select %p49, %s50, %s51
      %p55 = pneg %p49
      %p56 = scmp.eq.s32.totalorder %s14, 1
      %p57 = por %p55, %p56
      %p58 = scmp.ne.s32.totalorder %s50, %s53
      %p59 = scmp.eq.s32.totalorder %s14, 0
      %p60 = por %p58, %p59
      %p61 = scmp.ne.s32.totalorder %s50, %s53
      %p62 = scmp.eq.s32.totalorder %s19, 1
      %p63 = por %p61, %p62
      %p64 = scmp.ne.s32.totalorder %s53, %s54
      %p65 = scmp.eq.s32.totalorder %s19, 0
      %p66 = por %p64, %p65
      %p67 = scmp.ne.s32.totalorder %s53, %s54
      %p68 = scmp.eq.s32.totalorder %s20, 1
      %p69 = por %p67, %p68
      %p71 = scmp.ne.s32.totalorder %s54, %s70
      %p72 = scmp.eq.s32.totalorder %s20, 0
      %p73 = por %p71, %p72
      %s74 = ssub.s32 %s14, %s21
      %p75 = scmp.eq.s32.totalorder %s74, 0
      %s77 = sadd.s32 %s76, 1
      %s78 = scalar_select %p75, %s76, %s77
      %p81 = pneg %p75
      %p82 = scmp.eq.s32.totalorder %s14, 1
      %p83 = por %p81, %p82
      %p84 = scmp.ne.s32.totalorder %s76, %s79
      %p85 = scmp.eq.s32.totalorder %s14, 0
      %p86 = por %p84, %p85
      %p87 = scmp.ne.s32.totalorder %s76, %s79
      %p88 = scmp.eq.s32.totalorder %s19, 1
      %p89 = por %p87, %p88
      %p90 = scmp.ne.s32.totalorder %s79, %s80
      %p91 = scmp.eq.s32.totalorder %s19, 0
      %p92 = por %p90, %p91
      %p93 = scmp.ne.s32.totalorder %s79, %s80
      %p94 = scmp.eq.s32.totalorder %s20, 1
      %p95 = por %p93, %p94
      %p97 = scmp.ne.s32.totalorder %s80, %s96
      %p98 = scmp.eq.s32.totalorder %s20, 0
      %p99 = por %p97, %p98
      %s100 = ssub.s32 %s14, %s21
      %p101 = scmp.eq.s32.totalorder %s100, 0
      %s103 = sadd.s32 %s102, 1
      %s104 = scalar_select %p101, %s102, %s103
      %p107 = pneg %p101
      %p108 = scmp.eq.s32.totalorder %s14, 1
      %p109 = por %p107, %p108
      %p110 = scmp.ne.s32.totalorder %s102, %s105
      %p111 = scmp.eq.s32.totalorder %s14, 0
      %p112 = por %p110, %p111
      %p113 = scmp.ne.s32.totalorder %s102, %s105
      %p114 = scmp.eq.s32.totalorder %s19, 1
      %p115 = por %p113, %p114
      %p116 = scmp.ne.s32.totalorder %s105, %s106
      %p117 = scmp.eq.s32.totalorder %s19, 0
      %p118 = por %p116, %p117
      %p119 = scmp.ne.s32.totalorder %s105, %s106
      %p120 = scmp.eq.s32.totalorder %s20, 1
      %p121 = por %p119, %p120
      %p123 = scmp.ne.s32.totalorder %s106, %s122
      %p124 = scmp.eq.s32.totalorder %s20, 0
      %p125 = por %p123, %p124
      %s126 = ssub.s32 %s14, %s21
      %p127 = scmp.eq.s32.totalorder %s126, 0
      %s129 = sadd.s32 %s128, 1
      %s130 = scalar_select %p127, %s128, %s129
      %p133 = pneg %p127
      %p134 = scmp.eq.s32.totalorder %s14, 1
      %p135 = por %p133, %p134
      %p136 = scmp.ne.s32.totalorder %s128, %s131
      %p137 = scmp.eq.s32.totalorder %s14, 0
      %p138 = por %p136, %p137
      %p139 = scmp.ne.s32.totalorder %s128, %s131
      %p140 = scmp.eq.s32.totalorder %s19, 1
      %p141 = por %p139, %p140
      %p142 = scmp.ne.s32.totalorder %s131, %s132
      %p143 = scmp.eq.s32.totalorder %s19, 0
      %p144 = por %p142, %p143
      %p145 = scmp.ne.s32.totalorder %s131, %s132
      %p146 = scmp.eq.s32.totalorder %s20, 1
      %p147 = por %p145, %p146
      %p149 = scmp.ne.s32.totalorder %s132, %s148
      %p150 = scmp.eq.s32.totalorder %s20, 0
      %p151 = por %p149, %p150
      %p152 = scmp.le.s32.totalorder 1, %s14
      %p153 = scmp.lt.s32.totalorder %s14, 3
      %p154 = pnand %p152, %p153
      %p155 = pneg %p154
      // Predicated region
      $region9: #{seq2seq_forward.46} parent=5 // pred_check
        _
      $region10: #{seq2seq_forward.46} parent=5 // pred_check_branch
        %157 = sbr.rel (%p154) target = $region12
      $region11: #{seq2seq_forward.46} parent=5 // pred_region
        %s158 = ssub.s32 %s14, 1
      $region12: #{seq2seq_forward.46} parent=5 // pred_fallthru
        _
      %p159 = scmp.lt.s32.totalorder %s14, 2
      // Predicated region
      $region13: #{seq2seq_forward.46} parent=5 // pred_check
        %p160 = pneg %p159
      $region14: #{seq2seq_forward.46} parent=5 // pred_check_branch
        %162 = sbr.rel (%p160) target = $region16
      $region15: #{seq2seq_forward.46} parent=5 // pred_region
        // Predicated region
        $region17: #{seq2seq_forward.46} parent=15 // pred_check
          %p163 = pneg %p34
        $region18: #{seq2seq_forward.46} parent=15 // pred_check_branch
          %165 = sbr.rel (%p163) target = $region20
        $region19: #{seq2seq_forward.46} parent=15 // pred_region
          %p166 = scmp.lt.s32.totalorder %s14, 1
          %s167 = scalar_select %p166, %s14, 1
          %s168 = smul.addr %s167, 4
          %s169 = scalar_lea.vmem %s0, %s168
        $region20: #{seq2seq_forward.46} parent=15 // pred_fallthru
          _
        // Predicated region
        $region21: #{seq2seq_forward.46} parent=15 // pred_check
          %p170 = pneg %p60
        $region22: #{seq2seq_forward.46} parent=15 // pred_check_branch
          %172 = sbr.rel (%p170) target = $region24
        $region23: #{seq2seq_forward.46} parent=15 // pred_region
          %p173 = scmp.lt.s32.totalorder %s14, 1
          %s174 = scalar_select %p173, %s14, 1
          %s175 = smul.addr %s174, 4
          %s176 = scalar_lea.vmem %s1, %s175
        $region24: #{seq2seq_forward.46} parent=15 // pred_fallthru
          _
        // Predicated region
        $region25: #{seq2seq_forward.46} parent=15 // pred_check
          %p177 = pneg %p86
        $region26: #{seq2seq_forward.46} parent=15 // pred_check_branch
          %179 = sbr.rel (%p177) target = $region28
        $region27: #{seq2seq_forward.46} parent=15 // pred_region
          %p180 = scmp.lt.s32.totalorder %s14, 1
          %s181 = scalar_select %p180, %s14, 1
          %s182 = scalar_lea.vmem %s2, %s181
        $region28: #{seq2seq_forward.46} parent=15 // pred_fallthru
          _
      $region16: #{seq2seq_forward.46} parent=5 // pred_fallthru
        _
      %p183 = scmp.le.s32.totalorder 1, %s14
      %p184 = scmp.lt.s32.totalorder %s14, 3
      %p185 = pnand %p183, %p184
      %p186 = pneg %p185
      // Predicated region
      $region29: #{seq2seq_forward.46} parent=5 // pred_check
        _
      $region30: #{seq2seq_forward.46} parent=5 // pred_check_branch
        %188 = sbr.rel (%p185) target = $region32
      $region31: #{seq2seq_forward.46} parent=5 // pred_region
        %s189 = ssub.s32 %s14, 1
        %p190 = scmp.lt.s32.totalorder %s19, 1
        %s191 = scalar_select %p190, %s19, 1
        %s192 = smul.addr %s191, 4
        %s193 = scalar_lea.vmem %s0, %s192
        %p194 = pneg %p40
        %p195 = pneg %p37
        %p196 = scmp.lt.s32.totalorder %s19, 1
        %s197 = scalar_select %p196, %s19, 1
        %s198 = smul.addr %s197, 4
        %s199 = scalar_lea.vmem %s1, %s198
        %p200 = pneg %p66
        %p201 = pneg %p63
        %p202 = scmp.lt.s32.totalorder %s19, 1
        %s203 = scalar_select %p202, %s19, 1
        %s204 = scalar_lea.vmem %s2, %s203
        %p205 = pneg %p92
        %p206 = pneg %p89
        %p207 = pneg %p118
        %p208 = pneg %p115
        %p209 = scmp.lt.s32.totalorder %s19, 1
        %s210 = scalar_select %p209, %s19, 1
        %s211 = smul.addr %s210, 4
        %s212 = scalar_lea.vmem %s3, %s211
        %p213 = pneg %p144
        %p214 = pneg %p141
        %s215 = sand.u32 %s131, 1
        %s216 = scalar_lea.sflag [#allocation3], %s215
        %s217 = sand.u32 %s131, 1
        %s218 = smul.addr %s217, 32
        %s219 = scalar_lea.vmem [#allocation2], %s218
        %p220 = scmp.lt.s32.totalorder %s19, 1
        %s221 = scalar_select %p220, %s19, 1
        %s222 = smul.addr %s221, 4
        %s223 = scalar_lea.vmem %s0, %s222
        %p224 = scmp.lt.s32.totalorder %s19, 1
        %s225 = scalar_select %p224, %s19, 1
        %s226 = smul.addr %s225, 4
        %s227 = scalar_lea.vmem %s1, %s226
        %p228 = scmp.lt.s32.totalorder %s19, 1
        %s229 = scalar_select %p228, %s19, 1
        %s230 = scalar_lea.vmem %s2, %s229
        %p231 = scmp.lt.s32.totalorder %s19, 1
        %s232 = scalar_select %p231, %s19, 1
        %s233 = smul.addr %s232, 4
        %s234 = scalar_lea.vmem %s3, %s233
        %v236 = vld [vmem:[%s223] sm:$0xf]
        %v237 = vld [vmem:[%s227] sm:$0xf]
        %v238 = vld [vmem:[%s230] sm:$0x1]
        %vm239 = vcmp.gt.f32.partialorder %v238, 0.0
        %vm240 = vcmask 64512
        %v242 = vsel %vm240, %v236, 0
        %v245 = vsel %vm240, %v237, 0
        %247 = vmatprep.subr.bf16.mxu0 0
        %248 = vmatpush1.bf16.xpose.msra.mxu0 0
        %249 = vmatprep.subr.bf16.mxu0 0
        %250 = vmatpush1.bf16.xpose.msra.mxu0 0
        %251 = vmatprep.subr.bf16.mxu0 0
        %252 = vmatpush1.bf16.xpose.msra.mxu0 0
        %253 = vmatprep.subr.bf16.mxu0 0
        %254 = vmatpush1.bf16.xpose.msra.mxu0 0
        %255 = vmatprep.subr.bf16.mxu0 0
        %256 = vmatpush1.bf16.xpose.msra.mxu0 0
        %257 = vmatprep.subr.bf16.mxu0 0
        %258 = vmatpush1.bf16.xpose.msra.mxu0 0
        %259 = vmatprep.subr.bf16.mxu0 0
        %260 = vmatpush1.bf16.xpose.msra.mxu0 0
        %261 = vmatprep.subr.bf16.mxu0 0
        %262 = vmatpush1.bf16.xpose.msra.mxu0 %v245
        %263 = vmatprep.subr.bf16.mxu0 0
        %264 = vmatpush2.bf16.xpose.msra.mxu0 0
        %265 = vmatprep.subr.bf16.mxu0 0
        %266 = vmatpush2.bf16.xpose.msra.mxu0 0
        %267 = vmatprep.subr.bf16.mxu0 0
        %268 = vmatpush2.bf16.xpose.msra.mxu0 0
        %269 = vmatprep.subr.bf16.mxu0 0
        %270 = vmatpush2.bf16.xpose.msra.mxu0 0
        %271 = vmatprep.subr.bf16.mxu0 0
        %272 = vmatpush2.bf16.xpose.msra.mxu0 0
        %273 = vmatprep.subr.bf16.mxu0 0
        %274 = vmatpush2.bf16.xpose.msra.mxu0 0
        %275 = vmatprep.subr.bf16.mxu0 0
        %276 = vmatpush2.bf16.xpose.msra.mxu0 0
        %277 = vmatprep.subr.bf16.mxu0 0
        %278 = vmatpush2.bf16.xpose.msra.mxu0 0
        %279 = vmatprep.mubr.bf16.mxu0 0
        %280 = vmatmul.mubr.bf16.gmra.mxu0 %v242
        %v281 = vpop.f32.mrf.mxu0
        %v282 = vadd.f32 0.0, %v281
        %v283 = vpop.f32.mrf.mxu0
        %v284 = vpop.f32.mrf.mxu0
        %v285 = vpop.f32.mrf.mxu0
        %286 = vdwg.mxu0
        %v287 = vmul.f32 %v282, 0.35355338
        %v288 = vsel %vm239, 1, 0
        %v289 = vlaneseq
        %v290 = vshrl.u32 %v289, 7
        %v291 = vsub.s32 0, %v290
        %v292 = vrot.slane %v288, %v291
        %vm293 = vcmp.eq.s32.totalorder %v292, 1
        %v294 = vsel %vm293, %v287, -1e+10
        %v295 = vsel %vm240, %v294, -inf
        %296 = vmax.xlane.f32.xlu0 %v295
        %v297 = vpop.xlane.xlu0 %296
        %v298 = vsub.f32 %v294, %v297
        %v299 = vmul.f32 %v298, 1.442695
        %v300 = vpow.pop %v299
        %v301 = vsel %vm240, %v300, 0.0
        %302 = vadd.xlane.f32.xlu0 %v301
        %v303 = vpop.xlane.xlu0 %302
        %v304 = vrcp.pop %v303
        %v305 = vmul.f32 %v300, %v304
        %306 = vst.msk [vmem:[%s219] sm:$0xff] %vm240, %v305
        %v307 = vpack.c.bf16 %v305, %v305
        %v309 = vunpack.c.l.b16 %v237
        %v310 = vpack.c.b16 %v309, %v309
        %311 = vrot.lane.b32.xlu0 %v310, 96
        %v312 = vpop.permute.xlu0 %311
        %v314 = vsel %vm240, %v307, 0
        %vm316 = vcmask 1043456
        %v318 = vsel %vm316, %v312, 0
        %320 = vmatprep.subr.bf16.mxu0 0
        %321 = vmatpush1.bf16.msra.mxu0 0
        %322 = vmatprep.subr.bf16.mxu0 0
        %323 = vmatpush1.bf16.msra.mxu0 0
        %324 = vmatprep.subr.bf16.mxu0 0
        %325 = vmatpush1.bf16.msra.mxu0 0
        %326 = vmatprep.subr.bf16.mxu0 0
        %327 = vmatpush1.bf16.msra.mxu0 0
        %328 = vmatprep.subr.bf16.mxu0 0
        %329 = vmatpush1.bf16.msra.mxu0 0
        %330 = vmatprep.subr.bf16.mxu0 0
        %331 = vmatpush1.bf16.msra.mxu0 0
        %332 = vmatprep.subr.bf16.mxu0 0
        %333 = vmatpush1.bf16.msra.mxu0 0
        %334 = vmatprep.subr.bf16.mxu0 0
        %335 = vmatpush1.bf16.msra.mxu0 %v318
        %336 = vmatprep.subr.bf16.mxu0 0
        %337 = vmatpush2.bf16.msra.mxu0 0
        %338 = vmatprep.subr.bf16.mxu0 0
        %339 = vmatpush2.bf16.msra.mxu0 0
        %340 = vmatprep.subr.bf16.mxu0 0
        %341 = vmatpush2.bf16.msra.mxu0 0
        %342 = vmatprep.subr.bf16.mxu0 0
        %343 = vmatpush2.bf16.msra.mxu0 0
        %344 = vmatprep.subr.bf16.mxu0 0
        %345 = vmatpush2.bf16.msra.mxu0 0
        %346 = vmatprep.subr.bf16.mxu0 0
        %347 = vmatpush2.bf16.msra.mxu0 0
        %348 = vmatprep.subr.bf16.mxu0 0
        %349 = vmatpush2.bf16.msra.mxu0 0
        %350 = vmatprep.subr.bf16.mxu0 0
        %351 = vmatpush2.bf16.msra.mxu0 0
        %352 = vmatprep.mubr.bf16.mxu0 0
        %353 = vmatmul.mubr.bf16.gmra.mxu0 %v314
        %v354 = vpop.f32.mrf.mxu0
        %v355 = vadd.f32 0.0, %v354
        %v356 = vpop.f32.mrf.mxu0
        %v357 = vpop.f32.mrf.mxu0
        %v358 = vpop.f32.mrf.mxu0
        %359 = vdwg.mxu0
        %v361 = vunpack.c.l.b16 %v236
        %v362 = vpack.c.b16 %v361, %v361
        %363 = vrot.lane.b32.xlu0 %v362, 120
        %v364 = vpop.permute.xlu0 %363
        %365 = vrot.lane.b32.xlu0 %v310, 120
        %v366 = vpop.permute.xlu0 %365
        %v368 = vsel %vm240, %v364, 0
        %v371 = vsel %vm240, %v366, 0
        %373 = vmatprep.subr.bf16.mxu0 0
        %374 = vmatpush1.bf16.xpose.msra.mxu0 0
        %375 = vmatprep.subr.bf16.mxu0 0
        %376 = vmatpush1.bf16.xpose.msra.mxu0 0
        %377 = vmatprep.subr.bf16.mxu0 0
        %378 = vmatpush1.bf16.xpose.msra.mxu0 0
        %379 = vmatprep.subr.bf16.mxu0 0
        %380 = vmatpush1.bf16.xpose.msra.mxu0 0
        %381 = vmatprep.subr.bf16.mxu0 0
        %382 = vmatpush1.bf16.xpose.msra.mxu0 0
        %383 = vmatprep.subr.bf16.mxu0 0
        %384 = vmatpush1.bf16.xpose.msra.mxu0 0
        %385 = vmatprep.subr.bf16.mxu0 0
        %386 = vmatpush1.bf16.xpose.msra.mxu0 0
        %387 = vmatprep.subr.bf16.mxu0 0
        %388 = vmatpush1.bf16.xpose.msra.mxu0 %v371
        %389 = vmatprep.subr.bf16.mxu0 0
        %390 = vmatpush2.bf16.xpose.msra.mxu0 0
        %391 = vmatprep.subr.bf16.mxu0 0
        %392 = vmatpush2.bf16.xpose.msra.mxu0 0
        %393 = vmatprep.subr.bf16.mxu0 0
        %394 = vmatpush2.bf16.xpose.msra.mxu0 0
        %395 = vmatprep.subr.bf16.mxu0 0
        %396 = vmatpush2.bf16.xpose.msra.mxu0 0
        %397 = vmatprep.subr.bf16.mxu0 0
        %398 = vmatpush2.bf16.xpose.msra.mxu0 0
        %399 = vmatprep.subr.bf16.mxu0 0
        %400 = vmatpush2.bf16.xpose.msra.mxu0 0
        %401 = vmatprep.subr.bf16.mxu0 0
        %402 = vmatpush2.bf16.xpose.msra.mxu0 0
        %403 = vmatprep.subr.bf16.mxu0 0
        %404 = vmatpush2.bf16.xpose.msra.mxu0 0
        %405 = vmatprep.mubr.bf16.mxu0 0
        %406 = vmatmul.mubr.bf16.gmra.mxu0 %v368
        %v407 = vpop.f32.mrf.mxu0
        %v408 = vadd.f32 0.0, %v407
        %v409 = vpop.f32.mrf.mxu0
        %v410 = vpop.f32.mrf.mxu0
        %v411 = vpop.f32.mrf.mxu0
        %412 = vdwg.mxu0
        %v413 = vmul.f32 %v408, 0.35355338
        %v414 = vsel %vm293, %v413, -1e+10
        %v415 = vsel %vm240, %v414, -inf
        %416 = vmax.xlane.f32.xlu0 %v415
        %v417 = vpop.xlane.xlu0 %416
        %v418 = vsub.f32 %v414, %v417
        %v419 = vmul.f32 %v418, 1.442695
        %v420 = vpow.pop %v419
        %v421 = vsel %vm240, %v420, 0.0
        %422 = vadd.xlane.f32.xlu0 %v421
        %v423 = vpop.xlane.xlu0 %422
        %v424 = vrcp.pop %v423
        %v425 = vmul.f32 %v420, %v424
        %s426 = scalar_lea.vmem %s219, 8 [#allocation2]
        %427 = vst.msk [vmem:[%s426] sm:$0xff] %vm240, %v425
        %v428 = vpack.c.bf16 %v425, %v425
        %429 = vrot.lane.b32.xlu0 %v310, 88
        %v430 = vpop.permute.xlu0 %429
        %v432 = vsel %vm240, %v428, 0
        %v435 = vsel %vm316, %v430, 0
        %437 = vmatprep.subr.bf16.mxu0 0
        %438 = vmatpush1.bf16.msra.mxu0 0
        %439 = vmatprep.subr.bf16.mxu0 0
        %440 = vmatpush1.bf16.msra.mxu0 0
        %441 = vmatprep.subr.bf16.mxu0 0
        %442 = vmatpush1.bf16.msra.mxu0 0
        %443 = vmatprep.subr.bf16.mxu0 0
        %444 = vmatpush1.bf16.msra.mxu0 0
        %445 = vmatprep.subr.bf16.mxu0 0
        %446 = vmatpush1.bf16.msra.mxu0 0
        %447 = vmatprep.subr.bf16.mxu0 0
        %448 = vmatpush1.bf16.msra.mxu0 0
        %449 = vmatprep.subr.bf16.mxu0 0
        %450 = vmatpush1.bf16.msra.mxu0 0
        %451 = vmatprep.subr.bf16.mxu0 0
        %452 = vmatpush1.bf16.msra.mxu0 %v435
        %453 = vmatprep.subr.bf16.mxu0 0
        %454 = vmatpush2.bf16.msra.mxu0 0
        %455 = vmatprep.subr.bf16.mxu0 0
        %456 = vmatpush2.bf16.msra.mxu0 0
        %457 = vmatprep.subr.bf16.mxu0 0
        %458 = vmatpush2.bf16.msra.mxu0 0
        %459 = vmatprep.subr.bf16.mxu0 0
        %460 = vmatpush2.bf16.msra.mxu0 0
        %461 = vmatprep.subr.bf16.mxu0 0
        %462 = vmatpush2.bf16.msra.mxu0 0
        %463 = vmatprep.subr.bf16.mxu0 0
        %464 = vmatpush2.bf16.msra.mxu0 0
        %465 = vmatprep.subr.bf16.mxu0 0
        %466 = vmatpush2.bf16.msra.mxu0 0
        %467 = vmatprep.subr.bf16.mxu0 0
        %468 = vmatpush2.bf16.msra.mxu0 0
        %469 = vmatprep.mubr.bf16.mxu0 0
        %470 = vmatmul.mubr.bf16.gmra.mxu0 %v432
        %v471 = vpop.f32.mrf.mxu0
        %v472 = vadd.f32 0.0, %v471
        %v473 = vpop.f32.mrf.mxu0
        %v474 = vpop.f32.mrf.mxu0
        %v475 = vpop.f32.mrf.mxu0
        %476 = vdwg.mxu0
        %477 = vrot.lane.b32.xlu0 %v362, 112
        %v478 = vpop.permute.xlu0 %477
        %479 = vrot.lane.b32.xlu0 %v310, 112
        %v480 = vpop.permute.xlu0 %479
        %v482 = vsel %vm240, %v478, 0
        %v485 = vsel %vm240, %v480, 0
        %487 = vmatprep.subr.bf16.mxu0 0
        %488 = vmatpush1.bf16.xpose.msra.mxu0 0
        %489 = vmatprep.subr.bf16.mxu0 0
        %490 = vmatpush1.bf16.xpose.msra.mxu0 0
        %491 = vmatprep.subr.bf16.mxu0 0
        %492 = vmatpush1.bf16.xpose.msra.mxu0 0
        %493 = vmatprep.subr.bf16.mxu0 0
        %494 = vmatpush1.bf16.xpose.msra.mxu0 0
        %495 = vmatprep.subr.bf16.mxu0 0
        %496 = vmatpush1.bf16.xpose.msra.mxu0 0
        %497 = vmatprep.subr.bf16.mxu0 0
        %498 = vmatpush1.bf16.xpose.msra.mxu0 0
        %499 = vmatprep.subr.bf16.mxu0 0
        %500 = vmatpush1.bf16.xpose.msra.mxu0 0
        %501 = vmatprep.subr.bf16.mxu0 0
        %502 = vmatpush1.bf16.xpose.msra.mxu0 %v485
        %503 = vmatprep.subr.bf16.mxu0 0
        %504 = vmatpush2.bf16.xpose.msra.mxu0 0
        %505 = vmatprep.subr.bf16.mxu0 0
        %506 = vmatpush2.bf16.xpose.msra.mxu0 0
        %507 = vmatprep.subr.bf16.mxu0 0
        %508 = vmatpush2.bf16.xpose.msra.mxu0 0
        %509 = vmatprep.subr.bf16.mxu0 0
        %510 = vmatpush2.bf16.xpose.msra.mxu0 0
        %511 = vmatprep.subr.bf16.mxu0 0
        %512 = vmatpush2.bf16.xpose.msra.mxu0 0
        %513 = vmatprep.subr.bf16.mxu0 0
        %514 = vmatpush2.bf16.xpose.msra.mxu0 0
        %515 = vmatprep.subr.bf16.mxu0 0
        %516 = vmatpush2.bf16.xpose.msra.mxu0 0
        %517 = vmatprep.subr.bf16.mxu0 0
        %518 = vmatpush2.bf16.xpose.msra.mxu0 0
        %519 = vmatprep.mubr.bf16.mxu0 0
        %520 = vmatmul.mubr.bf16.gmra.mxu0 %v482
        %v521 = vpop.f32.mrf.mxu0
        %v522 = vadd.f32 0.0, %v521
        %v523 = vpop.f32.mrf.mxu0
        %v524 = vpop.f32.mrf.mxu0
        %v525 = vpop.f32.mrf.mxu0
        %526 = vdwg.mxu0
        %v527 = vmul.f32 %v522, 0.35355338
        %v528 = vsel %vm293, %v527, -1e+10
        %v529 = vsel %vm240, %v528, -inf
        %530 = vmax.xlane.f32.xlu0 %v529
        %v531 = vpop.xlane.xlu0 %530
        %v532 = vsub.f32 %v528, %v531
        %v533 = vmul.f32 %v532, 1.442695
        %v534 = vpow.pop %v533
        %v535 = vsel %vm240, %v534, 0.0
        %536 = vadd.xlane.f32.xlu0 %v535
        %v537 = vpop.xlane.xlu0 %536
        %v538 = vrcp.pop %v537
        %v539 = vmul.f32 %v534, %v538
        %s540 = scalar_lea.vmem %s219, 16 [#allocation2]
        %541 = vst.msk [vmem:[%s540] sm:$0xff] %vm240, %v539
        %v542 = vpack.c.bf16 %v539, %v539
        %543 = vrot.lane.b32.xlu0 %v310, 80
        %v544 = vpop.permute.xlu0 %543
        %v546 = vsel %vm240, %v542, 0
        %v549 = vsel %vm316, %v544, 0
        %551 = vmatprep.subr.bf16.mxu0 0
        %552 = vmatpush1.bf16.msra.mxu0 0
        %553 = vmatprep.subr.bf16.mxu0 0
        %554 = vmatpush1.bf16.msra.mxu0 0
        %555 = vmatprep.subr.bf16.mxu0 0
        %556 = vmatpush1.bf16.msra.mxu0 0
        %557 = vmatprep.subr.bf16.mxu0 0
        %558 = vmatpush1.bf16.msra.mxu0 0
        %559 = vmatprep.subr.bf16.mxu0 0
        %560 = vmatpush1.bf16.msra.mxu0 0
        %561 = vmatprep.subr.bf16.mxu0 0
        %562 = vmatpush1.bf16.msra.mxu0 0
        %563 = vmatprep.subr.bf16.mxu0 0
        %564 = vmatpush1.bf16.msra.mxu0 0
        %565 = vmatprep.subr.bf16.mxu0 0
        %566 = vmatpush1.bf16.msra.mxu0 %v549
        %567 = vmatprep.subr.bf16.mxu0 0
        %568 = vmatpush2.bf16.msra.mxu0 0
        %569 = vmatprep.subr.bf16.mxu0 0
        %570 = vmatpush2.bf16.msra.mxu0 0
        %571 = vmatprep.subr.bf16.mxu0 0
        %572 = vmatpush2.bf16.msra.mxu0 0
        %573 = vmatprep.subr.bf16.mxu0 0
        %574 = vmatpush2.bf16.msra.mxu0 0
        %575 = vmatprep.subr.bf16.mxu0 0
        %576 = vmatpush2.bf16.msra.mxu0 0
        %577 = vmatprep.subr.bf16.mxu0 0
        %578 = vmatpush2.bf16.msra.mxu0 0
        %579 = vmatprep.subr.bf16.mxu0 0
        %580 = vmatpush2.bf16.msra.mxu0 0
        %581 = vmatprep.subr.bf16.mxu0 0
        %582 = vmatpush2.bf16.msra.mxu0 0
        %583 = vmatprep.mubr.bf16.mxu0 0
        %584 = vmatmul.mubr.bf16.gmra.mxu0 %v546
        %v585 = vpop.f32.mrf.mxu0
        %v586 = vadd.f32 0.0, %v585
        %v587 = vpop.f32.mrf.mxu0
        %v588 = vpop.f32.mrf.mxu0
        %v589 = vpop.f32.mrf.mxu0
        %590 = vdwg.mxu0
        %591 = vrot.lane.b32.xlu0 %v362, 104
        %v592 = vpop.permute.xlu0 %591
        %593 = vrot.lane.b32.xlu0 %v310, 104
        %v594 = vpop.permute.xlu0 %593
        %v596 = vsel %vm240, %v592, 0
        %v599 = vsel %vm240, %v594, 0
        %601 = vmatprep.subr.bf16.mxu0 0
        %602 = vmatpush1.bf16.xpose.msra.mxu0 0
        %603 = vmatprep.subr.bf16.mxu0 0
        %604 = vmatpush1.bf16.xpose.msra.mxu0 0
        %605 = vmatprep.subr.bf16.mxu0 0
        %606 = vmatpush1.bf16.xpose.msra.mxu0 0
        %607 = vmatprep.subr.bf16.mxu0 0
        %608 = vmatpush1.bf16.xpose.msra.mxu0 0
        %609 = vmatprep.subr.bf16.mxu0 0
        %610 = vmatpush1.bf16.xpose.msra.mxu0 0
        %611 = vmatprep.subr.bf16.mxu0 0
        %612 = vmatpush1.bf16.xpose.msra.mxu0 0
        %613 = vmatprep.subr.bf16.mxu0 0
        %614 = vmatpush1.bf16.xpose.msra.mxu0 0
        %615 = vmatprep.subr.bf16.mxu0 0
        %616 = vmatpush1.bf16.xpose.msra.mxu0 %v599
        %617 = vmatprep.subr.bf16.mxu0 0
        %618 = vmatpush2.bf16.xpose.msra.mxu0 0
        %619 = vmatprep.subr.bf16.mxu0 0
        %620 = vmatpush2.bf16.xpose.msra.mxu0 0
        %621 = vmatprep.subr.bf16.mxu0 0
        %622 = vmatpush2.bf16.xpose.msra.mxu0 0
        %623 = vmatprep.subr.bf16.mxu0 0
        %624 = vmatpush2.bf16.xpose.msra.mxu0 0
        %625 = vmatprep.subr.bf16.mxu0 0
        %626 = vmatpush2.bf16.xpose.msra.mxu0 0
        %627 = vmatprep.subr.bf16.mxu0 0
        %628 = vmatpush2.bf16.xpose.msra.mxu0 0
        %629 = vmatprep.subr.bf16.mxu0 0
        %630 = vmatpush2.bf16.xpose.msra.mxu0 0
        %631 = vmatprep.subr.bf16.mxu0 0
        %632 = vmatpush2.bf16.xpose.msra.mxu0 0
        %633 = vmatprep.mubr.bf16.mxu0 0
        %634 = vmatmul.mubr.bf16.gmra.mxu0 %v596
        %v635 = vpop.f32.mrf.mxu0
        %v636 = vadd.f32 0.0, %v635
        %v637 = vpop.f32.mrf.mxu0
        %v638 = vpop.f32.mrf.mxu0
        %v639 = vpop.f32.mrf.mxu0
        %640 = vdwg.mxu0
        %v641 = vmul.f32 %v636, 0.35355338
        %v642 = vsel %vm293, %v641, -1e+10
        %v643 = vsel %vm240, %v642, -inf
        %644 = vmax.xlane.f32.xlu0 %v643
        %v645 = vpop.xlane.xlu0 %644
        %v646 = vsub.f32 %v642, %v645
        %v647 = vmul.f32 %v646, 1.442695
        %v648 = vpow.pop %v647
        %v649 = vsel %vm240, %v648, 0.0
        %650 = vadd.xlane.f32.xlu0 %v649
        %v651 = vpop.xlane.xlu0 %650
        %v652 = vrcp.pop %v651
        %v653 = vmul.f32 %v648, %v652
        %s654 = scalar_lea.vmem %s219, 24 [#allocation2]
        %655 = vst.msk [vmem:[%s654] sm:$0xff] %vm240, %v653
        %v656 = vpack.c.bf16 %v653, %v653
        %657 = vrot.lane.b32.xlu0 %v310, 72
        %v658 = vpop.permute.xlu0 %657
        %v660 = vsel %vm240, %v656, 0
        %v663 = vsel %vm316, %v658, 0
        %665 = vmatprep.subr.bf16.mxu0 0
        %666 = vmatpush1.bf16.msra.mxu0 0
        %667 = vmatprep.subr.bf16.mxu0 0
        %668 = vmatpush1.bf16.msra.mxu0 0
        %669 = vmatprep.subr.bf16.mxu0 0
        %670 = vmatpush1.bf16.msra.mxu0 0
        %671 = vmatprep.subr.bf16.mxu0 0
        %672 = vmatpush1.bf16.msra.mxu0 0
        %673 = vmatprep.subr.bf16.mxu0 0
        %674 = vmatpush1.bf16.msra.mxu0 0
        %675 = vmatprep.subr.bf16.mxu0 0
        %676 = vmatpush1.bf16.msra.mxu0 0
        %677 = vmatprep.subr.bf16.mxu0 0
        %678 = vmatpush1.bf16.msra.mxu0 0
        %679 = vmatprep.subr.bf16.mxu0 0
        %680 = vmatpush1.bf16.msra.mxu0 %v663
        %681 = vmatprep.subr.bf16.mxu0 0
        %682 = vmatpush2.bf16.msra.mxu0 0
        %683 = vmatprep.subr.bf16.mxu0 0
        %684 = vmatpush2.bf16.msra.mxu0 0
        %685 = vmatprep.subr.bf16.mxu0 0
        %686 = vmatpush2.bf16.msra.mxu0 0
        %687 = vmatprep.subr.bf16.mxu0 0
        %688 = vmatpush2.bf16.msra.mxu0 0
        %689 = vmatprep.subr.bf16.mxu0 0
        %690 = vmatpush2.bf16.msra.mxu0 0
        %691 = vmatprep.subr.bf16.mxu0 0
        %692 = vmatpush2.bf16.msra.mxu0 0
        %693 = vmatprep.subr.bf16.mxu0 0
        %694 = vmatpush2.bf16.msra.mxu0 0
        %695 = vmatprep.subr.bf16.mxu0 0
        %696 = vmatpush2.bf16.msra.mxu0 0
        %697 = vmatprep.mubr.bf16.mxu0 0
        %698 = vmatmul.mubr.bf16.gmra.mxu0 %v660
        %v699 = vpop.f32.mrf.mxu0
        %v700 = vadd.f32 0.0, %v699
        %v701 = vpop.f32.mrf.mxu0
        %v702 = vpop.f32.mrf.mxu0
        %v703 = vpop.f32.mrf.mxu0
        %704 = vdwg.mxu0
        %706 = vrot.lane.b32.xlu0 %v472, 8
        %v707 = vpop.permute.xlu0 %706
        %710 = vrot.lane.b32.xlu0 %v586, 16
        %v711 = vpop.permute.xlu0 %710
        %714 = vrot.lane.b32.xlu0 %v700, 24
        %v715 = vpop.permute.xlu0 %714
        %v717 = vsel %vm240, %v355, %v707
        %vm718 = vcmask 130048
        %v719 = vsel %vm718, %v717, %v711
        %vm720 = vcmask 195584
        %v721 = vsel %vm720, %v719, %v715
        %v722 = vpack.c.bf16 %v721, %v721
        %vm723 = vcmask 257024
        %724 = vst.msk [vmem:[%s234] sm:$0xf] %vm723, %v722
        %p725 = scmp.lt.s32.totalorder %s19, 1
        %s726 = scalar_select %p725, %s19, 1
        %s727 = smul.addr %s726, 4
        %s728 = scalar_lea.vmem %s3, %s727
        %s729 = sand.u32 %s131, 1
        %s730 = scalar_lea.sflag [#allocation3], %s729
        %s731 = sand.u32 %s131, 1
        %s732 = smul.addr %s731, 32
        %s733 = scalar_lea.vmem [#allocation2], %s732
        // Predicated region
        $region33: #{seq2seq_forward.46} parent=31 // pred_check
          %p734 = pneg %p115
        $region34: #{seq2seq_forward.46} parent=31 // pred_check_branch
          %736 = sbr.rel (%p734) target = $region36
        $region35: #{seq2seq_forward.46} parent=31 // pred_region
          _
        $region36: #{seq2seq_forward.46} parent=31 // pred_fallthru
          _
        // Predicated region
        $region37: #{seq2seq_forward.46} parent=31 // pred_check
          %p737 = pneg %p141
        $region38: #{seq2seq_forward.46} parent=31 // pred_check_branch
          %739 = sbr.rel (%p737) target = $region40
        $region39: #{seq2seq_forward.46} parent=31 // pred_region
          %s741 = ssub.s32 512, 512
          %742 = vsyncadd %s730, %s741
          %s743 = smul.addr %s19, 4
          %s744 = smul.addr %s743, 128
          %s745 = scalar_lea.hbm %s4, %s744
          %s746 = sshll.u32 %s733, 4
          %s747 = int_to_ptr.vmem [resolvable:$true] %s746
          %752 = dma.vmem_to_hbm [thread:$0]  %s747, 512, %s745, %s730, 128, 128, 8
        $region40: #{seq2seq_forward.46} parent=31 // pred_fallthru
          _
      $region32: #{seq2seq_forward.46} parent=5 // pred_fallthru
        _
      %p753 = scmp.le.s32.totalorder 2, %s14
      // Predicated region
      $region41: #{seq2seq_forward.46} parent=5 // pred_check
        %p754 = pneg %p753
      $region42: #{seq2seq_forward.46} parent=5 // pred_check_branch
        %756 = sbr.rel (%p754) target = $region44
      $region43: #{seq2seq_forward.46} parent=5 // pred_region
        %s757 = ssub.s32 %s14, 2
        // Predicated region
        $region45: #{seq2seq_forward.46} parent=43 // pred_check
          %p758 = pneg %p121
        $region46: #{seq2seq_forward.46} parent=43 // pred_check_branch
          %760 = sbr.rel (%p758) target = $region48
        $region47: #{seq2seq_forward.46} parent=43 // pred_region
          %p761 = scmp.lt.s32.totalorder %s20, 1
          %s762 = scalar_select %p761, %s20, 1
          %s763 = smul.addr %s762, 4
          %s764 = scalar_lea.vmem %s3, %s763
        $region48: #{seq2seq_forward.46} parent=43 // pred_fallthru
          _
        // Predicated region
        $region49: #{seq2seq_forward.46} parent=43 // pred_check
          %p765 = pneg %p147
        $region50: #{seq2seq_forward.46} parent=43 // pred_check_branch
          %767 = sbr.rel (%p765) target = $region52
        $region51: #{seq2seq_forward.46} parent=43 // pred_region
          %s768 = sand.u32 %s132, 1
          %s769 = scalar_lea.sflag [#allocation3], %s768
          %s770 = sand.u32 %s132, 1
          %s771 = smul.addr %s770, 32
          %s772 = scalar_lea.vmem [#allocation2], %s771
          %773 = dma.done %s769, 512
        $region52: #{seq2seq_forward.46} parent=43 // pred_fallthru
          _
      $region44: #{seq2seq_forward.46} parent=5 // pred_fallthru
        _
    $region6: #{seq2seq_forward.46} parent=1 // loop_footer
      %s18 = sadd.s32 1, %s14
    $region7: #{seq2seq_forward.46} parent=1 // loop_footer_branch
      %13 = sbr.rel target = $region3
    $region8: #{seq2seq_forward.46} parent=1 // loop_exit
      _
    %774 = vsyncpa [#allocation3], 1
    %s775 = scalar_lea.sflag [#allocation3], 1
    %776 = vsyncpa %s775, 1

</llo_original>
